<compile_context>
chip_gen: v7x
topology: tpu7x:2x2x1
jax: 0.10.0
libtpu: 0.0.40
codegen_flags: <defaults>
</compile_context>

<pallas_src>
import functools

import jax
import jax.numpy as jnp
from jax.experimental import pallas as pl
from jax.experimental.pallas import tpu as pltpu

LANE = 128


def _round_up(x, m):
    return (x + m - 1) // m * m


# Per-generation scoped-VMEM limit: ~half of physical VMEM, clamped to
# [32, 96] MiB (128 MiB parts -> 64 MiB; v7x's 64 MiB -> 32 MiB).
try:
    _VMEM_CAP = int(pltpu.get_tpu_info().vmem_capacity_bytes)
except Exception:
    _VMEM_CAP = 64 * 1024 * 1024
_VMEM_LIMIT = int(min(max(_VMEM_CAP // 2, 32 * 1024 * 1024), 96 * 1024 * 1024))


# ------------------------------ Pallas kernels -------------------------------

def _conv_stats_kernel(s_ref, w_ref, o_ref, sum_ref, sq_ref, *,
                       tap_offsets, ho, wo):
    """Per-image conv as ONE K-concatenated MXU matmul + fused BN statistics.

    s_ref   : (1, G, Ws, Cp)      packed, spatially padded input (bf16)
    w_ref   : (ntaps*Cp, Coutp)   tap-stacked weight matrix (bf16)
    o_ref   : (1, ho*wo, Coutp)   conv output for this image (bf16)
    sum_ref : (1, 1, Coutp)       per-image channel sum (f32)
    sq_ref  : (1, 1, Coutp)       per-image channel sum-of-squares (f32)
    """
    cp = s_ref.shape[-1]
    # One upcast pass over the whole block; all tap slicing then happens on f32
    # values (proven lowering path) while the HBM DMA stayed bf16.
    s = s_ref[0].astype(jnp.float32)                       # (G, Ws, Cp)
    parts = []
    for (r0, dx) in tap_offsets:
        a = s[r0:r0 + ho, dx:dx + wo, :]                   # (ho, wo, Cp) static slice
        parts.append(a.reshape(ho * wo, cp).astype(jnp.bfloat16))
    # Concatenate taps along K -> single deep matmul (K = ntaps*Cp).
    a_all = parts[0] if len(parts) == 1 else jnp.concatenate(parts, axis=-1)
    acc = jnp.dot(a_all, w_ref[...], preferred_element_type=jnp.float32)

    o_ref[0] = acc.astype(o_ref.dtype)
    # Per-image partial stats (no cross-grid accumulation -> "parallel" axis).
    sum_ref[0] = jnp.sum(acc, axis=0, keepdims=True)
    sq_ref[0] = jnp.sum(acc * acc, axis=0, keepdims=True)


def _bn_act_kernel(x_ref, sc_ref, sh_ref, o_ref):
    # bn + relu; bf16 in / bf16 out, f32 math.
    y = x_ref[0].astype(jnp.float32) * sc_ref[...] + sh_ref[...]
    o_ref[0] = jnp.maximum(y, 0.0).astype(o_ref.dtype)


def _bn_add_relu_kernel(x_ref, sc_ref, sh_ref, r_ref, rsc_ref, rsh_ref, o_ref):
    # relu(bn(x) + bn(residual)); the plain-identity path uses scale=1, shift=0.
    y = x_ref[0].astype(jnp.float32) * sc_ref[...] + sh_ref[...]
    r = r_ref[0].astype(jnp.float32) * rsc_ref[...] + rsh_ref[...]
    o_ref[0] = jnp.maximum(y + r, 0.0).astype(o_ref.dtype)


# ----------------------------- kernel wrappers -------------------------------

def conv_bn_stats(s4, w_kmat, tap_offsets, ho, wo):
    n, g, ws, cp = s4.shape
    k_all, coutp = w_kmat.shape
    kernel = functools.partial(_conv_stats_kernel,
                               tap_offsets=tuple(tap_offsets), ho=ho, wo=wo)
    # TODO(synk): for very large images / 512-channel stages, add a Coutp-tile
    # grid axis and sub-tile ho*wo to bound per-step VMEM on v7x (64 MiB).
    return pl.pallas_call(
        kernel,
        out_shape=(jax.ShapeDtypeStruct((n, ho * wo, coutp), jnp.bfloat16),
                   jax.ShapeDtypeStruct((n, 1, coutp), jnp.float32),
                   jax.ShapeDtypeStruct((n, 1, coutp), jnp.float32)),
        grid=(n,),
        in_specs=[pl.BlockSpec((1, g, ws, cp), lambda i: (i, 0, 0, 0)),
                  pl.BlockSpec((k_all, coutp), lambda i: (0, 0))],
        out_specs=(pl.BlockSpec((1, ho * wo, coutp), lambda i: (i, 0, 0)),
                   pl.BlockSpec((1, 1, coutp), lambda i: (i, 0, 0)),
                   pl.BlockSpec((1, 1, coutp), lambda i: (i, 0, 0))),
        compiler_params=pltpu.CompilerParams(
            dimension_semantics=("parallel",),   # per-image stats -> megacore-safe
            vmem_limit_bytes=_VMEM_LIMIT),
    )(s4, w_kmat)


def bn_act(x, scale, shift):
    n, m, c = x.shape
    blk = pl.BlockSpec((1, m, c), lambda i: (i, 0, 0))
    vec = pl.BlockSpec((1, c), lambda i: (0, 0))
    return pl.pallas_call(
        _bn_act_kernel,
        out_shape=jax.ShapeDtypeStruct((n, m, c), jnp.bfloat16),
        grid=(n,),
        in_specs=[blk, vec, vec],
        out_specs=blk,
        compiler_params=pltpu.CompilerParams(
            dimension_semantics=("parallel",), vmem_limit_bytes=_VMEM_LIMIT),
    )(x, scale, shift)


def bn_add_relu(x, scale, shift, res, rscale, rshift):
    n, m, c = x.shape
    blk = pl.BlockSpec((1, m, c), lambda i: (i, 0, 0))
    vec = pl.BlockSpec((1, c), lambda i: (0, 0))
    return pl.pallas_call(
        _bn_add_relu_kernel,
        out_shape=jax.ShapeDtypeStruct((n, m, c), jnp.float32),
        grid=(n,),
        in_specs=[blk, vec, vec, blk, vec, vec],
        out_specs=blk,
        compiler_params=pltpu.CompilerParams(
            dimension_semantics=("parallel",), vmem_limit_bytes=_VMEM_LIMIT),
    )(x, scale, shift, res, rscale, rshift)


# ----------------------------- data preparation ------------------------------

def _pad_channels(a, cp):
    c = a.shape[-1]
    if c == cp:
        return a
    return jnp.pad(a, [(0, 0)] * (a.ndim - 1) + [(0, cp - c)])


def _tap_offset(hs, stride, ky, kx):
    # (row offset into the parity-major packed tensor, column offset)
    return (((ky % stride) * stride + (kx % stride)) * hs + ky // stride,
            kx // stride)


def _pack_taps(x_nhwc, ksize, stride, pad):
    """Spatial pad + space-to-depth so every conv tap is an unstrided slice.

    Returns (s4, tap_offsets, ho, wo); s4 is bf16, shape (N, stride^2*Hs, Ws, C):
      s4[n, (py*stride+px)*Hs + i, j, :] == x_padded[n, i*stride+py, j*stride+px, :]
    so tap (ky, kx) reads s4[n, r0:r0+ho, dx:dx+wo, :], (r0, dx) = tap_offsets[t].
    """
    n, h, w, c = x_nhwc.shape
    ho = (h + 2 * pad - ksize) // stride + 1
    wo = (w + 2 * pad - ksize) // stride + 1
    xp = jnp.pad(x_nhwc, ((0, 0), (pad, pad), (pad, pad), (0, 0)))
    hp, wp = h + 2 * pad, w + 2 * pad
    hs, ws = -(-hp // stride), -(-wp // stride)
    xp = jnp.pad(xp, ((0, 0), (0, hs * stride - hp), (0, ws * stride - wp), (0, 0)))
    s = xp.reshape(n, hs, stride, ws, stride, c)
    s = jnp.transpose(s, (0, 2, 4, 1, 3, 5))            # (N, py, px, Hs, Ws, C)
    s4 = s.reshape(n, stride * stride * hs, ws, c).astype(jnp.bfloat16)
    taps = tuple(_tap_offset(hs, stride, ky, kx)
                 for ky in range(ksize) for kx in range(ksize))
    return s4, taps, ho, wo


def _w_to_kmat(w_oihw, cp, coutp):
    # (Cout, Cin, kh, kw) -> (kh*kw*Cp, Coutp) bf16, tap-major (ky-major/kx-minor).
    # TODO(synk): pack multiple taps' real channels into one 128-lane K group
    # when Cin < 128 instead of zero-padding each tap (recovers wasted MXU K).
    cout, cin, kh, kw = w_oihw.shape
    w = jnp.transpose(w_oihw, (2, 3, 1, 0)).reshape(kh * kw, cin, cout)
    w = jnp.pad(w, ((0, 0), (0, cp - cin), (0, coutp - cout)))
    return w.reshape(kh * kw * cp, coutp).astype(jnp.bfloat16)


def _bn_scale_shift(s, q, count, gamma, beta, coutp, eps=1e-5):
    # s, q: per-image partial sums (N, 1, Coutp) -> reduce over the batch here.
    s = jnp.sum(s, axis=0)                                # (1, Coutp)
    q = jnp.sum(q, axis=0)
    gamma_p = _pad_channels(gamma, coutp).reshape(1, coutp)
    beta_p = _pad_channels(beta, coutp).reshape(1, coutp)
    mean = s / count
    var = jnp.maximum(q / count - mean * mean, 0.0)       # clamp cancellation noise
    # TODO(synk): switch to shifted/Welford accumulation for large-mean activations.
    scale = gamma_p * jax.lax.rsqrt(var + eps)
    shift = beta_p - mean * scale
    return scale, shift


# --------------------------- ResidualBlock forward ---------------------------

def residual_block_forward(x_nchw, params, stride, eps=1e-5):
    x = jnp.transpose(x_nchw, (0, 2, 3, 1)).astype(jnp.float32)     # NHWC
    n, h, w, cin = x.shape
    cout = params["conv1_w"].shape[0]
    cp = _round_up(cin, LANE)
    coutp = _round_up(cout, LANE)
    xq = _pad_channels(x, cp)

    # conv1 (+ fused per-image BN stats) -> bn1 -> relu
    s1, taps1, ho, wo = _pack_taps(xq, 3, stride, 1)
    c1, c1s, c1q = conv_bn_stats(
        s1, _w_to_kmat(params["conv1_w"], cp, coutp), taps1, ho, wo)
    count = n * ho * wo
    sc1, sh1 = _bn_scale_shift(c1s, c1q, count, params["bn1_gamma"],
                               params["bn1_beta"], coutp, eps)
    h1 = bn_act(c1, sc1, sh1)                            # (N, ho*wo, Coutp) bf16
    # TODO(synk): fuse bn1+relu into conv2's tap prologue (needs per-tap masks
    # so spatial-pad zeros stay zero after the affine+relu).

    # conv2 (+ fused BN stats); bn2 itself is applied inside the final kernel
    s2, taps2, _, _ = _pack_taps(h1.reshape(n, ho, wo, coutp), 3, 1, 1)
    c2, c2s, c2q = conv_bn_stats(
        s2, _w_to_kmat(params["conv2_w"], coutp, coutp), taps2, ho, wo)
    sc2, sh2 = _bn_scale_shift(c2s, c2q, count, params["bn2_gamma"],
                               params["bn2_beta"], coutp, eps)

    # identity path: optional 1x1 strided conv (re-uses conv1's packed input)
    if "ds_w" in params:
        hs1 = s1.shape[1] // (stride * stride)
        ds_tap = _tap_offset(hs1, stride, 1, 1)          # samples x[s*oh, s*ow]
        cd, cds, cdq = conv_bn_stats(
            s1, _w_to_kmat(params["ds_w"], cp, coutp), (ds_tap,), ho, wo)
        scd, shd = _bn_scale_shift(cds, cdq, count, params["ds_gamma"],
                                   params["ds_beta"], coutp, eps)
        identity = cd
    else:
        identity = xq.reshape(n, h * w, cp)              # f32, read once
        scd = jnp.ones((1, coutp), jnp.float32)
        shd = jnp.zeros((1, coutp), jnp.float32)

    # fused bn2 + (downsample-bn) residual add + relu
    out = bn_add_relu(c2, sc2, sh2, identity, scd, shd)  # (N, ho*wo, Coutp) f32
    out = out.reshape(n, ho, wo, coutp)[..., :cout]
    return jnp.transpose(out, (0, 3, 1, 2))              # NCHW (module contract)


forward = jax.jit(residual_block_forward, static_argnames=("stride",))


# ------------------------------ pure-JAX refs --------------------------------

def _ref_forward(x, params, stride, conv_dtype=jnp.float32):
    def conv(y, w, s, pad):
        return jax.lax.conv_general_dilated(
            y.astype(conv_dtype), w.astype(conv_dtype),
            window_strides=(s, s), padding=[(pad, pad), (pad, pad)],
            dimension_numbers=("NCHW", "OIHW", "NCHW"),
            preferred_element_type=jnp.float32)

    def bn(y, gamma, beta, eps=1e-5):
        mean = jnp.mean(y, axis=(0, 2, 3), keepdims=True)
        var = jnp.var(y, axis=(0, 2, 3), keepdims=True)
        return ((y - mean) * jax.lax.rsqrt(var + eps)
                * gamma[None, :, None, None] + beta[None, :, None, None])

    out = jax.nn.relu(bn(conv(x, params["conv1_w"], stride, 1),
                         params["bn1_gamma"], params["bn1_beta"]))
    out = bn(conv(out, params["conv2_w"], 1, 1),
             params["bn2_gamma"], params["bn2_beta"])
    if "ds_w" in params:
        idn = bn(conv(x, params["ds_w"], stride, 0),
                 params["ds_gamma"], params["ds_beta"])
    else:
        idn = x
    return jax.nn.relu(out + idn)


# ------------------------------- param init ----------------------------------

def make_params(key, cin, cout, stride):
    keys = jax.random.split(key, 3)
    params = {
        "conv1_w": 0.1 * jax.random.normal(keys[0], (cout, cin, 3, 3), jnp.float32),
        "bn1_gamma": jnp.ones((cout,), jnp.float32),
        "bn1_beta": jnp.zeros((cout,), jnp.float32),
        "conv2_w": 0.1 * jax.random.normal(keys[1], (cout, cout, 3, 3), jnp.float32),
        "bn2_gamma": jnp.ones((cout,), jnp.float32),
        "bn2_beta": jnp.zeros((cout,), jnp.float32),
    }
    if stride != 1 or cin != cout:
        params["ds_w"] = 0.1 * jax.random.normal(keys[2], (cout, cin, 1, 1), jnp.float32)
        params["ds_gamma"] = jnp.ones((cout,), jnp.float32)
        params["ds_beta"] = jnp.zeros((cout,), jnp.float32)
    return params


# ---------------------------------- main --------------------------------------

if __name__ == "__main__":
    key = jax.random.PRNGKey(0)
    k1, k2, kx1, kx2 = jax.random.split(key, 4)

    # case 1: stride=2, in_channels != out_channels -> downsample path active
    p1 = make_params(k1, 4, 8, stride=2)
    x1 = jax.random.normal(kx1, (2, 4, 16, 16), jnp.float32)
    y1 = jax.block_until_ready(forward(x1, p1, stride=2))
    assert y1.shape == (2, 8, 8, 8)
    # check vs a bf16-operand reference (same MXU quantization; bf16 intermediates
    # in the kernel add a small extra drift) ...
    r1_bf16 = _ref_forward(x1, p1, 2, conv_dtype=jnp.bfloat16)
    assert jnp.allclose(y1, r1_bf16, rtol=8e-2, atol=8e-2)
    # ... and a semantic check vs the f32 reference
    r1_f32 = _ref_forward(x1, p1, 2, conv_dtype=jnp.float32)
    assert jnp.allclose(y1, r1_f32, rtol=1.5e-1, atol=1.5e-1)

    # case 2: stride=1, in_channels == out_channels -> plain identity path
    p2 = make_params(k2, 8, 8, stride=1)
    x2 = jax.random.normal(kx2, (2, 8, 16, 16), jnp.float32)
    y2 = jax.block_until_ready(forward(x2, p2, stride=1))
    assert y2.shape == (2, 8, 16, 16)
    r2_bf16 = _ref_forward(x2, p2, 1, conv_dtype=jnp.bfloat16)
    assert jnp.allclose(y2, r2_bf16, rtol=8e-2, atol=8e-2)
    r2_f32 = _ref_forward(x2, p2, 1, conv_dtype=jnp.float32)
    assert jnp.allclose(y2, r2_f32, rtol=1.5e-1, atol=1.5e-1)

    print("KERNEL_OK")
</pallas_src>

<mosaic_0001>
module attributes {stable_mosaic.version = 11 : i64} {
  func.func @_conv_stats_kernel(%arg0: i32, %arg1: memref<1x36x9x128xbf16, #tpu.memory_space<vmem>>, %arg2: memref<1152x128xbf16, #tpu.memory_space<vmem>>, %arg3: memref<1x64x128xbf16, #tpu.memory_space<vmem>>, %arg4: memref<1x1x128xf32, #tpu.memory_space<vmem>>, %arg5: memref<1x1x128xf32, #tpu.memory_space<vmem>>) attributes {dimension_semantics = [#tpu.dimension_semantics<parallel>], iteration_bounds = array<i64: 2>, scalar_prefetch = 0 : i64, scratch_operands = 0 : i64, tpu.core_type = #tpu.core_type<tc>, window_params = [{transform_indices = @transform_0, window_bounds = array<i64: 1, 36, 9, 128>}, {pipeline_mode = #tpu.pipeline_mode<synchronous>, transform_indices = @transform_1, window_bounds = array<i64: 1152, 128>}, {transform_indices = @transform_2, window_bounds = array<i64: 1, 64, 128>}, {transform_indices = @transform_3, window_bounds = array<i64: 1, 1, 128>}, {transform_indices = @transform_4, window_bounds = array<i64: 1, 1, 128>}]} {
    %c0 = arith.constant 0 : index
    %c0_0 = arith.constant 0 : index
    %c0_1 = arith.constant 0 : index
    %c0_2 = arith.constant 0 : index
    %0 = vector.load %arg1[%c0, %c0_0, %c0_1, %c0_2] : memref<1x36x9x128xbf16, #tpu.memory_space<vmem>>, vector<1x36x9x128xbf16>
    %1 = vector.shape_cast %0 : vector<1x36x9x128xbf16> to vector<36x9x128xbf16>
    %2 = arith.extf %1 : vector<36x9x128xbf16> to vector<36x9x128xf32>
    %3 = vector.extract_strided_slice %2 {offsets = [0, 0, 0], sizes = [8, 8, 128], strides = [1, 1, 1]} : vector<36x9x128xf32> to vector<8x8x128xf32>
    %4 = vector.shape_cast %3 : vector<8x8x128xf32> to vector<64x128xf32>
    %5 = arith.truncf %4 : vector<64x128xf32> to vector<64x128xbf16>
    %6 = vector.extract_strided_slice %2 {offsets = [9, 0, 0], sizes = [8, 8, 128], strides = [1, 1, 1]} : vector<36x9x128xf32> to vector<8x8x128xf32>
    %7 = vector.shape_cast %6 : vector<8x8x128xf32> to vector<64x128xf32>
    %8 = arith.truncf %7 : vector<64x128xf32> to vector<64x128xbf16>
    %9 = vector.extract_strided_slice %2 {offsets = [0, 1, 0], sizes = [8, 8, 128], strides = [1, 1, 1]} : vector<36x9x128xf32> to vector<8x8x128xf32>
    %10 = vector.shape_cast %9 : vector<8x8x128xf32> to vector<64x128xf32>
    %11 = arith.truncf %10 : vector<64x128xf32> to vector<64x128xbf16>
    %12 = vector.extract_strided_slice %2 {offsets = [18, 0, 0], sizes = [8, 8, 128], strides = [1, 1, 1]} : vector<36x9x128xf32> to vector<8x8x128xf32>
    %13 = vector.shape_cast %12 : vector<8x8x128xf32> to vector<64x128xf32>
    %14 = arith.truncf %13 : vector<64x128xf32> to vector<64x128xbf16>
    %15 = vector.extract_strided_slice %2 {offsets = [27, 0, 0], sizes = [8, 8, 128], strides = [1, 1, 1]} : vector<36x9x128xf32> to vector<8x8x128xf32>
    %16 = vector.shape_cast %15 : vector<8x8x128xf32> to vector<64x128xf32>
    %17 = arith.truncf %16 : vector<64x128xf32> to vector<64x128xbf16>
    %18 = vector.extract_strided_slice %2 {offsets = [18, 1, 0], sizes = [8, 8, 128], strides = [1, 1, 1]} : vector<36x9x128xf32> to vector<8x8x128xf32>
    %19 = vector.shape_cast %18 : vector<8x8x128xf32> to vector<64x128xf32>
    %20 = arith.truncf %19 : vector<64x128xf32> to vector<64x128xbf16>
    %21 = vector.extract_strided_slice %2 {offsets = [1, 0, 0], sizes = [8, 8, 128], strides = [1, 1, 1]} : vector<36x9x128xf32> to vector<8x8x128xf32>
    %22 = vector.shape_cast %21 : vector<8x8x128xf32> to vector<64x128xf32>
    %23 = arith.truncf %22 : vector<64x128xf32> to vector<64x128xbf16>
    %24 = vector.extract_strided_slice %2 {offsets = [10, 0, 0], sizes = [8, 8, 128], strides = [1, 1, 1]} : vector<36x9x128xf32> to vector<8x8x128xf32>
    %25 = vector.shape_cast %24 : vector<8x8x128xf32> to vector<64x128xf32>
    %26 = arith.truncf %25 : vector<64x128xf32> to vector<64x128xbf16>
    %27 = vector.extract_strided_slice %2 {offsets = [1, 1, 0], sizes = [8, 8, 128], strides = [1, 1, 1]} : vector<36x9x128xf32> to vector<8x8x128xf32>
    %28 = vector.shape_cast %27 : vector<8x8x128xf32> to vector<64x128xf32>
    %29 = arith.truncf %28 : vector<64x128xf32> to vector<64x128xbf16>
    %30 = tpu.concatenate %5, %8, %11, %14, %17, %20, %23, %26, %29 in 1 : vector<64x128xbf16>, vector<64x128xbf16>, vector<64x128xbf16>, vector<64x128xbf16>, vector<64x128xbf16>, vector<64x128xbf16>, vector<64x128xbf16>, vector<64x128xbf16>, vector<64x128xbf16> -> vector<64x1152xbf16>
    %c0_3 = arith.constant 0 : index
    %c0_4 = arith.constant 0 : index
    %31 = vector.load %arg2[%c0_3, %c0_4] : memref<1152x128xbf16, #tpu.memory_space<vmem>>, vector<1152x128xbf16>
    %cst = arith.constant dense<0.000000e+00> : vector<64x128xf32>
    %32 = tpu.matmul %30, %31, %cst {dimension_numbers = #tpu.dot_dimension_numbers<[1], [0], [0], [1], [0, 0, 1, 1], [], []>} : vector<64x1152xbf16>, vector<1152x128xbf16>, vector<64x128xf32> -> vector<64x128xf32>
    %33 = arith.truncf %32 : vector<64x128xf32> to vector<64x128xbf16>
    %c0_5 = arith.constant 0 : index
    %c0_6 = arith.constant 0 : index
    %c0_7 = arith.constant 0 : index
    %34 = vector.load %arg3[%c0_5, %c0_6, %c0_7] : memref<1x64x128xbf16, #tpu.memory_space<vmem>>, vector<1x64x128xbf16>
    %35 = vector.shape_cast %34 : vector<1x64x128xbf16> to vector<64x128xbf16>
    %36 = vector.shape_cast %33 : vector<64x128xbf16> to vector<1x64x128xbf16>
    tpu.vector_store %arg3[%c0_5, %c0_6, %c0_7], %36 {strides = array<i32>} : memref<1x64x128xbf16, #tpu.memory_space<vmem>>, vector<1x64x128xbf16>,
    %cst_8 = arith.constant dense<0.000000e+00> : vector<128xf32>
    %37 = vector.multi_reduction <add>, %32, %cst_8 [0] : vector<64x128xf32> to vector<128xf32>
    %38 = vector.shape_cast %37 : vector<128xf32> to vector<1x128xf32>
    %c0_9 = arith.constant 0 : index
    %c0_10 = arith.constant 0 : index
    %c0_11 = arith.constant 0 : index
    %39 = vector.load %arg4[%c0_9, %c0_10, %c0_11] : memref<1x1x128xf32, #tpu.memory_space<vmem>>, vector<1x1x128xf32>
    %40 = vector.shape_cast %39 : vector<1x1x128xf32> to vector<1x128xf32>
    %41 = vector.shape_cast %38 : vector<1x128xf32> to vector<1x1x128xf32>
    tpu.vector_store %arg4[%c0_9, %c0_10, %c0_11], %41 {strides = array<i32>} : memref<1x1x128xf32, #tpu.memory_space<vmem>>, vector<1x1x128xf32>,
    %42 = arith.mulf %32, %32 : vector<64x128xf32>
    %cst_12 = arith.constant dense<0.000000e+00> : vector<128xf32>
    %43 = vector.multi_reduction <add>, %42, %cst_12 [0] : vector<64x128xf32> to vector<128xf32>
    %44 = vector.shape_cast %43 : vector<128xf32> to vector<1x128xf32>
    %c0_13 = arith.constant 0 : index
    %c0_14 = arith.constant 0 : index
    %c0_15 = arith.constant 0 : index
    %45 = vector.load %arg5[%c0_13, %c0_14, %c0_15] : memref<1x1x128xf32, #tpu.memory_space<vmem>>, vector<1x1x128xf32>
    %46 = vector.shape_cast %45 : vector<1x1x128xf32> to vector<1x128xf32>
    %47 = vector.shape_cast %44 : vector<1x128xf32> to vector<1x1x128xf32>
    tpu.vector_store %arg5[%c0_13, %c0_14, %c0_15], %47 {strides = array<i32>} : memref<1x1x128xf32, #tpu.memory_space<vmem>>, vector<1x1x128xf32>,
    return
  }
  func.func @transform_0(%arg0: i32) -> (i32, i32, i32, i32) {
    %c0_i32 = arith.constant 0 : i32
    %c0_i32_0 = arith.constant 0 : i32
    %c0_i32_1 = arith.constant 0 : i32
    %c0_i32_2 = arith.constant 0 : i32
    return %arg0, %c0_i32, %c0_i32_0, %c0_i32_1 : i32, i32, i32, i32
  }
  func.func @transform_1(%arg0: i32) -> (i32, i32) {
    %c0_i32 = arith.constant 0 : i32
    %c0_i32_0 = arith.constant 0 : i32
    %c0_i32_1 = arith.constant 0 : i32
    return %c0_i32, %c0_i32_0 : i32, i32
  }
  func.func @transform_2(%arg0: i32) -> (i32, i32, i32) {
    %c0_i32 = arith.constant 0 : i32
    %c0_i32_0 = arith.constant 0 : i32
    %c0_i32_1 = arith.constant 0 : i32
    return %arg0, %c0_i32, %c0_i32_0 : i32, i32, i32
  }
  func.func @transform_3(%arg0: i32) -> (i32, i32, i32) {
    %c0_i32 = arith.constant 0 : i32
    %c0_i32_0 = arith.constant 0 : i32
    %c0_i32_1 = arith.constant 0 : i32
    return %arg0, %c0_i32, %c0_i32_0 : i32, i32, i32
  }
  func.func @transform_4(%arg0: i32) -> (i32, i32, i32) {
    %c0_i32 = arith.constant 0 : i32
    %c0_i32_0 = arith.constant 0 : i32
    %c0_i32_1 = arith.constant 0 : i32
    return %arg0, %c0_i32, %c0_i32_0 : i32, i32, i32
  }
}

module attributes {stable_mosaic.version = 11 : i64} {
  func.func @_bn_act_kernel(%arg0: i32, %arg1: memref<1x64x128xbf16, #tpu.memory_space<vmem>>, %arg2: memref<1x128xf32, #tpu.memory_space<vmem>>, %arg3: memref<1x128xf32, #tpu.memory_space<vmem>>, %arg4: memref<1x64x128xbf16, #tpu.memory_space<vmem>>) attributes {dimension_semantics = [#tpu.dimension_semantics<parallel>], iteration_bounds = array<i64: 2>, scalar_prefetch = 0 : i64, scratch_operands = 0 : i64, tpu.core_type = #tpu.core_type<tc>, window_params = [{transform_indices = @transform_0, window_bounds = array<i64: 1, 64, 128>}, {pipeline_mode = #tpu.pipeline_mode<synchronous>, transform_indices = @transform_1, window_bounds = array<i64: 1, 128>}, {pipeline_mode = #tpu.pipeline_mode<synchronous>, transform_indices = @transform_2, window_bounds = array<i64: 1, 128>}, {transform_indices = @transform_3, window_bounds = array<i64: 1, 64, 128>}]} {
    %c0 = arith.constant 0 : index
    %c0_0 = arith.constant 0 : index
    %c0_1 = arith.constant 0 : index
    %0 = vector.load %arg1[%c0, %c0_0, %c0_1] : memref<1x64x128xbf16, #tpu.memory_space<vmem>>, vector<1x64x128xbf16>
    %1 = vector.shape_cast %0 : vector<1x64x128xbf16> to vector<64x128xbf16>
    %2 = arith.extf %1 : vector<64x128xbf16> to vector<64x128xf32>
    %c0_2 = arith.constant 0 : index
    %c0_3 = arith.constant 0 : index
    %3 = vector.load %arg2[%c0_2, %c0_3] : memref<1x128xf32, #tpu.memory_space<vmem>>, vector<1x128xf32>
    %4 = vector.broadcast %3 : vector<1x128xf32> to vector<64x128xf32>
    %5 = arith.mulf %2, %4 : vector<64x128xf32>
    %c0_4 = arith.constant 0 : index
    %c0_5 = arith.constant 0 : index
    %6 = vector.load %arg3[%c0_4, %c0_5] : memref<1x128xf32, #tpu.memory_space<vmem>>, vector<1x128xf32>
    %7 = vector.broadcast %6 : vector<1x128xf32> to vector<64x128xf32>
    %8 = arith.addf %5, %7 : vector<64x128xf32>
    %cst = arith.constant 0.000000e+00 : f32
    %9 = vector.broadcast %cst : f32 to vector<64x128xf32>
    %10 = arith.maximumf %8, %9 : vector<64x128xf32>
    %11 = arith.truncf %10 : vector<64x128xf32> to vector<64x128xbf16>
    %c0_6 = arith.constant 0 : index
    %c0_7 = arith.constant 0 : index
    %c0_8 = arith.constant 0 : index
    %12 = vector.load %arg4[%c0_6, %c0_7, %c0_8] : memref<1x64x128xbf16, #tpu.memory_space<vmem>>, vector<1x64x128xbf16>
    %13 = vector.shape_cast %12 : vector<1x64x128xbf16> to vector<64x128xbf16>
    %14 = vector.shape_cast %11 : vector<64x128xbf16> to vector<1x64x128xbf16>
    tpu.vector_store %arg4[%c0_6, %c0_7, %c0_8], %14 {strides = array<i32>} : memref<1x64x128xbf16, #tpu.memory_space<vmem>>, vector<1x64x128xbf16>,
    return
  }
  func.func @transform_0(%arg0: i32) -> (i32, i32, i32) {
    %c0_i32 = arith.constant 0 : i32
    %c0_i32_0 = arith.constant 0 : i32
    %c0_i32_1 = arith.constant 0 : i32
    return %arg0, %c0_i32, %c0_i32_0 : i32, i32, i32
  }
  func.func @transform_1(%arg0: i32) -> (i32, i32) {
    %c0_i32 = arith.constant 0 : i32
    %c0_i32_0 = arith.constant 0 : i32
    %c0_i32_1 = arith.constant 0 : i32
    return %c0_i32, %c0_i32_0 : i32, i32
  }
  func.func @transform_2(%arg0: i32) -> (i32, i32) {
    %c0_i32 = arith.constant 0 : i32
    %c0_i32_0 = arith.constant 0 : i32
    %c0_i32_1 = arith.constant 0 : i32
    return %c0_i32, %c0_i32_0 : i32, i32
  }
  func.func @transform_3(%arg0: i32) -> (i32, i32, i32) {
    %c0_i32 = arith.constant 0 : i32
    %c0_i32_0 = arith.constant 0 : i32
    %c0_i32_1 = arith.constant 0 : i32
    return %arg0, %c0_i32, %c0_i32_0 : i32, i32, i32
  }
}

module attributes {stable_mosaic.version = 11 : i64} {
  func.func @_conv_stats_kernel(%arg0: i32, %arg1: memref<1x10x10x128xbf16, #tpu.memory_space<vmem>>, %arg2: memref<1152x128xbf16, #tpu.memory_space<vmem>>, %arg3: memref<1x64x128xbf16, #tpu.memory_space<vmem>>, %arg4: memref<1x1x128xf32, #tpu.memory_space<vmem>>, %arg5: memref<1x1x128xf32, #tpu.memory_space<vmem>>) attributes {dimension_semantics = [#tpu.dimension_semantics<parallel>], iteration_bounds = array<i64: 2>, scalar_prefetch = 0 : i64, scratch_operands = 0 : i64, tpu.core_type = #tpu.core_type<tc>, window_params = [{transform_indices = @transform_0, window_bounds = array<i64: 1, 10, 10, 128>}, {pipeline_mode = #tpu.pipeline_mode<synchronous>, transform_indices = @transform_1, window_bounds = array<i64: 1152, 128>}, {transform_indices = @transform_2, window_bounds = array<i64: 1, 64, 128>}, {transform_indices = @transform_3, window_bounds = array<i64: 1, 1, 128>}, {transform_indices = @transform_4, window_bounds = array<i64: 1, 1, 128>}]} {
    %c0 = arith.constant 0 : index
    %c0_0 = arith.constant 0 : index
    %c0_1 = arith.constant 0 : index
    %c0_2 = arith.constant 0 : index
    %0 = vector.load %arg1[%c0, %c0_0, %c0_1, %c0_2] : memref<1x10x10x128xbf16, #tpu.memory_space<vmem>>, vector<1x10x10x128xbf16>
    %1 = vector.shape_cast %0 : vector<1x10x10x128xbf16> to vector<10x10x128xbf16>
    %2 = arith.extf %1 : vector<10x10x128xbf16> to vector<10x10x128xf32>
    %3 = vector.extract_strided_slice %2 {offsets = [0, 0, 0], sizes = [8, 8, 128], strides = [1, 1, 1]} : vector<10x10x128xf32> to vector<8x8x128xf32>
    %4 = vector.shape_cast %3 : vector<8x8x128xf32> to vector<64x128xf32>
    %5 = arith.truncf %4 : vector<64x128xf32> to vector<64x128xbf16>
    %6 = vector.extract_strided_slice %2 {offsets = [0, 1, 0], sizes = [8, 8, 128], strides = [1, 1, 1]} : vector<10x10x128xf32> to vector<8x8x128xf32>
    %7 = vector.shape_cast %6 : vector<8x8x128xf32> to vector<64x128xf32>
    %8 = arith.truncf %7 : vector<64x128xf32> to vector<64x128xbf16>
    %9 = vector.extract_strided_slice %2 {offsets = [0, 2, 0], sizes = [8, 8, 128], strides = [1, 1, 1]} : vector<10x10x128xf32> to vector<8x8x128xf32>
    %10 = vector.shape_cast %9 : vector<8x8x128xf32> to vector<64x128xf32>
    %11 = arith.truncf %10 : vector<64x128xf32> to vector<64x128xbf16>
    %12 = vector.extract_strided_slice %2 {offsets = [1, 0, 0], sizes = [8, 8, 128], strides = [1, 1, 1]} : vector<10x10x128xf32> to vector<8x8x128xf32>
    %13 = vector.shape_cast %12 : vector<8x8x128xf32> to vector<64x128xf32>
    %14 = arith.truncf %13 : vector<64x128xf32> to vector<64x128xbf16>
    %15 = vector.extract_strided_slice %2 {offsets = [1, 1, 0], sizes = [8, 8, 128], strides = [1, 1, 1]} : vector<10x10x128xf32> to vector<8x8x128xf32>
    %16 = vector.shape_cast %15 : vector<8x8x128xf32> to vector<64x128xf32>
    %17 = arith.truncf %16 : vector<64x128xf32> to vector<64x128xbf16>
    %18 = vector.extract_strided_slice %2 {offsets = [1, 2, 0], sizes = [8, 8, 128], strides = [1, 1, 1]} : vector<10x10x128xf32> to vector<8x8x128xf32>
    %19 = vector.shape_cast %18 : vector<8x8x128xf32> to vector<64x128xf32>
    %20 = arith.truncf %19 : vector<64x128xf32> to vector<64x128xbf16>
    %21 = vector.extract_strided_slice %2 {offsets = [2, 0, 0], sizes = [8, 8, 128], strides = [1, 1, 1]} : vector<10x10x128xf32> to vector<8x8x128xf32>
    %22 = vector.shape_cast %21 : vector<8x8x128xf32> to vector<64x128xf32>
    %23 = arith.truncf %22 : vector<64x128xf32> to vector<64x128xbf16>
    %24 = vector.extract_strided_slice %2 {offsets = [2, 1, 0], sizes = [8, 8, 128], strides = [1, 1, 1]} : vector<10x10x128xf32> to vector<8x8x128xf32>
    %25 = vector.shape_cast %24 : vector<8x8x128xf32> to vector<64x128xf32>
    %26 = arith.truncf %25 : vector<64x128xf32> to vector<64x128xbf16>
    %27 = vector.extract_strided_slice %2 {offsets = [2, 2, 0], sizes = [8, 8, 128], strides = [1, 1, 1]} : vector<10x10x128xf32> to vector<8x8x128xf32>
    %28 = vector.shape_cast %27 : vector<8x8x128xf32> to vector<64x128xf32>
    %29 = arith.truncf %28 : vector<64x128xf32> to vector<64x128xbf16>
    %30 = tpu.concatenate %5, %8, %11, %14, %17, %20, %23, %26, %29 in 1 : vector<64x128xbf16>, vector<64x128xbf16>, vector<64x128xbf16>, vector<64x128xbf16>, vector<64x128xbf16>, vector<64x128xbf16>, vector<64x128xbf16>, vector<64x128xbf16>, vector<64x128xbf16> -> vector<64x1152xbf16>
    %c0_3 = arith.constant 0 : index
    %c0_4 = arith.constant 0 : index
    %31 = vector.load %arg2[%c0_3, %c0_4] : memref<1152x128xbf16, #tpu.memory_space<vmem>>, vector<1152x128xbf16>
    %cst = arith.constant dense<0.000000e+00> : vector<64x128xf32>
    %32 = tpu.matmul %30, %31, %cst {dimension_numbers = #tpu.dot_dimension_numbers<[1], [0], [0], [1], [0, 0, 1, 1], [], []>} : vector<64x1152xbf16>, vector<1152x128xbf16>, vector<64x128xf32> -> vector<64x128xf32>
    %33 = arith.truncf %32 : vector<64x128xf32> to vector<64x128xbf16>
    %c0_5 = arith.constant 0 : index
    %c0_6 = arith.constant 0 : index
    %c0_7 = arith.constant 0 : index
    %34 = vector.load %arg3[%c0_5, %c0_6, %c0_7] : memref<1x64x128xbf16, #tpu.memory_space<vmem>>, vector<1x64x128xbf16>
    %35 = vector.shape_cast %34 : vector<1x64x128xbf16> to vector<64x128xbf16>
    %36 = vector.shape_cast %33 : vector<64x128xbf16> to vector<1x64x128xbf16>
    tpu.vector_store %arg3[%c0_5, %c0_6, %c0_7], %36 {strides = array<i32>} : memref<1x64x128xbf16, #tpu.memory_space<vmem>>, vector<1x64x128xbf16>,
    %cst_8 = arith.constant dense<0.000000e+00> : vector<128xf32>
    %37 = vector.multi_reduction <add>, %32, %cst_8 [0] : vector<64x128xf32> to vector<128xf32>
    %38 = vector.shape_cast %37 : vector<128xf32> to vector<1x128xf32>
    %c0_9 = arith.constant 0 : index
    %c0_10 = arith.constant 0 : index
    %c0_11 = arith.constant 0 : index
    %39 = vector.load %arg4[%c0_9, %c0_10, %c0_11] : memref<1x1x128xf32, #tpu.memory_space<vmem>>, vector<1x1x128xf32>
    %40 = vector.shape_cast %39 : vector<1x1x128xf32> to vector<1x128xf32>
    %41 = vector.shape_cast %38 : vector<1x128xf32> to vector<1x1x128xf32>
    tpu.vector_store %arg4[%c0_9, %c0_10, %c0_11], %41 {strides = array<i32>} : memref<1x1x128xf32, #tpu.memory_space<vmem>>, vector<1x1x128xf32>,
    %42 = arith.mulf %32, %32 : vector<64x128xf32>
    %cst_12 = arith.constant dense<0.000000e+00> : vector<128xf32>
    %43 = vector.multi_reduction <add>, %42, %cst_12 [0] : vector<64x128xf32> to vector<128xf32>
    %44 = vector.shape_cast %43 : vector<128xf32> to vector<1x128xf32>
    %c0_13 = arith.constant 0 : index
    %c0_14 = arith.constant 0 : index
    %c0_15 = arith.constant 0 : index
    %45 = vector.load %arg5[%c0_13, %c0_14, %c0_15] : memref<1x1x128xf32, #tpu.memory_space<vmem>>, vector<1x1x128xf32>
    %46 = vector.shape_cast %45 : vector<1x1x128xf32> to vector<1x128xf32>
    %47 = vector.shape_cast %44 : vector<1x128xf32> to vector<1x1x128xf32>
    tpu.vector_store %arg5[%c0_13, %c0_14, %c0_15], %47 {strides = array<i32>} : memref<1x1x128xf32, #tpu.memory_space<vmem>>, vector<1x1x128xf32>,
    return
  }
  func.func @transform_0(%arg0: i32) -> (i32, i32, i32, i32) {
    %c0_i32 = arith.constant 0 : i32
    %c0_i32_0 = arith.constant 0 : i32
    %c0_i32_1 = arith.constant 0 : i32
    %c0_i32_2 = arith.constant 0 : i32
    return %arg0, %c0_i32, %c0_i32_0, %c0_i32_1 : i32, i32, i32, i32
  }
  func.func @transform_1(%arg0: i32) -> (i32, i32) {
    %c0_i32 = arith.constant 0 : i32
    %c0_i32_0 = arith.constant 0 : i32
    %c0_i32_1 = arith.constant 0 : i32
    return %c0_i32, %c0_i32_0 : i32, i32
  }
  func.func @transform_2(%arg0: i32) -> (i32, i32, i32) {
    %c0_i32 = arith.constant 0 : i32
    %c0_i32_0 = arith.constant 0 : i32
    %c0_i32_1 = arith.constant 0 : i32
    return %arg0, %c0_i32, %c0_i32_0 : i32, i32, i32
  }
  func.func @transform_3(%arg0: i32) -> (i32, i32, i32) {
    %c0_i32 = arith.constant 0 : i32
    %c0_i32_0 = arith.constant 0 : i32
    %c0_i32_1 = arith.constant 0 : i32
    return %arg0, %c0_i32, %c0_i32_0 : i32, i32, i32
  }
  func.func @transform_4(%arg0: i32) -> (i32, i32, i32) {
    %c0_i32 = arith.constant 0 : i32
    %c0_i32_0 = arith.constant 0 : i32
    %c0_i32_1 = arith.constant 0 : i32
    return %arg0, %c0_i32, %c0_i32_0 : i32, i32, i32
  }
}

module attributes {stable_mosaic.version = 11 : i64} {
  func.func @_bn_add_relu_kernel(%arg0: i32, %arg1: memref<1x64x128xbf16, #tpu.memory_space<vmem>>, %arg2: memref<1x128xf32, #tpu.memory_space<vmem>>, %arg3: memref<1x128xf32, #tpu.memory_space<vmem>>, %arg4: memref<1x64x128xbf16, #tpu.memory_space<vmem>>, %arg5: memref<1x128xf32, #tpu.memory_space<vmem>>, %arg6: memref<1x128xf32, #tpu.memory_space<vmem>>, %arg7: memref<1x64x128xf32, #tpu.memory_space<vmem>>) attributes {dimension_semantics = [#tpu.dimension_semantics<parallel>], iteration_bounds = array<i64: 2>, scalar_prefetch = 0 : i64, scratch_operands = 0 : i64, tpu.core_type = #tpu.core_type<tc>, window_params = [{transform_indices = @transform_0, window_bounds = array<i64: 1, 64, 128>}, {pipeline_mode = #tpu.pipeline_mode<synchronous>, transform_indices = @transform_1, window_bounds = array<i64: 1, 128>}, {pipeline_mode = #tpu.pipeline_mode<synchronous>, transform_indices = @transform_2, window_bounds = array<i64: 1, 128>}, {transform_indices = @transform_3, window_bounds = array<i64: 1, 64, 128>}, {pipeline_mode = #tpu.pipeline_mode<synchronous>, transform_indices = @transform_4, window_bounds = array<i64: 1, 128>}, {pipeline_mode = #tpu.pipeline_mode<synchronous>, transform_indices = @transform_5, window_bounds = array<i64: 1, 128>}, {transform_indices = @transform_6, window_bounds = array<i64: 1, 64, 128>}]} {
    %c0 = arith.constant 0 : index
    %c0_0 = arith.constant 0 : index
    %c0_1 = arith.constant 0 : index
    %0 = vector.load %arg1[%c0, %c0_0, %c0_1] : memref<1x64x128xbf16, #tpu.memory_space<vmem>>, vector<1x64x128xbf16>
    %1 = vector.shape_cast %0 : vector<1x64x128xbf16> to vector<64x128xbf16>
    %2 = arith.extf %1 : vector<64x128xbf16> to vector<64x128xf32>
    %c0_2 = arith.constant 0 : index
    %c0_3 = arith.constant 0 : index
    %3 = vector.load %arg2[%c0_2, %c0_3] : memref<1x128xf32, #tpu.memory_space<vmem>>, vector<1x128xf32>
    %4 = vector.broadcast %3 : vector<1x128xf32> to vector<64x128xf32>
    %5 = arith.mulf %2, %4 : vector<64x128xf32>
    %c0_4 = arith.constant 0 : index
    %c0_5 = arith.constant 0 : index
    %6 = vector.load %arg3[%c0_4, %c0_5] : memref<1x128xf32, #tpu.memory_space<vmem>>, vector<1x128xf32>
    %7 = vector.broadcast %6 : vector<1x128xf32> to vector<64x128xf32>
    %8 = arith.addf %5, %7 : vector<64x128xf32>
    %c0_6 = arith.constant 0 : index
    %c0_7 = arith.constant 0 : index
    %c0_8 = arith.constant 0 : index
    %9 = vector.load %arg4[%c0_6, %c0_7, %c0_8] : memref<1x64x128xbf16, #tpu.memory_space<vmem>>, vector<1x64x128xbf16>
    %10 = vector.shape_cast %9 : vector<1x64x128xbf16> to vector<64x128xbf16>
    %11 = arith.extf %10 : vector<64x128xbf16> to vector<64x128xf32>
    %c0_9 = arith.constant 0 : index
    %c0_10 = arith.constant 0 : index
    %12 = vector.load %arg5[%c0_9, %c0_10] : memref<1x128xf32, #tpu.memory_space<vmem>>, vector<1x128xf32>
    %13 = vector.broadcast %12 : vector<1x128xf32> to vector<64x128xf32>
    %14 = arith.mulf %11, %13 : vector<64x128xf32>
    %c0_11 = arith.constant 0 : index
    %c0_12 = arith.constant 0 : index
    %15 = vector.load %arg6[%c0_11, %c0_12] : memref<1x128xf32, #tpu.memory_space<vmem>>, vector<1x128xf32>
    %16 = vector.broadcast %15 : vector<1x128xf32> to vector<64x128xf32>
    %17 = arith.addf %14, %16 : vector<64x128xf32>
    %18 = arith.addf %8, %17 : vector<64x128xf32>
    %cst = arith.constant 0.000000e+00 : f32
    %19 = vector.broadcast %cst : f32 to vector<64x128xf32>
    %20 = arith.maximumf %18, %19 : vector<64x128xf32>
    %c0_13 = arith.constant 0 : index
    %c0_14 = arith.constant 0 : index
    %c0_15 = arith.constant 0 : index
    %21 = vector.load %arg7[%c0_13, %c0_14, %c0_15] : memref<1x64x128xf32, #tpu.memory_space<vmem>>, vector<1x64x128xf32>
    %22 = vector.shape_cast %21 : vector<1x64x128xf32> to vector<64x128xf32>
    %23 = vector.shape_cast %20 : vector<64x128xf32> to vector<1x64x128xf32>
    tpu.vector_store %arg7[%c0_13, %c0_14, %c0_15], %23 {strides = array<i32>} : memref<1x64x128xf32, #tpu.memory_space<vmem>>, vector<1x64x128xf32>,
    return
  }
  func.func @transform_0(%arg0: i32) -> (i32, i32, i32) {
    %c0_i32 = arith.constant 0 : i32
    %c0_i32_0 = arith.constant 0 : i32
    %c0_i32_1 = arith.constant 0 : i32
    return %arg0, %c0_i32, %c0_i32_0 : i32, i32, i32
  }
  func.func @transform_1(%arg0: i32) -> (i32, i32) {
    %c0_i32 = arith.constant 0 : i32
    %c0_i32_0 = arith.constant 0 : i32
    %c0_i32_1 = arith.constant 0 : i32
    return %c0_i32, %c0_i32_0 : i32, i32
  }
  func.func @transform_2(%arg0: i32) -> (i32, i32) {
    %c0_i32 = arith.constant 0 : i32
    %c0_i32_0 = arith.constant 0 : i32
    %c0_i32_1 = arith.constant 0 : i32
    return %c0_i32, %c0_i32_0 : i32, i32
  }
  func.func @transform_3(%arg0: i32) -> (i32, i32, i32) {
    %c0_i32 = arith.constant 0 : i32
    %c0_i32_0 = arith.constant 0 : i32
    %c0_i32_1 = arith.constant 0 : i32
    return %arg0, %c0_i32, %c0_i32_0 : i32, i32, i32
  }
  func.func @transform_4(%arg0: i32) -> (i32, i32) {
    %c0_i32 = arith.constant 0 : i32
    %c0_i32_0 = arith.constant 0 : i32
    %c0_i32_1 = arith.constant 0 : i32
    return %c0_i32, %c0_i32_0 : i32, i32
  }
  func.func @transform_5(%arg0: i32) -> (i32, i32) {
    %c0_i32 = arith.constant 0 : i32
    %c0_i32_0 = arith.constant 0 : i32
    %c0_i32_1 = arith.constant 0 : i32
    return %c0_i32, %c0_i32_0 : i32, i32
  }
  func.func @transform_6(%arg0: i32) -> (i32, i32, i32) {
    %c0_i32 = arith.constant 0 : i32
    %c0_i32_0 = arith.constant 0 : i32
    %c0_i32_1 = arith.constant 0 : i32
    return %arg0, %c0_i32, %c0_i32_0 : i32, i32, i32
  }
}

module attributes {stable_mosaic.version = 11 : i64} {
  func.func @_conv_stats_kernel(%arg0: i32, %arg1: memref<1x36x9x128xbf16, #tpu.memory_space<vmem>>, %arg2: memref<128x128xbf16, #tpu.memory_space<vmem>>, %arg3: memref<1x64x128xbf16, #tpu.memory_space<vmem>>, %arg4: memref<1x1x128xf32, #tpu.memory_space<vmem>>, %arg5: memref<1x1x128xf32, #tpu.memory_space<vmem>>) attributes {dimension_semantics = [#tpu.dimension_semantics<parallel>], iteration_bounds = array<i64: 2>, scalar_prefetch = 0 : i64, scratch_operands = 0 : i64, tpu.core_type = #tpu.core_type<tc>, window_params = [{transform_indices = @transform_0, window_bounds = array<i64: 1, 36, 9, 128>}, {pipeline_mode = #tpu.pipeline_mode<synchronous>, transform_indices = @transform_1, window_bounds = array<i64: 128, 128>}, {transform_indices = @transform_2, window_bounds = array<i64: 1, 64, 128>}, {transform_indices = @transform_3, window_bounds = array<i64: 1, 1, 128>}, {transform_indices = @transform_4, window_bounds = array<i64: 1, 1, 128>}]} {
    %c0 = arith.constant 0 : index
    %c0_0 = arith.constant 0 : index
    %c0_1 = arith.constant 0 : index
    %c0_2 = arith.constant 0 : index
    %0 = vector.load %arg1[%c0, %c0_0, %c0_1, %c0_2] : memref<1x36x9x128xbf16, #tpu.memory_space<vmem>>, vector<1x36x9x128xbf16>
    %1 = vector.shape_cast %0 : vector<1x36x9x128xbf16> to vector<36x9x128xbf16>
    %2 = arith.extf %1 : vector<36x9x128xbf16> to vector<36x9x128xf32>
    %3 = vector.extract_strided_slice %2 {offsets = [27, 0, 0], sizes = [8, 8, 128], strides = [1, 1, 1]} : vector<36x9x128xf32> to vector<8x8x128xf32>
    %4 = vector.shape_cast %3 : vector<8x8x128xf32> to vector<64x128xf32>
    %5 = arith.truncf %4 : vector<64x128xf32> to vector<64x128xbf16>
    %c0_3 = arith.constant 0 : index
    %c0_4 = arith.constant 0 : index
    %6 = vector.load %arg2[%c0_3, %c0_4] : memref<128x128xbf16, #tpu.memory_space<vmem>>, vector<128x128xbf16>
    %cst = arith.constant dense<0.000000e+00> : vector<64x128xf32>
    %7 = tpu.matmul %5, %6, %cst {dimension_numbers = #tpu.dot_dimension_numbers<[1], [0], [0], [1], [0, 0, 1, 1], [], []>} : vector<64x128xbf16>, vector<128x128xbf16>, vector<64x128xf32> -> vector<64x128xf32>
    %8 = arith.truncf %7 : vector<64x128xf32> to vector<64x128xbf16>
    %c0_5 = arith.constant 0 : index
    %c0_6 = arith.constant 0 : index
    %c0_7 = arith.constant 0 : index
    %9 = vector.load %arg3[%c0_5, %c0_6, %c0_7] : memref<1x64x128xbf16, #tpu.memory_space<vmem>>, vector<1x64x128xbf16>
    %10 = vector.shape_cast %9 : vector<1x64x128xbf16> to vector<64x128xbf16>
    %11 = vector.shape_cast %8 : vector<64x128xbf16> to vector<1x64x128xbf16>
    tpu.vector_store %arg3[%c0_5, %c0_6, %c0_7], %11 {strides = array<i32>} : memref<1x64x128xbf16, #tpu.memory_space<vmem>>, vector<1x64x128xbf16>,
    %cst_8 = arith.constant dense<0.000000e+00> : vector<128xf32>
    %12 = vector.multi_reduction <add>, %7, %cst_8 [0] : vector<64x128xf32> to vector<128xf32>
    %13 = vector.shape_cast %12 : vector<128xf32> to vector<1x128xf32>
    %c0_9 = arith.constant 0 : index
    %c0_10 = arith.constant 0 : index
    %c0_11 = arith.constant 0 : index
    %14 = vector.load %arg4[%c0_9, %c0_10, %c0_11] : memref<1x1x128xf32, #tpu.memory_space<vmem>>, vector<1x1x128xf32>
    %15 = vector.shape_cast %14 : vector<1x1x128xf32> to vector<1x128xf32>
    %16 = vector.shape_cast %13 : vector<1x128xf32> to vector<1x1x128xf32>
    tpu.vector_store %arg4[%c0_9, %c0_10, %c0_11], %16 {strides = array<i32>} : memref<1x1x128xf32, #tpu.memory_space<vmem>>, vector<1x1x128xf32>,
    %17 = arith.mulf %7, %7 : vector<64x128xf32>
    %cst_12 = arith.constant dense<0.000000e+00> : vector<128xf32>
    %18 = vector.multi_reduction <add>, %17, %cst_12 [0] : vector<64x128xf32> to vector<128xf32>
    %19 = vector.shape_cast %18 : vector<128xf32> to vector<1x128xf32>
    %c0_13 = arith.constant 0 : index
    %c0_14 = arith.constant 0 : index
    %c0_15 = arith.constant 0 : index
    %20 = vector.load %arg5[%c0_13, %c0_14, %c0_15] : memref<1x1x128xf32, #tpu.memory_space<vmem>>, vector<1x1x128xf32>
    %21 = vector.shape_cast %20 : vector<1x1x128xf32> to vector<1x128xf32>
    %22 = vector.shape_cast %19 : vector<1x128xf32> to vector<1x1x128xf32>
    tpu.vector_store %arg5[%c0_13, %c0_14, %c0_15], %22 {strides = array<i32>} : memref<1x1x128xf32, #tpu.memory_space<vmem>>, vector<1x1x128xf32>,
    return
  }
  func.func @transform_0(%arg0: i32) -> (i32, i32, i32, i32) {
    %c0_i32 = arith.constant 0 : i32
    %c0_i32_0 = arith.constant 0 : i32
    %c0_i32_1 = arith.constant 0 : i32
    %c0_i32_2 = arith.constant 0 : i32
    return %arg0, %c0_i32, %c0_i32_0, %c0_i32_1 : i32, i32, i32, i32
  }
  func.func @transform_1(%arg0: i32) -> (i32, i32) {
    %c0_i32 = arith.constant 0 : i32
    %c0_i32_0 = arith.constant 0 : i32
    %c0_i32_1 = arith.constant 0 : i32
    return %c0_i32, %c0_i32_0 : i32, i32
  }
  func.func @transform_2(%arg0: i32) -> (i32, i32, i32) {
    %c0_i32 = arith.constant 0 : i32
    %c0_i32_0 = arith.constant 0 : i32
    %c0_i32_1 = arith.constant 0 : i32
    return %arg0, %c0_i32, %c0_i32_0 : i32, i32, i32
  }
  func.func @transform_3(%arg0: i32) -> (i32, i32, i32) {
    %c0_i32 = arith.constant 0 : i32
    %c0_i32_0 = arith.constant 0 : i32
    %c0_i32_1 = arith.constant 0 : i32
    return %arg0, %c0_i32, %c0_i32_0 : i32, i32, i32
  }
  func.func @transform_4(%arg0: i32) -> (i32, i32, i32) {
    %c0_i32 = arith.constant 0 : i32
    %c0_i32_0 = arith.constant 0 : i32
    %c0_i32_1 = arith.constant 0 : i32
    return %arg0, %c0_i32, %c0_i32_0 : i32, i32, i32
  }
}

</mosaic_0001>

<llo_original>
// kernel: residual_block_forward.6
$region0: #{residual_block_forward.6}
  #allocation0 [shape = 'u32[]', space=smem, size = 0x4, offset = 0x4, fixed_abs, tag = 'smem constant byte address 0x4 - core index']
  #allocation1 [shape = 'u32[144,128]{1,0:T(1,128)}', space=vmem, size = 0x12000, scoped, tag = 'internal scratch']
  %s0 = inlined_call_operand.vmem [shape: bf16[2,64,128], index: 0, kind: input, shape index: {}]
  %s1 = inlined_call_operand.vmem [shape: f32[1,128], index: 1, kind: input, shape index: {}]
  %s2 = inlined_call_operand.vmem [shape: f32[1,128], index: 2, kind: input, shape index: {}]
  %s3 = inlined_call_operand.vmem [shape: bf16[2,64,128], index: 3, kind: output, shape index: {}]
  %s4 = sld [smem:[#allocation0]]
  $region45: #{residual_block_forward.6} parent=0
    _
  %s6 = ssub.s32 1, %s4
  %s7 = scalar_select 0, %s6, %s4
  loop: start=0, step=1, limit=4
  $region2: #{residual_block_forward.6} parent=0 // loop_pre_header
    _
  $region3: #{residual_block_forward.6} parent=0 // loop_header
    %s9 = sphi 0, %s13
    %p10 = scmp.ge.s32.totalorder %s9, 4
    %s19 = sphi 0, %s21
    %s22 = sphi 0, %s19
    %s23 = sphi 0, %s22
    %s39 = sphi 0, %s23
    %s43 = sphi 0, %s43
    %s45 = sphi 0, %s43
    %s46 = sphi 0, %s45
    %s60 = sphi 0, %s46
    %s64 = sphi 0, %s64
    %s66 = sphi 0, %s64
    %s67 = sphi 0, %s66
    %s81 = sphi 0, %s67
    %s87 = sphi 0, %s89
    %s90 = sphi 0, %s87
    %s91 = sphi 0, %s90
    %s107 = sphi 0, %s91
  $region4: #{residual_block_forward.6} parent=0 // loop_header_branch
    %12 = sbr.rel (%p10) target = $region8
  $region5: #{residual_block_forward.6} parent=0 // loop_body
    %s14 = ssub.s32 %s9, 1
    %s15 = ssub.s32 %s9, 2
    %s16 = sadd.s32 %s9, 1
    %s17 = ssub.s32 %s9, %s16
    %p18 = scmp.eq.s32.totalorder %s17, 0
    %s20 = sadd.s32 %s19, 1
    %s21 = scalar_select %p18, %s19, %s20
    %p24 = pneg %p18
    %p25 = scmp.eq.s32.totalorder %s9, 1
    %p26 = por %p24, %p25
    %p27 = scmp.ne.s32.totalorder %s19, %s22
    %p28 = scmp.eq.s32.totalorder %s9, 0
    %p29 = por %p27, %p28
    %p30 = scmp.ne.s32.totalorder %s19, %s22
    %p31 = scmp.eq.s32.totalorder %s14, 1
    %p32 = por %p30, %p31
    %p33 = scmp.ne.s32.totalorder %s22, %s23
    %p34 = scmp.eq.s32.totalorder %s14, 0
    %p35 = por %p33, %p34
    %p36 = scmp.ne.s32.totalorder %s22, %s23
    %p37 = scmp.eq.s32.totalorder %s15, 1
    %p38 = por %p36, %p37
    %p40 = scmp.ne.s32.totalorder %s23, %s39
    %p41 = scmp.eq.s32.totalorder %s15, 0
    %p42 = por %p40, %p41
    %s44 = sadd.s32 %s43, 1
    %p47 = scmp.eq.s32.totalorder %s9, 1
    %p48 = scmp.ne.s32.totalorder %s43, %s45
    %p49 = scmp.eq.s32.totalorder %s9, 0
    %p50 = por %p48, %p49
    %p51 = scmp.ne.s32.totalorder %s43, %s45
    %p52 = scmp.eq.s32.totalorder %s14, 1
    %p53 = por %p51, %p52
    %p54 = scmp.ne.s32.totalorder %s45, %s46
    %p55 = scmp.eq.s32.totalorder %s14, 0
    %p56 = por %p54, %p55
    %p57 = scmp.ne.s32.totalorder %s45, %s46
    %p58 = scmp.eq.s32.totalorder %s15, 1
    %p59 = por %p57, %p58
    %p61 = scmp.ne.s32.totalorder %s46, %s60
    %p62 = scmp.eq.s32.totalorder %s15, 0
    %p63 = por %p61, %p62
    %s65 = sadd.s32 %s64, 1
    %p68 = scmp.eq.s32.totalorder %s9, 1
    %p69 = scmp.ne.s32.totalorder %s64, %s66
    %p70 = scmp.eq.s32.totalorder %s9, 0
    %p71 = por %p69, %p70
    %p72 = scmp.ne.s32.totalorder %s64, %s66
    %p73 = scmp.eq.s32.totalorder %s14, 1
    %p74 = por %p72, %p73
    %p75 = scmp.ne.s32.totalorder %s66, %s67
    %p76 = scmp.eq.s32.totalorder %s14, 0
    %p77 = por %p75, %p76
    %p78 = scmp.ne.s32.totalorder %s66, %s67
    %p79 = scmp.eq.s32.totalorder %s15, 1
    %p80 = por %p78, %p79
    %p82 = scmp.ne.s32.totalorder %s67, %s81
    %p83 = scmp.eq.s32.totalorder %s15, 0
    %p84 = por %p82, %p83
    %s85 = ssub.s32 %s9, %s16
    %p86 = scmp.eq.s32.totalorder %s85, 0
    %s88 = sadd.s32 %s87, 1
    %s89 = scalar_select %p86, %s87, %s88
    %p92 = pneg %p86
    %p93 = scmp.eq.s32.totalorder %s9, 1
    %p94 = por %p92, %p93
    %p95 = scmp.ne.s32.totalorder %s87, %s90
    %p96 = scmp.eq.s32.totalorder %s9, 0
    %p97 = por %p95, %p96
    %p98 = scmp.ne.s32.totalorder %s87, %s90
    %p99 = scmp.eq.s32.totalorder %s14, 1
    %p100 = por %p98, %p99
    %p101 = scmp.ne.s32.totalorder %s90, %s91
    %p102 = scmp.eq.s32.totalorder %s14, 0
    %p103 = por %p101, %p102
    %p104 = scmp.ne.s32.totalorder %s90, %s91
    %p105 = scmp.eq.s32.totalorder %s15, 1
    %p106 = por %p104, %p105
    %p108 = scmp.ne.s32.totalorder %s91, %s107
    %p109 = scmp.eq.s32.totalorder %s15, 0
    %p110 = por %p108, %p109
    %p111 = scmp.le.s32.totalorder 1, %s9
    %p112 = scmp.lt.s32.totalorder %s9, 3
    %p113 = pnand %p111, %p112
    %p114 = pneg %p113
    // Predicated region
    $region9: #{residual_block_forward.6} parent=5 // pred_check
      _
    $region10: #{residual_block_forward.6} parent=5 // pred_check_branch
      %116 = sbr.rel (%p113) target = $region12
    $region11: #{residual_block_forward.6} parent=5 // pred_region
      %s117 = ssub.s32 %s9, 1
      // Predicated region
      $region13: #{residual_block_forward.6} parent=11 // pred_check
        %p118 = pneg %p56
      $region14: #{residual_block_forward.6} parent=11 // pred_check_branch
        %120 = sbr.rel (%p118) target = $region16
      $region15: #{residual_block_forward.6} parent=11 // pred_region
        _
      $region16: #{residual_block_forward.6} parent=11 // pred_fallthru
        _
      // Predicated region
      $region17: #{residual_block_forward.6} parent=11 // pred_check
        %p121 = pneg %p77
      $region18: #{residual_block_forward.6} parent=11 // pred_check_branch
        %123 = sbr.rel (%p121) target = $region20
      $region19: #{residual_block_forward.6} parent=11 // pred_region
        _
      $region20: #{residual_block_forward.6} parent=11 // pred_fallthru
        _
    $region12: #{residual_block_forward.6} parent=5 // pred_fallthru
      _
    %p124 = scmp.lt.s32.totalorder %s9, 2
    // Predicated region
    $region21: #{residual_block_forward.6} parent=5 // pred_check
      %p125 = pneg %p124
    $region22: #{residual_block_forward.6} parent=5 // pred_check_branch
      %127 = sbr.rel (%p125) target = $region24
    $region23: #{residual_block_forward.6} parent=5 // pred_region
      // Predicated region
      $region25: #{residual_block_forward.6} parent=23 // pred_check
        %p128 = pneg %p29
      $region26: #{residual_block_forward.6} parent=23 // pred_check_branch
        %130 = sbr.rel (%p128) target = $region28
      $region27: #{residual_block_forward.6} parent=23 // pred_region
        %p131 = scmp.lt.s32.totalorder %s9, 1
        %s132 = scalar_select %p131, %s9, 1
        %s133 = smul.addr %s132, 8
        %s134 = smul.addr %s133, 4
        %s135 = scalar_lea.vmem %s0, %s134
      $region28: #{residual_block_forward.6} parent=23 // pred_fallthru
        _
    $region24: #{residual_block_forward.6} parent=5 // pred_fallthru
      _
    %p136 = scmp.le.s32.totalorder 1, %s9
    %p137 = scmp.lt.s32.totalorder %s9, 3
    %p138 = pnand %p136, %p137
    %p139 = pneg %p138
    // Predicated region
    $region29: #{residual_block_forward.6} parent=5 // pred_check
      _
    $region30: #{residual_block_forward.6} parent=5 // pred_check_branch
      %141 = sbr.rel (%p138) target = $region32
    $region31: #{residual_block_forward.6} parent=5 // pred_region
      %s142 = ssub.s32 %s9, 1
      %p143 = scmp.lt.s32.totalorder %s14, 1
      %s144 = scalar_select %p143, %s14, 1
      %s145 = smul.addr %s144, 8
      %s146 = smul.addr %s145, 4
      %s147 = scalar_lea.vmem %s0, %s146
      %p148 = pneg %p35
      %p149 = pneg %p32
      %p150 = pneg %p56
      %p151 = pneg %p53
      %p152 = pneg %p77
      %p153 = pneg %p74
      %p154 = pneg %p103
      %p155 = pneg %p100
      %p156 = scmp.lt.s32.totalorder %s14, 1
      %s157 = scalar_select %p156, %s14, 1
      %s158 = smul.addr %s157, 8
      %s159 = smul.addr %s158, 4
      %s160 = scalar_lea.vmem %s3, %s159
      %p161 = scmp.lt.s32.totalorder %s14, 1
      %s162 = scalar_select %p161, %s14, 1
      %s163 = smul.addr %s162, 8
      %s164 = smul.addr %s163, 4
      %s165 = scalar_lea.vmem %s0, %s164
      %p166 = scmp.lt.s32.totalorder %s14, 1
      %s167 = scalar_select %p166, %s14, 1
      %s168 = smul.addr %s167, 8
      %s169 = smul.addr %s168, 4
      %s170 = scalar_lea.vmem %s3, %s169
      %v171 = vld [vmem:[%s165] sm:$0xf]
      %v172 = vld [vmem:[%s165 + $0x4] sm:$0xf]
      %v173 = vld [vmem:[%s165 + $0x8] sm:$0xf]
      %v174 = vld [vmem:[%s165 + $0xc] sm:$0xf]
      %v175 = vld [vmem:[%s165 + $0x10] sm:$0xf]
      %v176 = vld [vmem:[%s165 + $0x14] sm:$0xf]
      %v177 = vld [vmem:[%s165 + $0x18] sm:$0xf]
      %v178 = vld [vmem:[%s165 + $0x1c] sm:$0xf]
      %v179 = vunpack.c.l.bf16 %v171
      %v180 = vunpack.c.l.bf16 %v172
      %v181 = vunpack.c.l.bf16 %v173
      %v182 = vunpack.c.l.bf16 %v174
      %v183 = vunpack.c.l.bf16 %v175
      %v184 = vunpack.c.l.bf16 %v176
      %v185 = vunpack.c.l.bf16 %v177
      %v186 = vunpack.c.l.bf16 %v178
      %v187 = vld [vmem:[%s1] sm:$0x1]
      %v189 = vlaneseq
      %v190 = vshrl.u32 %v189, 7
      %v191 = vsub.s32 0, %v190
      %v192 = vrot.slane %v187, %v191
      %v194 = vmul.f32 %v179, %v192
      %v195 = vmul.f32 %v180, %v192
      %v196 = vmul.f32 %v181, %v192
      %v197 = vmul.f32 %v182, %v192
      %v198 = vmul.f32 %v183, %v192
      %v199 = vmul.f32 %v184, %v192
      %v200 = vmul.f32 %v185, %v192
      %v201 = vmul.f32 %v186, %v192
      %v202 = vld [vmem:[%s2] sm:$0x1]
      %v204 = vlaneseq
      %v205 = vshrl.u32 %v204, 7
      %v206 = vsub.s32 0, %v205
      %v207 = vrot.slane %v202, %v206
      %v209 = vadd.f32 %v194, %v207
      %v210 = vadd.f32 %v195, %v207
      %v211 = vadd.f32 %v196, %v207
      %v212 = vadd.f32 %v197, %v207
      %v213 = vadd.f32 %v198, %v207
      %v214 = vadd.f32 %v199, %v207
      %v215 = vadd.f32 %v200, %v207
      %v216 = vadd.f32 %v201, %v207
      %v217 = vmax.f32 %v209, 0.0
      %v218 = vmax.f32 %v210, 0.0
      %v219 = vmax.f32 %v211, 0.0
      %v220 = vmax.f32 %v212, 0.0
      %v221 = vmax.f32 %v213, 0.0
      %v222 = vmax.f32 %v214, 0.0
      %v223 = vmax.f32 %v215, 0.0
      %v224 = vmax.f32 %v216, 0.0
      %v225 = vpack.c.bf16 %v218, %v217
      %v226 = vpack.c.bf16 %v220, %v219
      %v227 = vpack.c.bf16 %v222, %v221
      %v228 = vpack.c.bf16 %v224, %v223
      %v233 = vunpack.c.l.b16 %v225
      %v234 = vunpack.c.h.b16 %v225
      %v235 = vunpack.c.l.b16 %v226
      %v236 = vunpack.c.h.b16 %v226
      %v237 = vunpack.c.l.b16 %v227
      %v238 = vunpack.c.h.b16 %v227
      %v239 = vunpack.c.l.b16 %v228
      %v240 = vunpack.c.h.b16 %v228
      %v241 = vpack.c.b16 %v233, %v233
      %v242 = vpack.c.b16 %v234, %v234
      %v243 = vpack.c.b16 %v235, %v235
      %v244 = vpack.c.b16 %v236, %v236
      %v245 = vpack.c.b16 %v237, %v237
      %v246 = vpack.c.b16 %v238, %v238
      %v247 = vpack.c.b16 %v239, %v239
      %v248 = vpack.c.b16 %v240, %v240
      %257 = vst [vmem:[%s170] sm:$0xf] %v241
      %258 = vst [vmem:[%s170 + $0x4] sm:$0xf] %v242
      %259 = vst [vmem:[%s170 + $0x8] sm:$0xf] %v243
      %260 = vst [vmem:[%s170 + $0xc] sm:$0xf] %v244
      %261 = vst [vmem:[%s170 + $0x10] sm:$0xf] %v245
      %262 = vst [vmem:[%s170 + $0x14] sm:$0xf] %v246
      %263 = vst [vmem:[%s170 + $0x18] sm:$0xf] %v247
      %264 = vst [vmem:[%s170 + $0x1c] sm:$0xf] %v248
      %p265 = scmp.lt.s32.totalorder %s14, 1
      %s266 = scalar_select %p265, %s14, 1
      %s267 = smul.addr %s266, 8
      %s268 = smul.addr %s267, 4
      %s269 = scalar_lea.vmem %s3, %s268
      // Predicated region
      $region33: #{residual_block_forward.6} parent=31 // pred_check
        %p270 = pneg %p100
      $region34: #{residual_block_forward.6} parent=31 // pred_check_branch
        %272 = sbr.rel (%p270) target = $region36
      $region35: #{residual_block_forward.6} parent=31 // pred_region
        _
      $region36: #{residual_block_forward.6} parent=31 // pred_fallthru
        _
    $region32: #{residual_block_forward.6} parent=5 // pred_fallthru
      _
    %p273 = scmp.le.s32.totalorder 2, %s9
    // Predicated region
    $region37: #{residual_block_forward.6} parent=5 // pred_check
      %p274 = pneg %p273
    $region38: #{residual_block_forward.6} parent=5 // pred_check_branch
      %276 = sbr.rel (%p274) target = $region40
    $region39: #{residual_block_forward.6} parent=5 // pred_region
      %s277 = ssub.s32 %s9, 2
      // Predicated region
      $region41: #{residual_block_forward.6} parent=39 // pred_check
        %p278 = pneg %p106
      $region42: #{residual_block_forward.6} parent=39 // pred_check_branch
        %280 = sbr.rel (%p278) target = $region44
      $region43: #{residual_block_forward.6} parent=39 // pred_region
        %p281 = scmp.lt.s32.totalorder %s15, 1
        %s282 = scalar_select %p281, %s15, 1
        %s283 = smul.addr %s282, 8
        %s284 = smul.addr %s283, 4
        %s285 = scalar_lea.vmem %s3, %s284
      $region44: #{residual_block_forward.6} parent=39 // pred_fallthru
        _
    $region40: #{residual_block_forward.6} parent=5 // pred_fallthru
      _
  $region6: #{residual_block_forward.6} parent=0 // loop_footer
    %s13 = sadd.s32 1, %s9
  $region7: #{residual_block_forward.6} parent=0 // loop_footer_branch
    %8 = sbr.rel target = $region3
  $region8: #{residual_block_forward.6} parent=0 // loop_exit
    _

// kernel: residual_block_forward.9
$region0: #{residual_block_forward.9}
  #allocation0 [shape = 'u32[]', space=smem, size = 0x4, offset = 0x4, fixed_abs, tag = 'smem constant byte address 0x4 - core index']
  #allocation1 [shape = 'u32[144,128]{1,0:T(1,128)}', space=vmem, size = 0x12000, scoped, tag = 'internal scratch']
  %s0 = inlined_call_operand.vmem [shape: bf16[2,64,128], index: 0, kind: input, shape index: {}]
  %s1 = inlined_call_operand.vmem [shape: f32[1,128], index: 1, kind: input, shape index: {}]
  %s2 = inlined_call_operand.vmem [shape: f32[1,128], index: 2, kind: input, shape index: {}]
  %s3 = inlined_call_operand.vmem [shape: bf16[2,64,128], index: 3, kind: input, shape index: {}]
  %s4 = inlined_call_operand.vmem [shape: f32[1,128], index: 4, kind: input, shape index: {}]
  %s5 = inlined_call_operand.vmem [shape: f32[1,128], index: 5, kind: input, shape index: {}]
  %s6 = inlined_call_operand.vmem [shape: f32[2,64,128], index: 6, kind: output, shape index: {}]
  %s7 = sld [smem:[#allocation0]]
  $region57: #{residual_block_forward.9} parent=0
    _
  %s9 = ssub.s32 1, %s7
  %s10 = scalar_select 0, %s9, %s7
  loop: start=0, step=1, limit=4
  $region2: #{residual_block_forward.9} parent=0 // loop_pre_header
    _
  $region3: #{residual_block_forward.9} parent=0 // loop_header
    %s12 = sphi 0, %s16
    %p13 = scmp.ge.s32.totalorder %s12, 4
    %s22 = sphi 0, %s24
    %s25 = sphi 0, %s22
    %s26 = sphi 0, %s25
    %s42 = sphi 0, %s26
    %s46 = sphi 0, %s46
    %s48 = sphi 0, %s46
    %s49 = sphi 0, %s48
    %s63 = sphi 0, %s49
    %s67 = sphi 0, %s67
    %s69 = sphi 0, %s67
    %s70 = sphi 0, %s69
    %s84 = sphi 0, %s70
    %s90 = sphi 0, %s92
    %s93 = sphi 0, %s90
    %s94 = sphi 0, %s93
    %s110 = sphi 0, %s94
    %s114 = sphi 0, %s114
    %s116 = sphi 0, %s114
    %s117 = sphi 0, %s116
    %s131 = sphi 0, %s117
    %s135 = sphi 0, %s135
    %s137 = sphi 0, %s135
    %s138 = sphi 0, %s137
    %s152 = sphi 0, %s138
    %s158 = sphi 0, %s160
    %s161 = sphi 0, %s158
    %s162 = sphi 0, %s161
    %s178 = sphi 0, %s162
  $region4: #{residual_block_forward.9} parent=0 // loop_header_branch
    %15 = sbr.rel (%p13) target = $region8
  $region5: #{residual_block_forward.9} parent=0 // loop_body
    %s17 = ssub.s32 %s12, 1
    %s18 = ssub.s32 %s12, 2
    %s19 = sadd.s32 %s12, 1
    %s20 = ssub.s32 %s12, %s19
    %p21 = scmp.eq.s32.totalorder %s20, 0
    %s23 = sadd.s32 %s22, 1
    %s24 = scalar_select %p21, %s22, %s23
    %p27 = pneg %p21
    %p28 = scmp.eq.s32.totalorder %s12, 1
    %p29 = por %p27, %p28
    %p30 = scmp.ne.s32.totalorder %s22, %s25
    %p31 = scmp.eq.s32.totalorder %s12, 0
    %p32 = por %p30, %p31
    %p33 = scmp.ne.s32.totalorder %s22, %s25
    %p34 = scmp.eq.s32.totalorder %s17, 1
    %p35 = por %p33, %p34
    %p36 = scmp.ne.s32.totalorder %s25, %s26
    %p37 = scmp.eq.s32.totalorder %s17, 0
    %p38 = por %p36, %p37
    %p39 = scmp.ne.s32.totalorder %s25, %s26
    %p40 = scmp.eq.s32.totalorder %s18, 1
    %p41 = por %p39, %p40
    %p43 = scmp.ne.s32.totalorder %s26, %s42
    %p44 = scmp.eq.s32.totalorder %s18, 0
    %p45 = por %p43, %p44
    %s47 = sadd.s32 %s46, 1
    %p50 = scmp.eq.s32.totalorder %s12, 1
    %p51 = scmp.ne.s32.totalorder %s46, %s48
    %p52 = scmp.eq.s32.totalorder %s12, 0
    %p53 = por %p51, %p52
    %p54 = scmp.ne.s32.totalorder %s46, %s48
    %p55 = scmp.eq.s32.totalorder %s17, 1
    %p56 = por %p54, %p55
    %p57 = scmp.ne.s32.totalorder %s48, %s49
    %p58 = scmp.eq.s32.totalorder %s17, 0
    %p59 = por %p57, %p58
    %p60 = scmp.ne.s32.totalorder %s48, %s49
    %p61 = scmp.eq.s32.totalorder %s18, 1
    %p62 = por %p60, %p61
    %p64 = scmp.ne.s32.totalorder %s49, %s63
    %p65 = scmp.eq.s32.totalorder %s18, 0
    %p66 = por %p64, %p65
    %s68 = sadd.s32 %s67, 1
    %p71 = scmp.eq.s32.totalorder %s12, 1
    %p72 = scmp.ne.s32.totalorder %s67, %s69
    %p73 = scmp.eq.s32.totalorder %s12, 0
    %p74 = por %p72, %p73
    %p75 = scmp.ne.s32.totalorder %s67, %s69
    %p76 = scmp.eq.s32.totalorder %s17, 1
    %p77 = por %p75, %p76
    %p78 = scmp.ne.s32.totalorder %s69, %s70
    %p79 = scmp.eq.s32.totalorder %s17, 0
    %p80 = por %p78, %p79
    %p81 = scmp.ne.s32.totalorder %s69, %s70
    %p82 = scmp.eq.s32.totalorder %s18, 1
    %p83 = por %p81, %p82
    %p85 = scmp.ne.s32.totalorder %s70, %s84
    %p86 = scmp.eq.s32.totalorder %s18, 0
    %p87 = por %p85, %p86
    %s88 = ssub.s32 %s12, %s19
    %p89 = scmp.eq.s32.totalorder %s88, 0
    %s91 = sadd.s32 %s90, 1
    %s92 = scalar_select %p89, %s90, %s91
    %p95 = pneg %p89
    %p96 = scmp.eq.s32.totalorder %s12, 1
    %p97 = por %p95, %p96
    %p98 = scmp.ne.s32.totalorder %s90, %s93
    %p99 = scmp.eq.s32.totalorder %s12, 0
    %p100 = por %p98, %p99
    %p101 = scmp.ne.s32.totalorder %s90, %s93
    %p102 = scmp.eq.s32.totalorder %s17, 1
    %p103 = por %p101, %p102
    %p104 = scmp.ne.s32.totalorder %s93, %s94
    %p105 = scmp.eq.s32.totalorder %s17, 0
    %p106 = por %p104, %p105
    %p107 = scmp.ne.s32.totalorder %s93, %s94
    %p108 = scmp.eq.s32.totalorder %s18, 1
    %p109 = por %p107, %p108
    %p111 = scmp.ne.s32.totalorder %s94, %s110
    %p112 = scmp.eq.s32.totalorder %s18, 0
    %p113 = por %p111, %p112
    %s115 = sadd.s32 %s114, 1
    %p118 = scmp.eq.s32.totalorder %s12, 1
    %p119 = scmp.ne.s32.totalorder %s114, %s116
    %p120 = scmp.eq.s32.totalorder %s12, 0
    %p121 = por %p119, %p120
    %p122 = scmp.ne.s32.totalorder %s114, %s116
    %p123 = scmp.eq.s32.totalorder %s17, 1
    %p124 = por %p122, %p123
    %p125 = scmp.ne.s32.totalorder %s116, %s117
    %p126 = scmp.eq.s32.totalorder %s17, 0
    %p127 = por %p125, %p126
    %p128 = scmp.ne.s32.totalorder %s116, %s117
    %p129 = scmp.eq.s32.totalorder %s18, 1
    %p130 = por %p128, %p129
    %p132 = scmp.ne.s32.totalorder %s117, %s131
    %p133 = scmp.eq.s32.totalorder %s18, 0
    %p134 = por %p132, %p133
    %s136 = sadd.s32 %s135, 1
    %p139 = scmp.eq.s32.totalorder %s12, 1
    %p140 = scmp.ne.s32.totalorder %s135, %s137
    %p141 = scmp.eq.s32.totalorder %s12, 0
    %p142 = por %p140, %p141
    %p143 = scmp.ne.s32.totalorder %s135, %s137
    %p144 = scmp.eq.s32.totalorder %s17, 1
    %p145 = por %p143, %p144
    %p146 = scmp.ne.s32.totalorder %s137, %s138
    %p147 = scmp.eq.s32.totalorder %s17, 0
    %p148 = por %p146, %p147
    %p149 = scmp.ne.s32.totalorder %s137, %s138
    %p150 = scmp.eq.s32.totalorder %s18, 1
    %p151 = por %p149, %p150
    %p153 = scmp.ne.s32.totalorder %s138, %s152
    %p154 = scmp.eq.s32.totalorder %s18, 0
    %p155 = por %p153, %p154
    %s156 = ssub.s32 %s12, %s19
    %p157 = scmp.eq.s32.totalorder %s156, 0
    %s159 = sadd.s32 %s158, 1
    %s160 = scalar_select %p157, %s158, %s159
    %p163 = pneg %p157
    %p164 = scmp.eq.s32.totalorder %s12, 1
    %p165 = por %p163, %p164
    %p166 = scmp.ne.s32.totalorder %s158, %s161
    %p167 = scmp.eq.s32.totalorder %s12, 0
    %p168 = por %p166, %p167
    %p169 = scmp.ne.s32.totalorder %s158, %s161
    %p170 = scmp.eq.s32.totalorder %s17, 1
    %p171 = por %p169, %p170
    %p172 = scmp.ne.s32.totalorder %s161, %s162
    %p173 = scmp.eq.s32.totalorder %s17, 0
    %p174 = por %p172, %p173
    %p175 = scmp.ne.s32.totalorder %s161, %s162
    %p176 = scmp.eq.s32.totalorder %s18, 1
    %p177 = por %p175, %p176
    %p179 = scmp.ne.s32.totalorder %s162, %s178
    %p180 = scmp.eq.s32.totalorder %s18, 0
    %p181 = por %p179, %p180
    %p182 = scmp.le.s32.totalorder 1, %s12
    %p183 = scmp.lt.s32.totalorder %s12, 3
    %p184 = pnand %p182, %p183
    %p185 = pneg %p184
    // Predicated region
    $region9: #{residual_block_forward.9} parent=5 // pred_check
      _
    $region10: #{residual_block_forward.9} parent=5 // pred_check_branch
      %187 = sbr.rel (%p184) target = $region12
    $region11: #{residual_block_forward.9} parent=5 // pred_region
      %s188 = ssub.s32 %s12, 1
      // Predicated region
      $region13: #{residual_block_forward.9} parent=11 // pred_check
        %p189 = pneg %p59
      $region14: #{residual_block_forward.9} parent=11 // pred_check_branch
        %191 = sbr.rel (%p189) target = $region16
      $region15: #{residual_block_forward.9} parent=11 // pred_region
        _
      $region16: #{residual_block_forward.9} parent=11 // pred_fallthru
        _
      // Predicated region
      $region17: #{residual_block_forward.9} parent=11 // pred_check
        %p192 = pneg %p80
      $region18: #{residual_block_forward.9} parent=11 // pred_check_branch
        %194 = sbr.rel (%p192) target = $region20
      $region19: #{residual_block_forward.9} parent=11 // pred_region
        _
      $region20: #{residual_block_forward.9} parent=11 // pred_fallthru
        _
      // Predicated region
      $region21: #{residual_block_forward.9} parent=11 // pred_check
        %p195 = pneg %p127
      $region22: #{residual_block_forward.9} parent=11 // pred_check_branch
        %197 = sbr.rel (%p195) target = $region24
      $region23: #{residual_block_forward.9} parent=11 // pred_region
        _
      $region24: #{residual_block_forward.9} parent=11 // pred_fallthru
        _
      // Predicated region
      $region25: #{residual_block_forward.9} parent=11 // pred_check
        %p198 = pneg %p148
      $region26: #{residual_block_forward.9} parent=11 // pred_check_branch
        %200 = sbr.rel (%p198) target = $region28
      $region27: #{residual_block_forward.9} parent=11 // pred_region
        _
      $region28: #{residual_block_forward.9} parent=11 // pred_fallthru
        _
    $region12: #{residual_block_forward.9} parent=5 // pred_fallthru
      _
    %p201 = scmp.lt.s32.totalorder %s12, 2
    // Predicated region
    $region29: #{residual_block_forward.9} parent=5 // pred_check
      %p202 = pneg %p201
    $region30: #{residual_block_forward.9} parent=5 // pred_check_branch
      %204 = sbr.rel (%p202) target = $region32
    $region31: #{residual_block_forward.9} parent=5 // pred_region
      // Predicated region
      $region33: #{residual_block_forward.9} parent=31 // pred_check
        %p205 = pneg %p32
      $region34: #{residual_block_forward.9} parent=31 // pred_check_branch
        %207 = sbr.rel (%p205) target = $region36
      $region35: #{residual_block_forward.9} parent=31 // pred_region
        %p208 = scmp.lt.s32.totalorder %s12, 1
        %s209 = scalar_select %p208, %s12, 1
        %s210 = smul.addr %s209, 8
        %s211 = smul.addr %s210, 4
        %s212 = scalar_lea.vmem %s0, %s211
      $region36: #{residual_block_forward.9} parent=31 // pred_fallthru
        _
      // Predicated region
      $region37: #{residual_block_forward.9} parent=31 // pred_check
        %p213 = pneg %p100
      $region38: #{residual_block_forward.9} parent=31 // pred_check_branch
        %215 = sbr.rel (%p213) target = $region40
      $region39: #{residual_block_forward.9} parent=31 // pred_region
        %p216 = scmp.lt.s32.totalorder %s12, 1
        %s217 = scalar_select %p216, %s12, 1
        %s218 = smul.addr %s217, 8
        %s219 = smul.addr %s218, 4
        %s220 = scalar_lea.vmem %s3, %s219
      $region40: #{residual_block_forward.9} parent=31 // pred_fallthru
        _
    $region32: #{residual_block_forward.9} parent=5 // pred_fallthru
      _
    %p221 = scmp.le.s32.totalorder 1, %s12
    %p222 = scmp.lt.s32.totalorder %s12, 3
    %p223 = pnand %p221, %p222
    %p224 = pneg %p223
    // Predicated region
    $region41: #{residual_block_forward.9} parent=5 // pred_check
      _
    $region42: #{residual_block_forward.9} parent=5 // pred_check_branch
      %226 = sbr.rel (%p223) target = $region44
    $region43: #{residual_block_forward.9} parent=5 // pred_region
      %s227 = ssub.s32 %s12, 1
      %p228 = scmp.lt.s32.totalorder %s17, 1
      %s229 = scalar_select %p228, %s17, 1
      %s230 = smul.addr %s229, 8
      %s231 = smul.addr %s230, 4
      %s232 = scalar_lea.vmem %s0, %s231
      %p233 = pneg %p38
      %p234 = pneg %p35
      %p235 = pneg %p59
      %p236 = pneg %p56
      %p237 = pneg %p80
      %p238 = pneg %p77
      %p239 = scmp.lt.s32.totalorder %s17, 1
      %s240 = scalar_select %p239, %s17, 1
      %s241 = smul.addr %s240, 8
      %s242 = smul.addr %s241, 4
      %s243 = scalar_lea.vmem %s3, %s242
      %p244 = pneg %p106
      %p245 = pneg %p103
      %p246 = pneg %p127
      %p247 = pneg %p124
      %p248 = pneg %p148
      %p249 = pneg %p145
      %p250 = pneg %p174
      %p251 = pneg %p171
      %p252 = scmp.lt.s32.totalorder %s17, 1
      %s253 = scalar_select %p252, %s17, 1
      %s254 = smul.addr %s253, 8
      %s255 = smul.addr %s254, 8
      %s256 = scalar_lea.vmem %s6, %s255
      %p257 = scmp.lt.s32.totalorder %s17, 1
      %s258 = scalar_select %p257, %s17, 1
      %s259 = smul.addr %s258, 8
      %s260 = smul.addr %s259, 4
      %s261 = scalar_lea.vmem %s0, %s260
      %p262 = scmp.lt.s32.totalorder %s17, 1
      %s263 = scalar_select %p262, %s17, 1
      %s264 = smul.addr %s263, 8
      %s265 = smul.addr %s264, 4
      %s266 = scalar_lea.vmem %s3, %s265
      %p267 = scmp.lt.s32.totalorder %s17, 1
      %s268 = scalar_select %p267, %s17, 1
      %s269 = smul.addr %s268, 8
      %s270 = smul.addr %s269, 8
      %s271 = scalar_lea.vmem %s6, %s270
      %v272 = vld [vmem:[%s261] sm:$0xf]
      %v273 = vld [vmem:[%s261 + $0x4] sm:$0xf]
      %v274 = vld [vmem:[%s261 + $0x8] sm:$0xf]
      %v275 = vld [vmem:[%s261 + $0xc] sm:$0xf]
      %v276 = vld [vmem:[%s261 + $0x10] sm:$0xf]
      %v277 = vld [vmem:[%s261 + $0x14] sm:$0xf]
      %v278 = vld [vmem:[%s261 + $0x18] sm:$0xf]
      %v279 = vld [vmem:[%s261 + $0x1c] sm:$0xf]
      %v280 = vunpack.c.l.bf16 %v272
      %v281 = vunpack.c.l.bf16 %v273
      %v282 = vunpack.c.l.bf16 %v274
      %v283 = vunpack.c.l.bf16 %v275
      %v284 = vunpack.c.l.bf16 %v276
      %v285 = vunpack.c.l.bf16 %v277
      %v286 = vunpack.c.l.bf16 %v278
      %v287 = vunpack.c.l.bf16 %v279
      %v288 = vld [vmem:[%s1] sm:$0x1]
      %v290 = vlaneseq
      %v291 = vshrl.u32 %v290, 7
      %v292 = vsub.s32 0, %v291
      %v293 = vrot.slane %v288, %v292
      %v295 = vmul.f32 %v280, %v293
      %v296 = vmul.f32 %v281, %v293
      %v297 = vmul.f32 %v282, %v293
      %v298 = vmul.f32 %v283, %v293
      %v299 = vmul.f32 %v284, %v293
      %v300 = vmul.f32 %v285, %v293
      %v301 = vmul.f32 %v286, %v293
      %v302 = vmul.f32 %v287, %v293
      %v303 = vld [vmem:[%s2] sm:$0x1]
      %v305 = vlaneseq
      %v306 = vshrl.u32 %v305, 7
      %v307 = vsub.s32 0, %v306
      %v308 = vrot.slane %v303, %v307
      %v310 = vadd.f32 %v295, %v308
      %v311 = vadd.f32 %v296, %v308
      %v312 = vadd.f32 %v297, %v308
      %v313 = vadd.f32 %v298, %v308
      %v314 = vadd.f32 %v299, %v308
      %v315 = vadd.f32 %v300, %v308
      %v316 = vadd.f32 %v301, %v308
      %v317 = vadd.f32 %v302, %v308
      %v318 = vld [vmem:[%s266] sm:$0xf]
      %v319 = vld [vmem:[%s266 + $0x4] sm:$0xf]
      %v320 = vld [vmem:[%s266 + $0x8] sm:$0xf]
      %v321 = vld [vmem:[%s266 + $0xc] sm:$0xf]
      %v322 = vld [vmem:[%s266 + $0x10] sm:$0xf]
      %v323 = vld [vmem:[%s266 + $0x14] sm:$0xf]
      %v324 = vld [vmem:[%s266 + $0x18] sm:$0xf]
      %v325 = vld [vmem:[%s266 + $0x1c] sm:$0xf]
      %v326 = vunpack.c.l.bf16 %v318
      %v327 = vunpack.c.l.bf16 %v319
      %v328 = vunpack.c.l.bf16 %v320
      %v329 = vunpack.c.l.bf16 %v321
      %v330 = vunpack.c.l.bf16 %v322
      %v331 = vunpack.c.l.bf16 %v323
      %v332 = vunpack.c.l.bf16 %v324
      %v333 = vunpack.c.l.bf16 %v325
      %v334 = vld [vmem:[%s4] sm:$0x1]
      %v336 = vlaneseq
      %v337 = vshrl.u32 %v336, 7
      %v338 = vsub.s32 0, %v337
      %v339 = vrot.slane %v334, %v338
      %v341 = vmul.f32 %v326, %v339
      %v342 = vmul.f32 %v327, %v339
      %v343 = vmul.f32 %v328, %v339
      %v344 = vmul.f32 %v329, %v339
      %v345 = vmul.f32 %v330, %v339
      %v346 = vmul.f32 %v331, %v339
      %v347 = vmul.f32 %v332, %v339
      %v348 = vmul.f32 %v333, %v339
      %v349 = vld [vmem:[%s5] sm:$0x1]
      %v351 = vlaneseq
      %v352 = vshrl.u32 %v351, 7
      %v353 = vsub.s32 0, %v352
      %v354 = vrot.slane %v349, %v353
      %v356 = vadd.f32 %v341, %v354
      %v357 = vadd.f32 %v342, %v354
      %v358 = vadd.f32 %v343, %v354
      %v359 = vadd.f32 %v344, %v354
      %v360 = vadd.f32 %v345, %v354
      %v361 = vadd.f32 %v346, %v354
      %v362 = vadd.f32 %v347, %v354
      %v363 = vadd.f32 %v348, %v354
      %v364 = vadd.f32 %v310, %v356
      %v365 = vadd.f32 %v311, %v357
      %v366 = vadd.f32 %v312, %v358
      %v367 = vadd.f32 %v313, %v359
      %v368 = vadd.f32 %v314, %v360
      %v369 = vadd.f32 %v315, %v361
      %v370 = vadd.f32 %v316, %v362
      %v371 = vadd.f32 %v317, %v363
      %v372 = vmax.f32 %v364, 0.0
      %v373 = vmax.f32 %v365, 0.0
      %v374 = vmax.f32 %v366, 0.0
      %v375 = vmax.f32 %v367, 0.0
      %v376 = vmax.f32 %v368, 0.0
      %v377 = vmax.f32 %v369, 0.0
      %v378 = vmax.f32 %v370, 0.0
      %v379 = vmax.f32 %v371, 0.0
      %380 = vst [vmem:[%s271] sm:$0xff] %v372
      %381 = vst [vmem:[%s271 + $0x8] sm:$0xff] %v373
      %382 = vst [vmem:[%s271 + $0x10] sm:$0xff] %v374
      %383 = vst [vmem:[%s271 + $0x18] sm:$0xff] %v375
      %384 = vst [vmem:[%s271 + $0x20] sm:$0xff] %v376
      %385 = vst [vmem:[%s271 + $0x28] sm:$0xff] %v377
      %386 = vst [vmem:[%s271 + $0x30] sm:$0xff] %v378
      %387 = vst [vmem:[%s271 + $0x38] sm:$0xff] %v379
      %p388 = scmp.lt.s32.totalorder %s17, 1
      %s389 = scalar_select %p388, %s17, 1
      %s390 = smul.addr %s389, 8
      %s391 = smul.addr %s390, 8
      %s392 = scalar_lea.vmem %s6, %s391
      // Predicated region
      $region45: #{residual_block_forward.9} parent=43 // pred_check
        %p393 = pneg %p171
      $region46: #{residual_block_forward.9} parent=43 // pred_check_branch
        %395 = sbr.rel (%p393) target = $region48
      $region47: #{residual_block_forward.9} parent=43 // pred_region
        _
      $region48: #{residual_block_forward.9} parent=43 // pred_fallthru
        _
    $region44: #{residual_block_forward.9} parent=5 // pred_fallthru
      _
    %p396 = scmp.le.s32.totalorder 2, %s12
    // Predicated region
    $region49: #{residual_block_forward.9} parent=5 // pred_check
      %p397 = pneg %p396
    $region50: #{residual_block_forward.9} parent=5 // pred_check_branch
      %399 = sbr.rel (%p397) target = $region52
    $region51: #{residual_block_forward.9} parent=5 // pred_region
      %s400 = ssub.s32 %s12, 2
      // Predicated region
      $region53: #{residual_block_forward.9} parent=51 // pred_check
        %p401 = pneg %p177
      $region54: #{residual_block_forward.9} parent=51 // pred_check_branch
        %403 = sbr.rel (%p401) target = $region56
      $region55: #{residual_block_forward.9} parent=51 // pred_region
        %p404 = scmp.lt.s32.totalorder %s18, 1
        %s405 = scalar_select %p404, %s18, 1
        %s406 = smul.addr %s405, 8
        %s407 = smul.addr %s406, 8
        %s408 = scalar_lea.vmem %s6, %s407
      $region56: #{residual_block_forward.9} parent=51 // pred_fallthru
        _
    $region52: #{residual_block_forward.9} parent=5 // pred_fallthru
      _
  $region6: #{residual_block_forward.9} parent=0 // loop_footer
    %s16 = sadd.s32 1, %s12
  $region7: #{residual_block_forward.9} parent=0 // loop_footer_branch
    %11 = sbr.rel target = $region3
  $region8: #{residual_block_forward.9} parent=0 // loop_exit
    _

// kernel: residual_block_forward.5
$region0: #{residual_block_forward.5}
  #allocation0 [shape = 'u32[]', space=smem, size = 0x4, offset = 0x4, fixed_abs, tag = 'smem constant byte address 0x4 - core index']
  #allocation1 [shape = 'u32[144,128]{1,0:T(1,128)}', space=vmem, size = 0x12000, scoped, tag = 'internal scratch']
  %s0 = inlined_call_operand.vmem [shape: bf16[2,36,9,128], index: 0, kind: input, shape index: {}]
  %s1 = inlined_call_operand.vmem [shape: bf16[1152,128], index: 1, kind: input, shape index: {}]
  %s2 = inlined_call_operand.vmem [shape: bf16[2,64,128], index: 2, kind: output, shape index: {0}]
  %s3 = inlined_call_operand.vmem [shape: f32[2,1,128], index: 3, kind: output, shape index: {1}]
  %s4 = inlined_call_operand.vmem [shape: f32[2,1,128], index: 4, kind: output, shape index: {2}]
  %5 = xla_tuple %s2, %s3, %s4
  %s6 = sld [smem:[#allocation0]]
  $region57: #{residual_block_forward.5} parent=0
    _
  %s8 = ssub.s32 1, %s6
  %s9 = scalar_select 0, %s8, %s6
  loop: start=0, step=1, limit=4
  $region2: #{residual_block_forward.5} parent=0 // loop_pre_header
    _
  $region3: #{residual_block_forward.5} parent=0 // loop_header
    %s11 = sphi 0, %s15
    %p12 = scmp.ge.s32.totalorder %s11, 4
    %s21 = sphi 0, %s23
    %s24 = sphi 0, %s21
    %s25 = sphi 0, %s24
    %s41 = sphi 0, %s25
    %s45 = sphi 0, %s45
    %s47 = sphi 0, %s45
    %s48 = sphi 0, %s47
    %s62 = sphi 0, %s48
    %s68 = sphi 0, %s70
    %s71 = sphi 0, %s68
    %s72 = sphi 0, %s71
    %s88 = sphi 0, %s72
    %s94 = sphi 0, %s96
    %s97 = sphi 0, %s94
    %s98 = sphi 0, %s97
    %s114 = sphi 0, %s98
    %s120 = sphi 0, %s122
    %s123 = sphi 0, %s120
    %s124 = sphi 0, %s123
    %s140 = sphi 0, %s124
  $region4: #{residual_block_forward.5} parent=0 // loop_header_branch
    %14 = sbr.rel (%p12) target = $region8
  $region5: #{residual_block_forward.5} parent=0 // loop_body
    %s16 = ssub.s32 %s11, 1
    %s17 = ssub.s32 %s11, 2
    %s18 = sadd.s32 %s11, 1
    %s19 = ssub.s32 %s11, %s18
    %p20 = scmp.eq.s32.totalorder %s19, 0
    %s22 = sadd.s32 %s21, 1
    %s23 = scalar_select %p20, %s21, %s22
    %p26 = pneg %p20
    %p27 = scmp.eq.s32.totalorder %s11, 1
    %p28 = por %p26, %p27
    %p29 = scmp.ne.s32.totalorder %s21, %s24
    %p30 = scmp.eq.s32.totalorder %s11, 0
    %p31 = por %p29, %p30
    %p32 = scmp.ne.s32.totalorder %s21, %s24
    %p33 = scmp.eq.s32.totalorder %s16, 1
    %p34 = por %p32, %p33
    %p35 = scmp.ne.s32.totalorder %s24, %s25
    %p36 = scmp.eq.s32.totalorder %s16, 0
    %p37 = por %p35, %p36
    %p38 = scmp.ne.s32.totalorder %s24, %s25
    %p39 = scmp.eq.s32.totalorder %s17, 1
    %p40 = por %p38, %p39
    %p42 = scmp.ne.s32.totalorder %s25, %s41
    %p43 = scmp.eq.s32.totalorder %s17, 0
    %p44 = por %p42, %p43
    %s46 = sadd.s32 %s45, 1
    %p49 = scmp.eq.s32.totalorder %s11, 1
    %p50 = scmp.ne.s32.totalorder %s45, %s47
    %p51 = scmp.eq.s32.totalorder %s11, 0
    %p52 = por %p50, %p51
    %p53 = scmp.ne.s32.totalorder %s45, %s47
    %p54 = scmp.eq.s32.totalorder %s16, 1
    %p55 = por %p53, %p54
    %p56 = scmp.ne.s32.totalorder %s47, %s48
    %p57 = scmp.eq.s32.totalorder %s16, 0
    %p58 = por %p56, %p57
    %p59 = scmp.ne.s32.totalorder %s47, %s48
    %p60 = scmp.eq.s32.totalorder %s17, 1
    %p61 = por %p59, %p60
    %p63 = scmp.ne.s32.totalorder %s48, %s62
    %p64 = scmp.eq.s32.totalorder %s17, 0
    %p65 = por %p63, %p64
    %s66 = ssub.s32 %s11, %s18
    %p67 = scmp.eq.s32.totalorder %s66, 0
    %s69 = sadd.s32 %s68, 1
    %s70 = scalar_select %p67, %s68, %s69
    %p73 = pneg %p67
    %p74 = scmp.eq.s32.totalorder %s11, 1
    %p75 = por %p73, %p74
    %p76 = scmp.ne.s32.totalorder %s68, %s71
    %p77 = scmp.eq.s32.totalorder %s11, 0
    %p78 = por %p76, %p77
    %p79 = scmp.ne.s32.totalorder %s68, %s71
    %p80 = scmp.eq.s32.totalorder %s16, 1
    %p81 = por %p79, %p80
    %p82 = scmp.ne.s32.totalorder %s71, %s72
    %p83 = scmp.eq.s32.totalorder %s16, 0
    %p84 = por %p82, %p83
    %p85 = scmp.ne.s32.totalorder %s71, %s72
    %p86 = scmp.eq.s32.totalorder %s17, 1
    %p87 = por %p85, %p86
    %p89 = scmp.ne.s32.totalorder %s72, %s88
    %p90 = scmp.eq.s32.totalorder %s17, 0
    %p91 = por %p89, %p90
    %s92 = ssub.s32 %s11, %s18
    %p93 = scmp.eq.s32.totalorder %s92, 0
    %s95 = sadd.s32 %s94, 1
    %s96 = scalar_select %p93, %s94, %s95
    %p99 = pneg %p93
    %p100 = scmp.eq.s32.totalorder %s11, 1
    %p101 = por %p99, %p100
    %p102 = scmp.ne.s32.totalorder %s94, %s97
    %p103 = scmp.eq.s32.totalorder %s11, 0
    %p104 = por %p102, %p103
    %p105 = scmp.ne.s32.totalorder %s94, %s97
    %p106 = scmp.eq.s32.totalorder %s16, 1
    %p107 = por %p105, %p106
    %p108 = scmp.ne.s32.totalorder %s97, %s98
    %p109 = scmp.eq.s32.totalorder %s16, 0
    %p110 = por %p108, %p109
    %p111 = scmp.ne.s32.totalorder %s97, %s98
    %p112 = scmp.eq.s32.totalorder %s17, 1
    %p113 = por %p111, %p112
    %p115 = scmp.ne.s32.totalorder %s98, %s114
    %p116 = scmp.eq.s32.totalorder %s17, 0
    %p117 = por %p115, %p116
    %s118 = ssub.s32 %s11, %s18
    %p119 = scmp.eq.s32.totalorder %s118, 0
    %s121 = sadd.s32 %s120, 1
    %s122 = scalar_select %p119, %s120, %s121
    %p125 = pneg %p119
    %p126 = scmp.eq.s32.totalorder %s11, 1
    %p127 = por %p125, %p126
    %p128 = scmp.ne.s32.totalorder %s120, %s123
    %p129 = scmp.eq.s32.totalorder %s11, 0
    %p130 = por %p128, %p129
    %p131 = scmp.ne.s32.totalorder %s120, %s123
    %p132 = scmp.eq.s32.totalorder %s16, 1
    %p133 = por %p131, %p132
    %p134 = scmp.ne.s32.totalorder %s123, %s124
    %p135 = scmp.eq.s32.totalorder %s16, 0
    %p136 = por %p134, %p135
    %p137 = scmp.ne.s32.totalorder %s123, %s124
    %p138 = scmp.eq.s32.totalorder %s17, 1
    %p139 = por %p137, %p138
    %p141 = scmp.ne.s32.totalorder %s124, %s140
    %p142 = scmp.eq.s32.totalorder %s17, 0
    %p143 = por %p141, %p142
    %p144 = scmp.le.s32.totalorder 1, %s11
    %p145 = scmp.lt.s32.totalorder %s11, 3
    %p146 = pnand %p144, %p145
    %p147 = pneg %p146
    // Predicated region
    $region9: #{residual_block_forward.5} parent=5 // pred_check
      _
    $region10: #{residual_block_forward.5} parent=5 // pred_check_branch
      %149 = sbr.rel (%p146) target = $region12
    $region11: #{residual_block_forward.5} parent=5 // pred_region
      %s150 = ssub.s32 %s11, 1
      // Predicated region
      $region13: #{residual_block_forward.5} parent=11 // pred_check
        %p151 = pneg %p58
      $region14: #{residual_block_forward.5} parent=11 // pred_check_branch
        %153 = sbr.rel (%p151) target = $region16
      $region15: #{residual_block_forward.5} parent=11 // pred_region
        _
      $region16: #{residual_block_forward.5} parent=11 // pred_fallthru
        _
    $region12: #{residual_block_forward.5} parent=5 // pred_fallthru
      _
    %p154 = scmp.lt.s32.totalorder %s11, 2
    // Predicated region
    $region17: #{residual_block_forward.5} parent=5 // pred_check
      %p155 = pneg %p154
    $region18: #{residual_block_forward.5} parent=5 // pred_check_branch
      %157 = sbr.rel (%p155) target = $region20
    $region19: #{residual_block_forward.5} parent=5 // pred_region
      // Predicated region
      $region21: #{residual_block_forward.5} parent=19 // pred_check
        %p158 = pneg %p31
      $region22: #{residual_block_forward.5} parent=19 // pred_check_branch
        %160 = sbr.rel (%p158) target = $region24
      $region23: #{residual_block_forward.5} parent=19 // pred_region
        %p161 = scmp.lt.s32.totalorder %s11, 1
        %s162 = scalar_select %p161, %s11, 1
        %s163 = smul.addr %s162, 72
        %s164 = smul.addr %s163, 4
        %s165 = scalar_lea.vmem %s0, %s164
      $region24: #{residual_block_forward.5} parent=19 // pred_fallthru
        _
    $region20: #{residual_block_forward.5} parent=5 // pred_fallthru
      _
    %p166 = scmp.le.s32.totalorder 1, %s11
    %p167 = scmp.lt.s32.totalorder %s11, 3
    %p168 = pnand %p166, %p167
    %p169 = pneg %p168
    // Predicated region
    $region25: #{residual_block_forward.5} parent=5 // pred_check
      _
    $region26: #{residual_block_forward.5} parent=5 // pred_check_branch
      %171 = sbr.rel (%p168) target = $region28
    $region27: #{residual_block_forward.5} parent=5 // pred_region
      %s172 = ssub.s32 %s11, 1
      %p173 = scmp.lt.s32.totalorder %s16, 1
      %s174 = scalar_select %p173, %s16, 1
      %s175 = smul.addr %s174, 72
      %s176 = smul.addr %s175, 4
      %s177 = scalar_lea.vmem %s0, %s176
      %p178 = pneg %p37
      %p179 = pneg %p34
      %p180 = pneg %p58
      %p181 = pneg %p55
      %p182 = pneg %p84
      %p183 = pneg %p81
      %p184 = scmp.lt.s32.totalorder %s16, 1
      %s185 = scalar_select %p184, %s16, 1
      %s186 = smul.addr %s185, 8
      %s187 = smul.addr %s186, 4
      %s188 = scalar_lea.vmem %s2, %s187
      %p189 = pneg %p110
      %p190 = pneg %p107
      %p191 = scmp.lt.s32.totalorder %s16, 1
      %s192 = scalar_select %p191, %s16, 1
      %s193 = scalar_lea.vmem %s3, %s192
      %p194 = pneg %p136
      %p195 = pneg %p133
      %p196 = scmp.lt.s32.totalorder %s16, 1
      %s197 = scalar_select %p196, %s16, 1
      %s198 = scalar_lea.vmem %s4, %s197
      %p199 = scmp.lt.s32.totalorder %s16, 1
      %s200 = scalar_select %p199, %s16, 1
      %s201 = smul.addr %s200, 72
      %s202 = smul.addr %s201, 4
      %s203 = scalar_lea.vmem %s0, %s202
      %p204 = scmp.lt.s32.totalorder %s16, 1
      %s205 = scalar_select %p204, %s16, 1
      %s206 = smul.addr %s205, 8
      %s207 = smul.addr %s206, 4
      %s208 = scalar_lea.vmem %s2, %s207
      %p209 = scmp.lt.s32.totalorder %s16, 1
      %s210 = scalar_select %p209, %s16, 1
      %s211 = scalar_lea.vmem %s3, %s210
      %p212 = scmp.lt.s32.totalorder %s16, 1
      %s213 = scalar_select %p212, %s16, 1
      %s214 = scalar_lea.vmem %s4, %s213
      %v216 = vld [vmem:[%s203] sm:$0xf]
      %v217 = vld [vmem:[%s203 + $0x4] sm:$0x1]
      %v218 = vld [vmem:[%s203 + $0x8] sm:$0xf]
      %v219 = vld [vmem:[%s203 + $0xc] sm:$0x1]
      %v220 = vld [vmem:[%s203 + $0x10] sm:$0xf]
      %v221 = vld [vmem:[%s203 + $0x14] sm:$0x1]
      %v222 = vld [vmem:[%s203 + $0x18] sm:$0xf]
      %v223 = vld [vmem:[%s203 + $0x1c] sm:$0x1]
      %v224 = vld [vmem:[%s203 + $0x20] sm:$0xf]
      %v225 = vld [vmem:[%s203 + $0x24] sm:$0x1]
      %v226 = vld [vmem:[%s203 + $0x28] sm:$0xf]
      %v227 = vld [vmem:[%s203 + $0x2c] sm:$0x1]
      %v228 = vld [vmem:[%s203 + $0x30] sm:$0xf]
      %v229 = vld [vmem:[%s203 + $0x34] sm:$0x1]
      %v230 = vld [vmem:[%s203 + $0x38] sm:$0xf]
      %v231 = vld [vmem:[%s203 + $0x3c] sm:$0x1]
      %v232 = vld [vmem:[%s203 + $0x40] sm:$0xf]
      %v233 = vld [vmem:[%s203 + $0x44] sm:$0x1]
      %v234 = vld [vmem:[%s203 + $0x48] sm:$0xf]
      %v235 = vld [vmem:[%s203 + $0x50] sm:$0xf]
      %v236 = vld [vmem:[%s203 + $0x58] sm:$0xf]
      %v237 = vld [vmem:[%s203 + $0x60] sm:$0xf]
      %v238 = vld [vmem:[%s203 + $0x68] sm:$0xf]
      %v239 = vld [vmem:[%s203 + $0x70] sm:$0xf]
      %v240 = vld [vmem:[%s203 + $0x78] sm:$0xf]
      %v241 = vld [vmem:[%s203 + $0x80] sm:$0xf]
      %v242 = vld [vmem:[%s203 + $0x88] sm:$0xf]
      %v243 = vld [vmem:[%s203 + $0x90] sm:$0xf]
      %v244 = vld [vmem:[%s203 + $0x94] sm:$0x1]
      %v245 = vld [vmem:[%s203 + $0x98] sm:$0xf]
      %v246 = vld [vmem:[%s203 + $0x9c] sm:$0x1]
      %v247 = vld [vmem:[%s203 + $0xa0] sm:$0xf]
      %v248 = vld [vmem:[%s203 + $0xa4] sm:$0x1]
      %v249 = vld [vmem:[%s203 + $0xa8] sm:$0xf]
      %v250 = vld [vmem:[%s203 + $0xac] sm:$0x1]
      %v251 = vld [vmem:[%s203 + $0xb0] sm:$0xf]
      %v252 = vld [vmem:[%s203 + $0xb4] sm:$0x1]
      %v253 = vld [vmem:[%s203 + $0xb8] sm:$0xf]
      %v254 = vld [vmem:[%s203 + $0xbc] sm:$0x1]
      %v255 = vld [vmem:[%s203 + $0xc0] sm:$0xf]
      %v256 = vld [vmem:[%s203 + $0xc4] sm:$0x1]
      %v257 = vld [vmem:[%s203 + $0xc8] sm:$0xf]
      %v258 = vld [vmem:[%s203 + $0xcc] sm:$0x1]
      %v259 = vld [vmem:[%s203 + $0xd8] sm:$0xf]
      %v260 = vld [vmem:[%s203 + $0xe0] sm:$0xf]
      %v261 = vld [vmem:[%s203 + $0xe8] sm:$0xf]
      %v262 = vld [vmem:[%s203 + $0xf0] sm:$0xf]
      %v263 = vld [vmem:[%s203 + $0xf8] sm:$0xf]
      %v264 = vld [vmem:[%s203 + $0x100] sm:$0xf]
      %v265 = vld [vmem:[%s203 + $0x108] sm:$0xf]
      %v266 = vld [vmem:[%s203 + $0x110] sm:$0xf]
      %v267 = vunpack.c.l.bf16 %v216
      %v268 = vunpack.c.l.bf16 %v217
      %v269 = vunpack.c.l.bf16 %v218
      %v270 = vunpack.c.l.bf16 %v219
      %v271 = vunpack.c.l.bf16 %v220
      %v272 = vunpack.c.l.bf16 %v221
      %v273 = vunpack.c.l.bf16 %v222
      %v274 = vunpack.c.l.bf16 %v223
      %v275 = vunpack.c.l.bf16 %v224
      %v276 = vunpack.c.l.bf16 %v225
      %v277 = vunpack.c.l.bf16 %v226
      %v278 = vunpack.c.l.bf16 %v227
      %v279 = vunpack.c.l.bf16 %v228
      %v280 = vunpack.c.l.bf16 %v229
      %v281 = vunpack.c.l.bf16 %v230
      %v282 = vunpack.c.l.bf16 %v231
      %v283 = vunpack.c.l.bf16 %v232
      %v284 = vunpack.c.l.bf16 %v233
      %v285 = vunpack.c.l.bf16 %v234
      %v286 = vunpack.c.l.bf16 %v235
      %v287 = vunpack.c.l.bf16 %v236
      %v288 = vunpack.c.l.bf16 %v237
      %v289 = vunpack.c.l.bf16 %v238
      %v290 = vunpack.c.l.bf16 %v239
      %v291 = vunpack.c.l.bf16 %v240
      %v292 = vunpack.c.l.bf16 %v241
      %v293 = vunpack.c.l.bf16 %v242
      %v294 = vunpack.c.l.bf16 %v243
      %v295 = vunpack.c.l.bf16 %v244
      %v296 = vunpack.c.l.bf16 %v245
      %v297 = vunpack.c.l.bf16 %v246
      %v298 = vunpack.c.l.bf16 %v247
      %v299 = vunpack.c.l.bf16 %v248
      %v300 = vunpack.c.l.bf16 %v249
      %v301 = vunpack.c.l.bf16 %v250
      %v302 = vunpack.c.l.bf16 %v251
      %v303 = vunpack.c.l.bf16 %v252
      %v304 = vunpack.c.l.bf16 %v253
      %v305 = vunpack.c.l.bf16 %v254
      %v306 = vunpack.c.l.bf16 %v255
      %v307 = vunpack.c.l.bf16 %v256
      %v308 = vunpack.c.l.bf16 %v257
      %v309 = vunpack.c.l.bf16 %v258
      %v310 = vunpack.c.l.bf16 %v259
      %v311 = vunpack.c.l.bf16 %v260
      %v312 = vunpack.c.l.bf16 %v261
      %v313 = vunpack.c.l.bf16 %v262
      %v314 = vunpack.c.l.bf16 %v263
      %v315 = vunpack.c.l.bf16 %v264
      %v316 = vunpack.c.l.bf16 %v265
      %v317 = vunpack.c.l.bf16 %v266
      %v318 = vpack.c.bf16 %v269, %v267
      %v319 = vpack.c.bf16 %v273, %v271
      %v320 = vpack.c.bf16 %v277, %v275
      %v321 = vpack.c.bf16 %v281, %v279
      %v322 = vpack.c.bf16 %v286, %v285
      %v323 = vpack.c.bf16 %v288, %v287
      %v324 = vpack.c.bf16 %v290, %v289
      %v325 = vpack.c.bf16 %v292, %v291
      %vm342 = vcmask 1046528
      %v343 = vrot.slane %v267, 1
      %v344 = vrot.slane %v268, 1
      %v345 = vsel %vm342, %v343, %v344
      %v346 = vrot.slane %v269, 1
      %v347 = vrot.slane %v270, 1
      %v348 = vsel %vm342, %v346, %v347
      %v349 = vrot.slane %v271, 1
      %v350 = vrot.slane %v272, 1
      %v351 = vsel %vm342, %v349, %v350
      %v352 = vrot.slane %v273, 1
      %v353 = vrot.slane %v274, 1
      %v354 = vsel %vm342, %v352, %v353
      %v355 = vrot.slane %v275, 1
      %v356 = vrot.slane %v276, 1
      %v357 = vsel %vm342, %v355, %v356
      %v358 = vrot.slane %v277, 1
      %v359 = vrot.slane %v278, 1
      %v360 = vsel %vm342, %v358, %v359
      %v361 = vrot.slane %v279, 1
      %v362 = vrot.slane %v280, 1
      %v363 = vsel %vm342, %v361, %v362
      %v364 = vrot.slane %v281, 1
      %v365 = vrot.slane %v282, 1
      %v366 = vsel %vm342, %v364, %v365
      %v375 = vpack.c.bf16 %v348, %v345
      %v376 = vpack.c.bf16 %v354, %v351
      %v377 = vpack.c.bf16 %v360, %v357
      %v378 = vpack.c.bf16 %v366, %v363
      %v379 = vpack.c.bf16 %v296, %v294
      %v380 = vpack.c.bf16 %v300, %v298
      %v381 = vpack.c.bf16 %v304, %v302
      %v382 = vpack.c.bf16 %v308, %v306
      %v383 = vpack.c.bf16 %v311, %v310
      %v384 = vpack.c.bf16 %v313, %v312
      %v385 = vpack.c.bf16 %v315, %v314
      %v386 = vpack.c.bf16 %v317, %v316
      %v403 = vrot.slane %v294, 1
      %v404 = vrot.slane %v295, 1
      %v405 = vsel %vm342, %v403, %v404
      %v406 = vrot.slane %v296, 1
      %v407 = vrot.slane %v297, 1
      %v408 = vsel %vm342, %v406, %v407
      %v409 = vrot.slane %v298, 1
      %v410 = vrot.slane %v299, 1
      %v411 = vsel %vm342, %v409, %v410
      %v412 = vrot.slane %v300, 1
      %v413 = vrot.slane %v301, 1
      %v414 = vsel %vm342, %v412, %v413
      %v415 = vrot.slane %v302, 1
      %v416 = vrot.slane %v303, 1
      %v417 = vsel %vm342, %v415, %v416
      %v418 = vrot.slane %v304, 1
      %v419 = vrot.slane %v305, 1
      %v420 = vsel %vm342, %v418, %v419
      %v421 = vrot.slane %v306, 1
      %v422 = vrot.slane %v307, 1
      %v423 = vsel %vm342, %v421, %v422
      %v424 = vrot.slane %v308, 1
      %v425 = vrot.slane %v309, 1
      %v426 = vsel %vm342, %v424, %v425
      %v435 = vpack.c.bf16 %v408, %v405
      %v436 = vpack.c.bf16 %v414, %v411
      %v437 = vpack.c.bf16 %v420, %v417
      %v438 = vpack.c.bf16 %v426, %v423
      %v439 = vpack.c.bf16 %v271, %v269
      %v440 = vpack.c.bf16 %v275, %v273
      %v441 = vpack.c.bf16 %v279, %v277
      %v442 = vpack.c.bf16 %v283, %v281
      %v443 = vpack.c.bf16 %v287, %v286
      %v444 = vpack.c.bf16 %v289, %v288
      %v445 = vpack.c.bf16 %v291, %v290
      %v446 = vpack.c.bf16 %v293, %v292
      %v449 = vrot.slane %v283, 1
      %v450 = vrot.slane %v284, 1
      %v451 = vsel %vm342, %v449, %v450
      %v453 = vpack.c.bf16 %v351, %v348
      %v454 = vpack.c.bf16 %v357, %v354
      %v455 = vpack.c.bf16 %v363, %v360
      %v456 = vpack.c.bf16 %v451, %v366
      %v457 = vld [vmem:[%s1] sm:$0xf]
      %v458 = vld [vmem:[%s1 + $0x4] sm:$0xf]
      %v459 = vld [vmem:[%s1 + $0x8] sm:$0xf]
      %v460 = vld [vmem:[%s1 + $0xc] sm:$0xf]
      %v461 = vld [vmem:[%s1 + $0x10] sm:$0xf]
      %v462 = vld [vmem:[%s1 + $0x14] sm:$0xf]
      %v463 = vld [vmem:[%s1 + $0x18] sm:$0xf]
      %v464 = vld [vmem:[%s1 + $0x1c] sm:$0xf]
      %v465 = vld [vmem:[%s1 + $0x20] sm:$0xf]
      %v466 = vld [vmem:[%s1 + $0x24] sm:$0xf]
      %v467 = vld [vmem:[%s1 + $0x28] sm:$0xf]
      %v468 = vld [vmem:[%s1 + $0x2c] sm:$0xf]
      %v469 = vld [vmem:[%s1 + $0x30] sm:$0xf]
      %v470 = vld [vmem:[%s1 + $0x34] sm:$0xf]
      %v471 = vld [vmem:[%s1 + $0x38] sm:$0xf]
      %v472 = vld [vmem:[%s1 + $0x3c] sm:$0xf]
      %v473 = vld [vmem:[%s1 + $0x40] sm:$0xf]
      %v474 = vld [vmem:[%s1 + $0x44] sm:$0xf]
      %v475 = vld [vmem:[%s1 + $0x48] sm:$0xf]
      %v476 = vld [vmem:[%s1 + $0x4c] sm:$0xf]
      %v477 = vld [vmem:[%s1 + $0x50] sm:$0xf]
      %v478 = vld [vmem:[%s1 + $0x54] sm:$0xf]
      %v479 = vld [vmem:[%s1 + $0x58] sm:$0xf]
      %v480 = vld [vmem:[%s1 + $0x5c] sm:$0xf]
      %v481 = vld [vmem:[%s1 + $0x60] sm:$0xf]
      %v482 = vld [vmem:[%s1 + $0x64] sm:$0xf]
      %v483 = vld [vmem:[%s1 + $0x68] sm:$0xf]
      %v484 = vld [vmem:[%s1 + $0x6c] sm:$0xf]
      %v485 = vld [vmem:[%s1 + $0x70] sm:$0xf]
      %v486 = vld [vmem:[%s1 + $0x74] sm:$0xf]
      %v487 = vld [vmem:[%s1 + $0x78] sm:$0xf]
      %v488 = vld [vmem:[%s1 + $0x7c] sm:$0xf]
      %v489 = vld [vmem:[%s1 + $0x80] sm:$0xf]
      %v490 = vld [vmem:[%s1 + $0x84] sm:$0xf]
      %v491 = vld [vmem:[%s1 + $0x88] sm:$0xf]
      %v492 = vld [vmem:[%s1 + $0x8c] sm:$0xf]
      %v493 = vld [vmem:[%s1 + $0x90] sm:$0xf]
      %v494 = vld [vmem:[%s1 + $0x94] sm:$0xf]
      %v495 = vld [vmem:[%s1 + $0x98] sm:$0xf]
      %v496 = vld [vmem:[%s1 + $0x9c] sm:$0xf]
      %v497 = vld [vmem:[%s1 + $0xa0] sm:$0xf]
      %v498 = vld [vmem:[%s1 + $0xa4] sm:$0xf]
      %v499 = vld [vmem:[%s1 + $0xa8] sm:$0xf]
      %v500 = vld [vmem:[%s1 + $0xac] sm:$0xf]
      %v501 = vld [vmem:[%s1 + $0xb0] sm:$0xf]
      %v502 = vld [vmem:[%s1 + $0xb4] sm:$0xf]
      %v503 = vld [vmem:[%s1 + $0xb8] sm:$0xf]
      %v504 = vld [vmem:[%s1 + $0xbc] sm:$0xf]
      %v505 = vld [vmem:[%s1 + $0xc0] sm:$0xf]
      %v506 = vld [vmem:[%s1 + $0xc4] sm:$0xf]
      %v507 = vld [vmem:[%s1 + $0xc8] sm:$0xf]
      %v508 = vld [vmem:[%s1 + $0xcc] sm:$0xf]
      %v509 = vld [vmem:[%s1 + $0xd0] sm:$0xf]
      %v510 = vld [vmem:[%s1 + $0xd4] sm:$0xf]
      %v511 = vld [vmem:[%s1 + $0xd8] sm:$0xf]
      %v512 = vld [vmem:[%s1 + $0xdc] sm:$0xf]
      %v513 = vld [vmem:[%s1 + $0xe0] sm:$0xf]
      %v514 = vld [vmem:[%s1 + $0xe4] sm:$0xf]
      %v515 = vld [vmem:[%s1 + $0xe8] sm:$0xf]
      %v516 = vld [vmem:[%s1 + $0xec] sm:$0xf]
      %v517 = vld [vmem:[%s1 + $0xf0] sm:$0xf]
      %v518 = vld [vmem:[%s1 + $0xf4] sm:$0xf]
      %v519 = vld [vmem:[%s1 + $0xf8] sm:$0xf]
      %v520 = vld [vmem:[%s1 + $0xfc] sm:$0xf]
      %v521 = vld [vmem:[%s1 + $0x100] sm:$0xf]
      %v522 = vld [vmem:[%s1 + $0x104] sm:$0xf]
      %v523 = vld [vmem:[%s1 + $0x108] sm:$0xf]
      %v524 = vld [vmem:[%s1 + $0x10c] sm:$0xf]
      %v525 = vld [vmem:[%s1 + $0x110] sm:$0xf]
      %v526 = vld [vmem:[%s1 + $0x114] sm:$0xf]
      %v527 = vld [vmem:[%s1 + $0x118] sm:$0xf]
      %v528 = vld [vmem:[%s1 + $0x11c] sm:$0xf]
      %v529 = vld [vmem:[%s1 + $0x120] sm:$0xf]
      %v530 = vld [vmem:[%s1 + $0x124] sm:$0xf]
      %v531 = vld [vmem:[%s1 + $0x128] sm:$0xf]
      %v532 = vld [vmem:[%s1 + $0x12c] sm:$0xf]
      %v533 = vld [vmem:[%s1 + $0x130] sm:$0xf]
      %v534 = vld [vmem:[%s1 + $0x134] sm:$0xf]
      %v535 = vld [vmem:[%s1 + $0x138] sm:$0xf]
      %v536 = vld [vmem:[%s1 + $0x13c] sm:$0xf]
      %v537 = vld [vmem:[%s1 + $0x140] sm:$0xf]
      %v538 = vld [vmem:[%s1 + $0x144] sm:$0xf]
      %v539 = vld [vmem:[%s1 + $0x148] sm:$0xf]
      %v540 = vld [vmem:[%s1 + $0x14c] sm:$0xf]
      %v541 = vld [vmem:[%s1 + $0x150] sm:$0xf]
      %v542 = vld [vmem:[%s1 + $0x154] sm:$0xf]
      %v543 = vld [vmem:[%s1 + $0x158] sm:$0xf]
      %v544 = vld [vmem:[%s1 + $0x15c] sm:$0xf]
      %v545 = vld [vmem:[%s1 + $0x160] sm:$0xf]
      %v546 = vld [vmem:[%s1 + $0x164] sm:$0xf]
      %v547 = vld [vmem:[%s1 + $0x168] sm:$0xf]
      %v548 = vld [vmem:[%s1 + $0x16c] sm:$0xf]
      %v549 = vld [vmem:[%s1 + $0x170] sm:$0xf]
      %v550 = vld [vmem:[%s1 + $0x174] sm:$0xf]
      %v551 = vld [vmem:[%s1 + $0x178] sm:$0xf]
      %v552 = vld [vmem:[%s1 + $0x17c] sm:$0xf]
      %v553 = vld [vmem:[%s1 + $0x180] sm:$0xf]
      %v554 = vld [vmem:[%s1 + $0x184] sm:$0xf]
      %v555 = vld [vmem:[%s1 + $0x188] sm:$0xf]
      %v556 = vld [vmem:[%s1 + $0x18c] sm:$0xf]
      %v557 = vld [vmem:[%s1 + $0x190] sm:$0xf]
      %v558 = vld [vmem:[%s1 + $0x194] sm:$0xf]
      %v559 = vld [vmem:[%s1 + $0x198] sm:$0xf]
      %v560 = vld [vmem:[%s1 + $0x19c] sm:$0xf]
      %v561 = vld [vmem:[%s1 + $0x1a0] sm:$0xf]
      %v562 = vld [vmem:[%s1 + $0x1a4] sm:$0xf]
      %v563 = vld [vmem:[%s1 + $0x1a8] sm:$0xf]
      %v564 = vld [vmem:[%s1 + $0x1ac] sm:$0xf]
      %v565 = vld [vmem:[%s1 + $0x1b0] sm:$0xf]
      %v566 = vld [vmem:[%s1 + $0x1b4] sm:$0xf]
      %v567 = vld [vmem:[%s1 + $0x1b8] sm:$0xf]
      %v568 = vld [vmem:[%s1 + $0x1bc] sm:$0xf]
      %v569 = vld [vmem:[%s1 + $0x1c0] sm:$0xf]
      %v570 = vld [vmem:[%s1 + $0x1c4] sm:$0xf]
      %v571 = vld [vmem:[%s1 + $0x1c8] sm:$0xf]
      %v572 = vld [vmem:[%s1 + $0x1cc] sm:$0xf]
      %v573 = vld [vmem:[%s1 + $0x1d0] sm:$0xf]
      %v574 = vld [vmem:[%s1 + $0x1d4] sm:$0xf]
      %v575 = vld [vmem:[%s1 + $0x1d8] sm:$0xf]
      %v576 = vld [vmem:[%s1 + $0x1dc] sm:$0xf]
      %v577 = vld [vmem:[%s1 + $0x1e0] sm:$0xf]
      %v578 = vld [vmem:[%s1 + $0x1e4] sm:$0xf]
      %v579 = vld [vmem:[%s1 + $0x1e8] sm:$0xf]
      %v580 = vld [vmem:[%s1 + $0x1ec] sm:$0xf]
      %v581 = vld [vmem:[%s1 + $0x1f0] sm:$0xf]
      %v582 = vld [vmem:[%s1 + $0x1f4] sm:$0xf]
      %v583 = vld [vmem:[%s1 + $0x1f8] sm:$0xf]
      %v584 = vld [vmem:[%s1 + $0x1fc] sm:$0xf]
      %v585 = vld [vmem:[%s1 + $0x200] sm:$0xf]
      %v586 = vld [vmem:[%s1 + $0x204] sm:$0xf]
      %v587 = vld [vmem:[%s1 + $0x208] sm:$0xf]
      %v588 = vld [vmem:[%s1 + $0x20c] sm:$0xf]
      %v589 = vld [vmem:[%s1 + $0x210] sm:$0xf]
      %v590 = vld [vmem:[%s1 + $0x214] sm:$0xf]
      %v591 = vld [vmem:[%s1 + $0x218] sm:$0xf]
      %v592 = vld [vmem:[%s1 + $0x21c] sm:$0xf]
      %v593 = vld [vmem:[%s1 + $0x220] sm:$0xf]
      %v594 = vld [vmem:[%s1 + $0x224] sm:$0xf]
      %v595 = vld [vmem:[%s1 + $0x228] sm:$0xf]
      %v596 = vld [vmem:[%s1 + $0x22c] sm:$0xf]
      %v597 = vld [vmem:[%s1 + $0x230] sm:$0xf]
      %v598 = vld [vmem:[%s1 + $0x234] sm:$0xf]
      %v599 = vld [vmem:[%s1 + $0x238] sm:$0xf]
      %v600 = vld [vmem:[%s1 + $0x23c] sm:$0xf]
      %v745 = vunpack.c.l.b16 %v457
      %v746 = vunpack.c.l.b16 %v458
      %v747 = vunpack.c.l.b16 %v459
      %v748 = vunpack.c.l.b16 %v460
      %v749 = vunpack.c.l.b16 %v461
      %v750 = vunpack.c.l.b16 %v462
      %v751 = vunpack.c.l.b16 %v463
      %v752 = vunpack.c.l.b16 %v464
      %v753 = vunpack.c.l.b16 %v465
      %v754 = vunpack.c.l.b16 %v466
      %v755 = vunpack.c.l.b16 %v467
      %v756 = vunpack.c.l.b16 %v468
      %v757 = vunpack.c.l.b16 %v469
      %v758 = vunpack.c.l.b16 %v470
      %v759 = vunpack.c.l.b16 %v471
      %v760 = vunpack.c.l.b16 %v472
      %v761 = vunpack.c.l.b16 %v473
      %v762 = vunpack.c.l.b16 %v474
      %v763 = vunpack.c.l.b16 %v475
      %v764 = vunpack.c.l.b16 %v476
      %v765 = vunpack.c.l.b16 %v477
      %v766 = vunpack.c.l.b16 %v478
      %v767 = vunpack.c.l.b16 %v479
      %v768 = vunpack.c.l.b16 %v480
      %v769 = vunpack.c.l.b16 %v481
      %v770 = vunpack.c.l.b16 %v482
      %v771 = vunpack.c.l.b16 %v483
      %v772 = vunpack.c.l.b16 %v484
      %v773 = vunpack.c.l.b16 %v485
      %v774 = vunpack.c.l.b16 %v486
      %v775 = vunpack.c.l.b16 %v487
      %v776 = vunpack.c.l.b16 %v488
      %v777 = vunpack.c.l.b16 %v489
      %v778 = vunpack.c.l.b16 %v490
      %v779 = vunpack.c.l.b16 %v491
      %v780 = vunpack.c.l.b16 %v492
      %v781 = vunpack.c.l.b16 %v493
      %v782 = vunpack.c.l.b16 %v494
      %v783 = vunpack.c.l.b16 %v495
      %v784 = vunpack.c.l.b16 %v496
      %v785 = vunpack.c.l.b16 %v497
      %v786 = vunpack.c.l.b16 %v498
      %v787 = vunpack.c.l.b16 %v499
      %v788 = vunpack.c.l.b16 %v500
      %v789 = vunpack.c.l.b16 %v501
      %v790 = vunpack.c.l.b16 %v502
      %v791 = vunpack.c.l.b16 %v503
      %v792 = vunpack.c.l.b16 %v504
      %v793 = vunpack.c.l.b16 %v505
      %v794 = vunpack.c.l.b16 %v506
      %v795 = vunpack.c.l.b16 %v507
      %v796 = vunpack.c.l.b16 %v508
      %v797 = vunpack.c.l.b16 %v509
      %v798 = vunpack.c.l.b16 %v510
      %v799 = vunpack.c.l.b16 %v511
      %v800 = vunpack.c.l.b16 %v512
      %v801 = vunpack.c.l.b16 %v513
      %v802 = vunpack.c.l.b16 %v514
      %v803 = vunpack.c.l.b16 %v515
      %v804 = vunpack.c.l.b16 %v516
      %v805 = vunpack.c.l.b16 %v517
      %v806 = vunpack.c.l.b16 %v518
      %v807 = vunpack.c.l.b16 %v519
      %v808 = vunpack.c.l.b16 %v520
      %v809 = vunpack.c.l.b16 %v521
      %v810 = vunpack.c.l.b16 %v522
      %v811 = vunpack.c.l.b16 %v523
      %v812 = vunpack.c.l.b16 %v524
      %v813 = vunpack.c.l.b16 %v525
      %v814 = vunpack.c.l.b16 %v526
      %v815 = vunpack.c.l.b16 %v527
      %v816 = vunpack.c.l.b16 %v528
      %v817 = vunpack.c.l.b16 %v529
      %v818 = vunpack.c.l.b16 %v530
      %v819 = vunpack.c.l.b16 %v531
      %v820 = vunpack.c.l.b16 %v532
      %v821 = vunpack.c.l.b16 %v533
      %v822 = vunpack.c.l.b16 %v534
      %v823 = vunpack.c.l.b16 %v535
      %v824 = vunpack.c.l.b16 %v536
      %v825 = vunpack.c.l.b16 %v537
      %v826 = vunpack.c.l.b16 %v538
      %v827 = vunpack.c.l.b16 %v539
      %v828 = vunpack.c.l.b16 %v540
      %v829 = vunpack.c.l.b16 %v541
      %v830 = vunpack.c.l.b16 %v542
      %v831 = vunpack.c.l.b16 %v543
      %v832 = vunpack.c.l.b16 %v544
      %v833 = vunpack.c.l.b16 %v545
      %v834 = vunpack.c.l.b16 %v546
      %v835 = vunpack.c.l.b16 %v547
      %v836 = vunpack.c.l.b16 %v548
      %v837 = vunpack.c.l.b16 %v549
      %v838 = vunpack.c.l.b16 %v550
      %v839 = vunpack.c.l.b16 %v551
      %v840 = vunpack.c.l.b16 %v552
      %v841 = vunpack.c.l.b16 %v553
      %v842 = vunpack.c.l.b16 %v554
      %v843 = vunpack.c.l.b16 %v555
      %v844 = vunpack.c.l.b16 %v556
      %v845 = vunpack.c.l.b16 %v557
      %v846 = vunpack.c.l.b16 %v558
      %v847 = vunpack.c.l.b16 %v559
      %v848 = vunpack.c.l.b16 %v560
      %v849 = vunpack.c.l.b16 %v561
      %v850 = vunpack.c.l.b16 %v562
      %v851 = vunpack.c.l.b16 %v563
      %v852 = vunpack.c.l.b16 %v564
      %v853 = vunpack.c.l.b16 %v565
      %v854 = vunpack.c.l.b16 %v566
      %v855 = vunpack.c.l.b16 %v567
      %v856 = vunpack.c.l.b16 %v568
      %v857 = vunpack.c.l.b16 %v569
      %v858 = vunpack.c.l.b16 %v570
      %v859 = vunpack.c.l.b16 %v571
      %v860 = vunpack.c.l.b16 %v572
      %v861 = vunpack.c.l.b16 %v573
      %v862 = vunpack.c.l.b16 %v574
      %v863 = vunpack.c.l.b16 %v575
      %v864 = vunpack.c.l.b16 %v576
      %v865 = vunpack.c.l.b16 %v577
      %v866 = vunpack.c.l.b16 %v578
      %v867 = vunpack.c.l.b16 %v579
      %v868 = vunpack.c.l.b16 %v580
      %v869 = vunpack.c.l.b16 %v581
      %v870 = vunpack.c.l.b16 %v582
      %v871 = vunpack.c.l.b16 %v583
      %v872 = vunpack.c.l.b16 %v584
      %v873 = vunpack.c.l.b16 %v585
      %v874 = vunpack.c.l.b16 %v586
      %v875 = vunpack.c.l.b16 %v587
      %v876 = vunpack.c.l.b16 %v588
      %v877 = vunpack.c.l.b16 %v589
      %v878 = vunpack.c.l.b16 %v590
      %v879 = vunpack.c.l.b16 %v591
      %v880 = vunpack.c.l.b16 %v592
      %v881 = vunpack.c.l.b16 %v593
      %v882 = vunpack.c.l.b16 %v594
      %v883 = vunpack.c.l.b16 %v595
      %v884 = vunpack.c.l.b16 %v596
      %v885 = vunpack.c.l.b16 %v597
      %v886 = vunpack.c.l.b16 %v598
      %v887 = vunpack.c.l.b16 %v599
      %v888 = vunpack.c.l.b16 %v600
      %v889 = vpack.c.b16 %v746, %v745
      %v890 = vpack.c.b16 %v748, %v747
      %v891 = vpack.c.b16 %v750, %v749
      %v892 = vpack.c.b16 %v752, %v751
      %v893 = vpack.c.b16 %v754, %v753
      %v894 = vpack.c.b16 %v756, %v755
      %v895 = vpack.c.b16 %v758, %v757
      %v896 = vpack.c.b16 %v760, %v759
      %v897 = vpack.c.b16 %v762, %v761
      %v898 = vpack.c.b16 %v764, %v763
      %v899 = vpack.c.b16 %v766, %v765
      %v900 = vpack.c.b16 %v768, %v767
      %v901 = vpack.c.b16 %v770, %v769
      %v902 = vpack.c.b16 %v772, %v771
      %v903 = vpack.c.b16 %v774, %v773
      %v904 = vpack.c.b16 %v776, %v775
      %v905 = vpack.c.b16 %v778, %v777
      %v906 = vpack.c.b16 %v780, %v779
      %v907 = vpack.c.b16 %v782, %v781
      %v908 = vpack.c.b16 %v784, %v783
      %v909 = vpack.c.b16 %v786, %v785
      %v910 = vpack.c.b16 %v788, %v787
      %v911 = vpack.c.b16 %v790, %v789
      %v912 = vpack.c.b16 %v792, %v791
      %v913 = vpack.c.b16 %v794, %v793
      %v914 = vpack.c.b16 %v796, %v795
      %v915 = vpack.c.b16 %v798, %v797
      %v916 = vpack.c.b16 %v800, %v799
      %v917 = vpack.c.b16 %v802, %v801
      %v918 = vpack.c.b16 %v804, %v803
      %v919 = vpack.c.b16 %v806, %v805
      %v920 = vpack.c.b16 %v808, %v807
      %v921 = vpack.c.b16 %v810, %v809
      %v922 = vpack.c.b16 %v812, %v811
      %v923 = vpack.c.b16 %v814, %v813
      %v924 = vpack.c.b16 %v816, %v815
      %v925 = vpack.c.b16 %v818, %v817
      %v926 = vpack.c.b16 %v820, %v819
      %v927 = vpack.c.b16 %v822, %v821
      %v928 = vpack.c.b16 %v824, %v823
      %v929 = vpack.c.b16 %v826, %v825
      %v930 = vpack.c.b16 %v828, %v827
      %v931 = vpack.c.b16 %v830, %v829
      %v932 = vpack.c.b16 %v832, %v831
      %v933 = vpack.c.b16 %v834, %v833
      %v934 = vpack.c.b16 %v836, %v835
      %v935 = vpack.c.b16 %v838, %v837
      %v936 = vpack.c.b16 %v840, %v839
      %v937 = vpack.c.b16 %v842, %v841
      %v938 = vpack.c.b16 %v844, %v843
      %v939 = vpack.c.b16 %v846, %v845
      %v940 = vpack.c.b16 %v848, %v847
      %v941 = vpack.c.b16 %v850, %v849
      %v942 = vpack.c.b16 %v852, %v851
      %v943 = vpack.c.b16 %v854, %v853
      %v944 = vpack.c.b16 %v856, %v855
      %v945 = vpack.c.b16 %v858, %v857
      %v946 = vpack.c.b16 %v860, %v859
      %v947 = vpack.c.b16 %v862, %v861
      %v948 = vpack.c.b16 %v864, %v863
      %v949 = vpack.c.b16 %v866, %v865
      %v950 = vpack.c.b16 %v868, %v867
      %v951 = vpack.c.b16 %v870, %v869
      %v952 = vpack.c.b16 %v872, %v871
      %v953 = vpack.c.b16 %v874, %v873
      %v954 = vpack.c.b16 %v876, %v875
      %v955 = vpack.c.b16 %v878, %v877
      %v956 = vpack.c.b16 %v880, %v879
      %v957 = vpack.c.b16 %v882, %v881
      %v958 = vpack.c.b16 %v884, %v883
      %v959 = vpack.c.b16 %v886, %v885
      %v960 = vpack.c.b16 %v888, %v887
      %1033 = vmatprep.subr.bf16.mxu0 0
      %1034 = vmatpush1.bf16.msra.mxu0 %v889
      %1035 = vmatprep.subr.bf16.mxu0 0
      %1036 = vmatpush1.bf16.msra.mxu0 %v890
      %1037 = vmatprep.subr.bf16.mxu0 0
      %1038 = vmatpush1.bf16.msra.mxu0 %v891
      %1039 = vmatprep.subr.bf16.mxu0 0
      %1040 = vmatpush1.bf16.msra.mxu0 %v892
      %1041 = vmatprep.subr.bf16.mxu0 0
      %1042 = vmatpush1.bf16.msra.mxu0 %v893
      %1043 = vmatprep.subr.bf16.mxu0 0
      %1044 = vmatpush1.bf16.msra.mxu0 %v894
      %1045 = vmatprep.subr.bf16.mxu0 0
      %1046 = vmatpush1.bf16.msra.mxu0 %v895
      %1047 = vmatprep.subr.bf16.mxu0 0
      %1048 = vmatpush1.bf16.msra.mxu0 %v896
      %1049 = vmatprep.subr.bf16.mxu0 0
      %1050 = vmatpush1.bf16.msra.mxu0 %v897
      %1051 = vmatprep.subr.bf16.mxu0 0
      %1052 = vmatpush1.bf16.msra.mxu0 %v898
      %1053 = vmatprep.subr.bf16.mxu0 0
      %1054 = vmatpush1.bf16.msra.mxu0 %v899
      %1055 = vmatprep.subr.bf16.mxu0 0
      %1056 = vmatpush1.bf16.msra.mxu0 %v900
      %1057 = vmatprep.subr.bf16.mxu0 0
      %1058 = vmatpush1.bf16.msra.mxu0 %v901
      %1059 = vmatprep.subr.bf16.mxu0 0
      %1060 = vmatpush1.bf16.msra.mxu0 %v902
      %1061 = vmatprep.subr.bf16.mxu0 0
      %1062 = vmatpush1.bf16.msra.mxu0 %v903
      %1063 = vmatprep.subr.bf16.mxu0 0
      %1064 = vmatpush1.bf16.msra.mxu0 %v904
      %1065 = vmatprep.mubr.bf16.mxu0 %v322
      %1066 = vmatmul.mubr.bf16.gmra.mrb[0].mxu0 %v318
      %v1067 = vpop.f32.mrb[0].mxu0
      %v1068 = vadd.f32 0.0, %v1067
      %v1069 = vpop.f32.mrb[0].mxu0
      %v1070 = vpop.f32.mrb[0].mxu0
      %v1071 = vadd.f32 0.0, %v1070
      %v1072 = vpop.f32.mrb[0].mxu0
      %1073 = vmatprep.mubr.bf16.mxu0 %v323
      %1074 = vmatmul.mubr.bf16.gmra.mrb[0].mxu0 %v319
      %v1075 = vpop.f32.mrb[0].mxu0
      %v1076 = vadd.f32 0.0, %v1075
      %v1077 = vpop.f32.mrb[0].mxu0
      %v1078 = vpop.f32.mrb[0].mxu0
      %v1079 = vadd.f32 0.0, %v1078
      %v1080 = vpop.f32.mrb[0].mxu0
      %1081 = vmatprep.mubr.bf16.mxu0 %v324
      %1082 = vmatmul.mubr.bf16.gmra.mrb[0].mxu0 %v320
      %v1083 = vpop.f32.mrb[0].mxu0
      %v1084 = vadd.f32 0.0, %v1083
      %v1085 = vpop.f32.mrb[0].mxu0
      %v1086 = vpop.f32.mrb[0].mxu0
      %v1087 = vadd.f32 0.0, %v1086
      %v1088 = vpop.f32.mrb[0].mxu0
      %1089 = vmatprep.mubr.bf16.mxu0 %v325
      %1090 = vmatmul.mubr.bf16.gmra.mrb[0].mxu0 %v321
      %v1091 = vpop.f32.mrb[0].mxu0
      %v1092 = vadd.f32 0.0, %v1091
      %v1093 = vpop.f32.mrb[0].mxu0
      %v1094 = vpop.f32.mrb[0].mxu0
      %v1095 = vadd.f32 0.0, %v1094
      %v1096 = vpop.f32.mrb[0].mxu0
      %1097 = vdwg.mxu0
      %1098 = vmatprep.subr.bf16.mxu0 0
      %1099 = vmatpush1.bf16.msra.mxu0 %v905
      %1100 = vmatprep.subr.bf16.mxu0 0
      %1101 = vmatpush1.bf16.msra.mxu0 %v906
      %1102 = vmatprep.subr.bf16.mxu0 0
      %1103 = vmatpush1.bf16.msra.mxu0 %v907
      %1104 = vmatprep.subr.bf16.mxu0 0
      %1105 = vmatpush1.bf16.msra.mxu0 %v908
      %1106 = vmatprep.subr.bf16.mxu0 0
      %1107 = vmatpush1.bf16.msra.mxu0 %v909
      %1108 = vmatprep.subr.bf16.mxu0 0
      %1109 = vmatpush1.bf16.msra.mxu0 %v910
      %1110 = vmatprep.subr.bf16.mxu0 0
      %1111 = vmatpush1.bf16.msra.mxu0 %v911
      %1112 = vmatprep.subr.bf16.mxu0 0
      %1113 = vmatpush1.bf16.msra.mxu0 %v912
      %1114 = vmatprep.subr.bf16.mxu0 0
      %1115 = vmatpush1.bf16.msra.mxu0 %v913
      %1116 = vmatprep.subr.bf16.mxu0 0
      %1117 = vmatpush1.bf16.msra.mxu0 %v914
      %1118 = vmatprep.subr.bf16.mxu0 0
      %1119 = vmatpush1.bf16.msra.mxu0 %v915
      %1120 = vmatprep.subr.bf16.mxu0 0
      %1121 = vmatpush1.bf16.msra.mxu0 %v916
      %1122 = vmatprep.subr.bf16.mxu0 0
      %1123 = vmatpush1.bf16.msra.mxu0 %v917
      %1124 = vmatprep.subr.bf16.mxu0 0
      %1125 = vmatpush1.bf16.msra.mxu0 %v918
      %1126 = vmatprep.subr.bf16.mxu0 0
      %1127 = vmatpush1.bf16.msra.mxu0 %v919
      %1128 = vmatprep.subr.bf16.mxu0 0
      %1129 = vmatpush1.bf16.msra.mxu0 %v920
      %1130 = vmatprep.mubr.bf16.mxu0 %v379
      %1131 = vmatmul.mubr.bf16.gmra.mrb[0].mxu0 %v375
      %v1132 = vpop.f32.mrb[0].mxu0
      %v1133 = vadd.f32 %v1068, %v1132
      %v1134 = vpop.f32.mrb[0].mxu0
      %v1135 = vpop.f32.mrb[0].mxu0
      %v1136 = vadd.f32 %v1071, %v1135
      %v1137 = vpop.f32.mrb[0].mxu0
      %1138 = vmatprep.mubr.bf16.mxu0 %v380
      %1139 = vmatmul.mubr.bf16.gmra.mrb[0].mxu0 %v376
      %v1140 = vpop.f32.mrb[0].mxu0
      %v1141 = vadd.f32 %v1076, %v1140
      %v1142 = vpop.f32.mrb[0].mxu0
      %v1143 = vpop.f32.mrb[0].mxu0
      %v1144 = vadd.f32 %v1079, %v1143
      %v1145 = vpop.f32.mrb[0].mxu0
      %1146 = vmatprep.mubr.bf16.mxu0 %v381
      %1147 = vmatmul.mubr.bf16.gmra.mrb[0].mxu0 %v377
      %v1148 = vpop.f32.mrb[0].mxu0
      %v1149 = vadd.f32 %v1084, %v1148
      %v1150 = vpop.f32.mrb[0].mxu0
      %v1151 = vpop.f32.mrb[0].mxu0
      %v1152 = vadd.f32 %v1087, %v1151
      %v1153 = vpop.f32.mrb[0].mxu0
      %1154 = vmatprep.mubr.bf16.mxu0 %v382
      %1155 = vmatmul.mubr.bf16.gmra.mrb[0].mxu0 %v378
      %v1156 = vpop.f32.mrb[0].mxu0
      %v1157 = vadd.f32 %v1092, %v1156
      %v1158 = vpop.f32.mrb[0].mxu0
      %v1159 = vpop.f32.mrb[0].mxu0
      %v1160 = vadd.f32 %v1095, %v1159
      %v1161 = vpop.f32.mrb[0].mxu0
      %1162 = vdwg.mxu0
      %1163 = vmatprep.subr.bf16.mxu0 0
      %1164 = vmatpush1.bf16.msra.mxu0 %v921
      %1165 = vmatprep.subr.bf16.mxu0 0
      %1166 = vmatpush1.bf16.msra.mxu0 %v922
      %1167 = vmatprep.subr.bf16.mxu0 0
      %1168 = vmatpush1.bf16.msra.mxu0 %v923
      %1169 = vmatprep.subr.bf16.mxu0 0
      %1170 = vmatpush1.bf16.msra.mxu0 %v924
      %1171 = vmatprep.subr.bf16.mxu0 0
      %1172 = vmatpush1.bf16.msra.mxu0 %v925
      %1173 = vmatprep.subr.bf16.mxu0 0
      %1174 = vmatpush1.bf16.msra.mxu0 %v926
      %1175 = vmatprep.subr.bf16.mxu0 0
      %1176 = vmatpush1.bf16.msra.mxu0 %v927
      %1177 = vmatprep.subr.bf16.mxu0 0
      %1178 = vmatpush1.bf16.msra.mxu0 %v928
      %1179 = vmatprep.subr.bf16.mxu0 0
      %1180 = vmatpush1.bf16.msra.mxu0 %v929
      %1181 = vmatprep.subr.bf16.mxu0 0
      %1182 = vmatpush1.bf16.msra.mxu0 %v930
      %1183 = vmatprep.subr.bf16.mxu0 0
      %1184 = vmatpush1.bf16.msra.mxu0 %v931
      %1185 = vmatprep.subr.bf16.mxu0 0
      %1186 = vmatpush1.bf16.msra.mxu0 %v932
      %1187 = vmatprep.subr.bf16.mxu0 0
      %1188 = vmatpush1.bf16.msra.mxu0 %v933
      %1189 = vmatprep.subr.bf16.mxu0 0
      %1190 = vmatpush1.bf16.msra.mxu0 %v934
      %1191 = vmatprep.subr.bf16.mxu0 0
      %1192 = vmatpush1.bf16.msra.mxu0 %v935
      %1193 = vmatprep.subr.bf16.mxu0 0
      %1194 = vmatpush1.bf16.msra.mxu0 %v936
      %1195 = vmatprep.mubr.bf16.mxu0 %v435
      %1196 = vmatmul.mubr.bf16.gmra.mrb[0].mxu0 %v383
      %v1197 = vpop.f32.mrb[0].mxu0
      %v1198 = vadd.f32 %v1133, %v1197
      %v1199 = vpop.f32.mrb[0].mxu0
      %v1200 = vpop.f32.mrb[0].mxu0
      %v1201 = vadd.f32 %v1136, %v1200
      %v1202 = vpop.f32.mrb[0].mxu0
      %1203 = vmatprep.mubr.bf16.mxu0 %v436
      %1204 = vmatmul.mubr.bf16.gmra.mrb[0].mxu0 %v384
      %v1205 = vpop.f32.mrb[0].mxu0
      %v1206 = vadd.f32 %v1141, %v1205
      %v1207 = vpop.f32.mrb[0].mxu0
      %v1208 = vpop.f32.mrb[0].mxu0
      %v1209 = vadd.f32 %v1144, %v1208
      %v1210 = vpop.f32.mrb[0].mxu0
      %1211 = vmatprep.mubr.bf16.mxu0 %v437
      %1212 = vmatmul.mubr.bf16.gmra.mrb[0].mxu0 %v385
      %v1213 = vpop.f32.mrb[0].mxu0
      %v1214 = vadd.f32 %v1149, %v1213
      %v1215 = vpop.f32.mrb[0].mxu0
      %v1216 = vpop.f32.mrb[0].mxu0
      %v1217 = vadd.f32 %v1152, %v1216
      %v1218 = vpop.f32.mrb[0].mxu0
      %1219 = vmatprep.mubr.bf16.mxu0 %v438
      %1220 = vmatmul.mubr.bf16.gmra.mrb[0].mxu0 %v386
      %v1221 = vpop.f32.mrb[0].mxu0
      %v1222 = vadd.f32 %v1157, %v1221
      %v1223 = vpop.f32.mrb[0].mxu0
      %v1224 = vpop.f32.mrb[0].mxu0
      %v1225 = vadd.f32 %v1160, %v1224
      %v1226 = vpop.f32.mrb[0].mxu0
      %1227 = vdwg.mxu0
      %1228 = vmatprep.subr.bf16.mxu0 0
      %1229 = vmatpush1.bf16.msra.mxu0 %v937
      %1230 = vmatprep.subr.bf16.mxu0 0
      %1231 = vmatpush1.bf16.msra.mxu0 %v938
      %1232 = vmatprep.subr.bf16.mxu0 0
      %1233 = vmatpush1.bf16.msra.mxu0 %v939
      %1234 = vmatprep.subr.bf16.mxu0 0
      %1235 = vmatpush1.bf16.msra.mxu0 %v940
      %1236 = vmatprep.subr.bf16.mxu0 0
      %1237 = vmatpush1.bf16.msra.mxu0 %v941
      %1238 = vmatprep.subr.bf16.mxu0 0
      %1239 = vmatpush1.bf16.msra.mxu0 %v942
      %1240 = vmatprep.subr.bf16.mxu0 0
      %1241 = vmatpush1.bf16.msra.mxu0 %v943
      %1242 = vmatprep.subr.bf16.mxu0 0
      %1243 = vmatpush1.bf16.msra.mxu0 %v944
      %1244 = vmatprep.subr.bf16.mxu0 0
      %1245 = vmatpush1.bf16.msra.mxu0 %v945
      %1246 = vmatprep.subr.bf16.mxu0 0
      %1247 = vmatpush1.bf16.msra.mxu0 %v946
      %1248 = vmatprep.subr.bf16.mxu0 0
      %1249 = vmatpush1.bf16.msra.mxu0 %v947
      %1250 = vmatprep.subr.bf16.mxu0 0
      %1251 = vmatpush1.bf16.msra.mxu0 %v948
      %1252 = vmatprep.subr.bf16.mxu0 0
      %1253 = vmatpush1.bf16.msra.mxu0 %v949
      %1254 = vmatprep.subr.bf16.mxu0 0
      %1255 = vmatpush1.bf16.msra.mxu0 %v950
      %1256 = vmatprep.subr.bf16.mxu0 0
      %1257 = vmatpush1.bf16.msra.mxu0 %v951
      %1258 = vmatprep.subr.bf16.mxu0 0
      %1259 = vmatpush1.bf16.msra.mxu0 %v952
      %1260 = vmatprep.mubr.bf16.mxu0 %v443
      %1261 = vmatmul.mubr.bf16.gmra.mrb[0].mxu0 %v439
      %v1262 = vpop.f32.mrb[0].mxu0
      %v1263 = vadd.f32 %v1198, %v1262
      %v1264 = vpop.f32.mrb[0].mxu0
      %v1265 = vpop.f32.mrb[0].mxu0
      %v1266 = vadd.f32 %v1201, %v1265
      %v1267 = vpop.f32.mrb[0].mxu0
      %1268 = vmatprep.mubr.bf16.mxu0 %v444
      %1269 = vmatmul.mubr.bf16.gmra.mrb[0].mxu0 %v440
      %v1270 = vpop.f32.mrb[0].mxu0
      %v1271 = vadd.f32 %v1206, %v1270
      %v1272 = vpop.f32.mrb[0].mxu0
      %v1273 = vpop.f32.mrb[0].mxu0
      %v1274 = vadd.f32 %v1209, %v1273
      %v1275 = vpop.f32.mrb[0].mxu0
      %1276 = vmatprep.mubr.bf16.mxu0 %v445
      %1277 = vmatmul.mubr.bf16.gmra.mrb[0].mxu0 %v441
      %v1278 = vpop.f32.mrb[0].mxu0
      %v1279 = vadd.f32 %v1214, %v1278
      %v1280 = vpop.f32.mrb[0].mxu0
      %v1281 = vpop.f32.mrb[0].mxu0
      %v1282 = vadd.f32 %v1217, %v1281
      %v1283 = vpop.f32.mrb[0].mxu0
      %1284 = vmatprep.mubr.bf16.mxu0 %v446
      %1285 = vmatmul.mubr.bf16.gmra.mrb[0].mxu0 %v442
      %v1286 = vpop.f32.mrb[0].mxu0
      %v1287 = vadd.f32 %v1222, %v1286
      %v1288 = vpop.f32.mrb[0].mxu0
      %v1289 = vpop.f32.mrb[0].mxu0
      %v1290 = vadd.f32 %v1225, %v1289
      %v1291 = vpop.f32.mrb[0].mxu0
      %1292 = vdwg.mxu0
      %1293 = vmatprep.subr.bf16.mxu0 0
      %1294 = vmatpush1.bf16.msra.mxu0 %v953
      %1295 = vmatprep.subr.bf16.mxu0 0
      %1296 = vmatpush1.bf16.msra.mxu0 %v954
      %1297 = vmatprep.subr.bf16.mxu0 0
      %1298 = vmatpush1.bf16.msra.mxu0 %v955
      %1299 = vmatprep.subr.bf16.mxu0 0
      %1300 = vmatpush1.bf16.msra.mxu0 %v956
      %1301 = vmatprep.subr.bf16.mxu0 0
      %1302 = vmatpush1.bf16.msra.mxu0 %v957
      %1303 = vmatprep.subr.bf16.mxu0 0
      %1304 = vmatpush1.bf16.msra.mxu0 %v958
      %1305 = vmatprep.subr.bf16.mxu0 0
      %1306 = vmatpush1.bf16.msra.mxu0 %v959
      %1307 = vmatprep.subr.bf16.mxu0 0
      %1308 = vmatpush1.bf16.msra.mxu0 %v960
      %1309 = vmatprep.subr.bf16.mxu0 0
      %1310 = vmatpush1.bf16.msra.mxu0 0
      %1311 = vmatprep.subr.bf16.mxu0 0
      %1312 = vmatpush1.bf16.msra.mxu0 0
      %1313 = vmatprep.subr.bf16.mxu0 0
      %1314 = vmatpush1.bf16.msra.mxu0 0
      %1315 = vmatprep.subr.bf16.mxu0 0
      %1316 = vmatpush1.bf16.msra.mxu0 0
      %1317 = vmatprep.subr.bf16.mxu0 0
      %1318 = vmatpush1.bf16.msra.mxu0 0
      %1319 = vmatprep.subr.bf16.mxu0 0
      %1320 = vmatpush1.bf16.msra.mxu0 0
      %1321 = vmatprep.subr.bf16.mxu0 0
      %1322 = vmatpush1.bf16.msra.mxu0 0
      %1323 = vmatprep.subr.bf16.mxu0 0
      %1324 = vmatpush1.bf16.msra.mxu0 0
      %1325 = vmatprep.mubr.bf16.mxu0 0
      %1326 = vmatmul.mubr.bf16.gmra.mrb[0].mxu0 %v453
      %v1327 = vpop.f32.mrb[0].mxu0
      %v1328 = vadd.f32 %v1263, %v1327
      %v1329 = vpop.f32.mrb[0].mxu0
      %v1330 = vpop.f32.mrb[0].mxu0
      %v1331 = vadd.f32 %v1266, %v1330
      %v1332 = vpop.f32.mrb[0].mxu0
      %1333 = vmatprep.mubr.bf16.mxu0 0
      %1334 = vmatmul.mubr.bf16.gmra.mrb[0].mxu0 %v454
      %v1335 = vpop.f32.mrb[0].mxu0
      %v1336 = vadd.f32 %v1271, %v1335
      %v1337 = vpop.f32.mrb[0].mxu0
      %v1338 = vpop.f32.mrb[0].mxu0
      %v1339 = vadd.f32 %v1274, %v1338
      %v1340 = vpop.f32.mrb[0].mxu0
      %1341 = vmatprep.mubr.bf16.mxu0 0
      %1342 = vmatmul.mubr.bf16.gmra.mrb[0].mxu0 %v455
      %v1343 = vpop.f32.mrb[0].mxu0
      %v1344 = vadd.f32 %v1279, %v1343
      %v1345 = vpop.f32.mrb[0].mxu0
      %v1346 = vpop.f32.mrb[0].mxu0
      %v1347 = vadd.f32 %v1282, %v1346
      %v1348 = vpop.f32.mrb[0].mxu0
      %1349 = vmatprep.mubr.bf16.mxu0 0
      %1350 = vmatmul.mubr.bf16.gmra.mrb[0].mxu0 %v456
      %v1351 = vpop.f32.mrb[0].mxu0
      %v1352 = vadd.f32 %v1287, %v1351
      %v1353 = vpop.f32.mrb[0].mxu0
      %v1354 = vpop.f32.mrb[0].mxu0
      %v1355 = vadd.f32 %v1290, %v1354
      %v1356 = vpop.f32.mrb[0].mxu0
      %1357 = vdwg.mxu0
      %v1358 = vpack.c.bf16 %v1331, %v1328
      %v1359 = vpack.c.bf16 %v1339, %v1336
      %v1360 = vpack.c.bf16 %v1347, %v1344
      %v1361 = vpack.c.bf16 %v1355, %v1352
      %v1366 = vunpack.c.l.b16 %v1358
      %v1367 = vunpack.c.h.b16 %v1358
      %v1368 = vunpack.c.l.b16 %v1359
      %v1369 = vunpack.c.h.b16 %v1359
      %v1370 = vunpack.c.l.b16 %v1360
      %v1371 = vunpack.c.h.b16 %v1360
      %v1372 = vunpack.c.l.b16 %v1361
      %v1373 = vunpack.c.h.b16 %v1361
      %v1374 = vpack.c.b16 %v1366, %v1366
      %v1375 = vpack.c.b16 %v1367, %v1367
      %v1376 = vpack.c.b16 %v1368, %v1368
      %v1377 = vpack.c.b16 %v1369, %v1369
      %v1378 = vpack.c.b16 %v1370, %v1370
      %v1379 = vpack.c.b16 %v1371, %v1371
      %v1380 = vpack.c.b16 %v1372, %v1372
      %v1381 = vpack.c.b16 %v1373, %v1373
      %1390 = vst [vmem:[%s208] sm:$0xf] %v1374
      %1391 = vst [vmem:[%s208 + $0x4] sm:$0xf] %v1375
      %1392 = vst [vmem:[%s208 + $0x8] sm:$0xf] %v1376
      %1393 = vst [vmem:[%s208 + $0xc] sm:$0xf] %v1377
      %1394 = vst [vmem:[%s208 + $0x10] sm:$0xf] %v1378
      %1395 = vst [vmem:[%s208 + $0x14] sm:$0xf] %v1379
      %1396 = vst [vmem:[%s208 + $0x18] sm:$0xf] %v1380
      %1397 = vst [vmem:[%s208 + $0x1c] sm:$0xf] %v1381
      %v1398 = vadd.f32 %v1328, %v1331
      %v1399 = vadd.f32 %v1398, %v1336
      %v1400 = vadd.f32 %v1399, %v1339
      %v1401 = vadd.f32 %v1400, %v1344
      %v1402 = vadd.f32 %v1401, %v1347
      %v1403 = vadd.f32 %v1402, %v1352
      %v1404 = vadd.f32 %v1403, %v1355
      %v1405 = vrot.slane %v1404, 4
      %v1406 = vadd.f32 %v1404, %v1405
      %v1407 = vrot.slane %v1406, 2
      %v1408 = vadd.f32 %v1406, %v1407
      %v1409 = vrot.slane %v1408, 1
      %v1410 = vadd.f32 %v1408, %v1409
      %1411 = vst [vmem:[%s211] sm:$0x1] %v1410
      %v1412 = vmul.f32 %v1328, %v1328
      %v1413 = vmul.f32 %v1331, %v1331
      %v1414 = vmul.f32 %v1336, %v1336
      %v1415 = vmul.f32 %v1339, %v1339
      %v1416 = vmul.f32 %v1344, %v1344
      %v1417 = vmul.f32 %v1347, %v1347
      %v1418 = vmul.f32 %v1352, %v1352
      %v1419 = vmul.f32 %v1355, %v1355
      %v1420 = vadd.f32 %v1412, %v1413
      %v1421 = vadd.f32 %v1420, %v1414
      %v1422 = vadd.f32 %v1421, %v1415
      %v1423 = vadd.f32 %v1422, %v1416
      %v1424 = vadd.f32 %v1423, %v1417
      %v1425 = vadd.f32 %v1424, %v1418
      %v1426 = vadd.f32 %v1425, %v1419
      %v1427 = vrot.slane %v1426, 4
      %v1428 = vadd.f32 %v1426, %v1427
      %v1429 = vrot.slane %v1428, 2
      %v1430 = vadd.f32 %v1428, %v1429
      %v1431 = vrot.slane %v1430, 1
      %v1432 = vadd.f32 %v1430, %v1431
      %1433 = vst [vmem:[%s214] sm:$0x1] %v1432
      %p1434 = scmp.lt.s32.totalorder %s16, 1
      %s1435 = scalar_select %p1434, %s16, 1
      %s1436 = smul.addr %s1435, 8
      %s1437 = smul.addr %s1436, 4
      %s1438 = scalar_lea.vmem %s2, %s1437
      %p1439 = scmp.lt.s32.totalorder %s16, 1
      %s1440 = scalar_select %p1439, %s16, 1
      %s1441 = scalar_lea.vmem %s3, %s1440
      %p1442 = scmp.lt.s32.totalorder %s16, 1
      %s1443 = scalar_select %p1442, %s16, 1
      %s1444 = scalar_lea.vmem %s4, %s1443
      // Predicated region
      $region29: #{residual_block_forward.5} parent=27 // pred_check
        %p1445 = pneg %p81
      $region30: #{residual_block_forward.5} parent=27 // pred_check_branch
        %1447 = sbr.rel (%p1445) target = $region32
      $region31: #{residual_block_forward.5} parent=27 // pred_region
        _
      $region32: #{residual_block_forward.5} parent=27 // pred_fallthru
        _
      // Predicated region
      $region33: #{residual_block_forward.5} parent=27 // pred_check
        %p1448 = pneg %p107
      $region34: #{residual_block_forward.5} parent=27 // pred_check_branch
        %1450 = sbr.rel (%p1448) target = $region36
      $region35: #{residual_block_forward.5} parent=27 // pred_region
        _
      $region36: #{residual_block_forward.5} parent=27 // pred_fallthru
        _
      // Predicated region
      $region37: #{residual_block_forward.5} parent=27 // pred_check
        %p1451 = pneg %p133
      $region38: #{residual_block_forward.5} parent=27 // pred_check_branch
        %1453 = sbr.rel (%p1451) target = $region40
      $region39: #{residual_block_forward.5} parent=27 // pred_region
        _
      $region40: #{residual_block_forward.5} parent=27 // pred_fallthru
        _
    $region28: #{residual_block_forward.5} parent=5 // pred_fallthru
      _
    %p1454 = scmp.le.s32.totalorder 2, %s11
    // Predicated region
    $region41: #{residual_block_forward.5} parent=5 // pred_check
      %p1455 = pneg %p1454
    $region42: #{residual_block_forward.5} parent=5 // pred_check_branch
      %1457 = sbr.rel (%p1455) target = $region44
    $region43: #{residual_block_forward.5} parent=5 // pred_region
      %s1458 = ssub.s32 %s11, 2
      // Predicated region
      $region45: #{residual_block_forward.5} parent=43 // pred_check
        %p1459 = pneg %p87
      $region46: #{residual_block_forward.5} parent=43 // pred_check_branch
        %1461 = sbr.rel (%p1459) target = $region48
      $region47: #{residual_block_forward.5} parent=43 // pred_region
        %p1462 = scmp.lt.s32.totalorder %s17, 1
        %s1463 = scalar_select %p1462, %s17, 1
        %s1464 = smul.addr %s1463, 8
        %s1465 = smul.addr %s1464, 4
        %s1466 = scalar_lea.vmem %s2, %s1465
      $region48: #{residual_block_forward.5} parent=43 // pred_fallthru
        _
      // Predicated region
      $region49: #{residual_block_forward.5} parent=43 // pred_check
        %p1467 = pneg %p113
      $region50: #{residual_block_forward.5} parent=43 // pred_check_branch
        %1469 = sbr.rel (%p1467) target = $region52
      $region51: #{residual_block_forward.5} parent=43 // pred_region
        %p1470 = scmp.lt.s32.totalorder %s17, 1
        %s1471 = scalar_select %p1470, %s17, 1
        %s1472 = scalar_lea.vmem %s3, %s1471
      $region52: #{residual_block_forward.5} parent=43 // pred_fallthru
        _
      // Predicated region
      $region53: #{residual_block_forward.5} parent=43 // pred_check
        %p1473 = pneg %p139
      $region54: #{residual_block_forward.5} parent=43 // pred_check_branch
        %1475 = sbr.rel (%p1473) target = $region56
      $region55: #{residual_block_forward.5} parent=43 // pred_region
        %p1476 = scmp.lt.s32.totalorder %s17, 1
        %s1477 = scalar_select %p1476, %s17, 1
        %s1478 = scalar_lea.vmem %s4, %s1477
      $region56: #{residual_block_forward.5} parent=43 // pred_fallthru
        _
    $region44: #{residual_block_forward.5} parent=5 // pred_fallthru
      _
  $region6: #{residual_block_forward.5} parent=0 // loop_footer
    %s15 = sadd.s32 1, %s11
  $region7: #{residual_block_forward.5} parent=0 // loop_footer_branch
    %10 = sbr.rel target = $region3
  $region8: #{residual_block_forward.5} parent=0 // loop_exit
    _

// kernel: residual_block_forward.8
$region0: #{residual_block_forward.8}
  #allocation0 [shape = 'u32[]', space=smem, size = 0x4, offset = 0x4, fixed_abs, tag = 'smem constant byte address 0x4 - core index']
  #allocation1 [shape = 'u32[144,128]{1,0:T(1,128)}', space=vmem, size = 0x12000, scoped, tag = 'internal scratch']
  %s0 = inlined_call_operand.vmem [shape: bf16[2,36,9,128], index: 0, kind: input, shape index: {}]
  %s1 = inlined_call_operand.vmem [shape: bf16[128,128], index: 1, kind: input, shape index: {}]
  %s2 = inlined_call_operand.vmem [shape: bf16[2,64,128], index: 2, kind: output, shape index: {0}]
  %s3 = inlined_call_operand.vmem [shape: f32[2,1,128], index: 3, kind: output, shape index: {1}]
  %s4 = inlined_call_operand.vmem [shape: f32[2,1,128], index: 4, kind: output, shape index: {2}]
  %5 = xla_tuple %s2, %s3, %s4
  %s6 = sld [smem:[#allocation0]]
  $region57: #{residual_block_forward.8} parent=0
    _
  %s8 = ssub.s32 1, %s6
  %s9 = scalar_select 0, %s8, %s6
  loop: start=0, step=1, limit=4
  $region2: #{residual_block_forward.8} parent=0 // loop_pre_header
    _
  $region3: #{residual_block_forward.8} parent=0 // loop_header
    %s11 = sphi 0, %s15
    %p12 = scmp.ge.s32.totalorder %s11, 4
    %s21 = sphi 0, %s23
    %s24 = sphi 0, %s21
    %s25 = sphi 0, %s24
    %s41 = sphi 0, %s25
    %s45 = sphi 0, %s45
    %s47 = sphi 0, %s45
    %s48 = sphi 0, %s47
    %s62 = sphi 0, %s48
    %s68 = sphi 0, %s70
    %s71 = sphi 0, %s68
    %s72 = sphi 0, %s71
    %s88 = sphi 0, %s72
    %s94 = sphi 0, %s96
    %s97 = sphi 0, %s94
    %s98 = sphi 0, %s97
    %s114 = sphi 0, %s98
    %s120 = sphi 0, %s122
    %s123 = sphi 0, %s120
    %s124 = sphi 0, %s123
    %s140 = sphi 0, %s124
  $region4: #{residual_block_forward.8} parent=0 // loop_header_branch
    %14 = sbr.rel (%p12) target = $region8
  $region5: #{residual_block_forward.8} parent=0 // loop_body
    %s16 = ssub.s32 %s11, 1
    %s17 = ssub.s32 %s11, 2
    %s18 = sadd.s32 %s11, 1
    %s19 = ssub.s32 %s11, %s18
    %p20 = scmp.eq.s32.totalorder %s19, 0
    %s22 = sadd.s32 %s21, 1
    %s23 = scalar_select %p20, %s21, %s22
    %p26 = pneg %p20
    %p27 = scmp.eq.s32.totalorder %s11, 1
    %p28 = por %p26, %p27
    %p29 = scmp.ne.s32.totalorder %s21, %s24
    %p30 = scmp.eq.s32.totalorder %s11, 0
    %p31 = por %p29, %p30
    %p32 = scmp.ne.s32.totalorder %s21, %s24
    %p33 = scmp.eq.s32.totalorder %s16, 1
    %p34 = por %p32, %p33
    %p35 = scmp.ne.s32.totalorder %s24, %s25
    %p36 = scmp.eq.s32.totalorder %s16, 0
    %p37 = por %p35, %p36
    %p38 = scmp.ne.s32.totalorder %s24, %s25
    %p39 = scmp.eq.s32.totalorder %s17, 1
    %p40 = por %p38, %p39
    %p42 = scmp.ne.s32.totalorder %s25, %s41
    %p43 = scmp.eq.s32.totalorder %s17, 0
    %p44 = por %p42, %p43
    %s46 = sadd.s32 %s45, 1
    %p49 = scmp.eq.s32.totalorder %s11, 1
    %p50 = scmp.ne.s32.totalorder %s45, %s47
    %p51 = scmp.eq.s32.totalorder %s11, 0
    %p52 = por %p50, %p51
    %p53 = scmp.ne.s32.totalorder %s45, %s47
    %p54 = scmp.eq.s32.totalorder %s16, 1
    %p55 = por %p53, %p54
    %p56 = scmp.ne.s32.totalorder %s47, %s48
    %p57 = scmp.eq.s32.totalorder %s16, 0
    %p58 = por %p56, %p57
    %p59 = scmp.ne.s32.totalorder %s47, %s48
    %p60 = scmp.eq.s32.totalorder %s17, 1
    %p61 = por %p59, %p60
    %p63 = scmp.ne.s32.totalorder %s48, %s62
    %p64 = scmp.eq.s32.totalorder %s17, 0
    %p65 = por %p63, %p64
    %s66 = ssub.s32 %s11, %s18
    %p67 = scmp.eq.s32.totalorder %s66, 0
    %s69 = sadd.s32 %s68, 1
    %s70 = scalar_select %p67, %s68, %s69
    %p73 = pneg %p67
    %p74 = scmp.eq.s32.totalorder %s11, 1
    %p75 = por %p73, %p74
    %p76 = scmp.ne.s32.totalorder %s68, %s71
    %p77 = scmp.eq.s32.totalorder %s11, 0
    %p78 = por %p76, %p77
    %p79 = scmp.ne.s32.totalorder %s68, %s71
    %p80 = scmp.eq.s32.totalorder %s16, 1
    %p81 = por %p79, %p80
    %p82 = scmp.ne.s32.totalorder %s71, %s72
    %p83 = scmp.eq.s32.totalorder %s16, 0
    %p84 = por %p82, %p83
    %p85 = scmp.ne.s32.totalorder %s71, %s72
    %p86 = scmp.eq.s32.totalorder %s17, 1
    %p87 = por %p85, %p86
    %p89 = scmp.ne.s32.totalorder %s72, %s88
    %p90 = scmp.eq.s32.totalorder %s17, 0
    %p91 = por %p89, %p90
    %s92 = ssub.s32 %s11, %s18
    %p93 = scmp.eq.s32.totalorder %s92, 0
    %s95 = sadd.s32 %s94, 1
    %s96 = scalar_select %p93, %s94, %s95
    %p99 = pneg %p93
    %p100 = scmp.eq.s32.totalorder %s11, 1
    %p101 = por %p99, %p100
    %p102 = scmp.ne.s32.totalorder %s94, %s97
    %p103 = scmp.eq.s32.totalorder %s11, 0
    %p104 = por %p102, %p103
    %p105 = scmp.ne.s32.totalorder %s94, %s97
    %p106 = scmp.eq.s32.totalorder %s16, 1
    %p107 = por %p105, %p106
    %p108 = scmp.ne.s32.totalorder %s97, %s98
    %p109 = scmp.eq.s32.totalorder %s16, 0
    %p110 = por %p108, %p109
    %p111 = scmp.ne.s32.totalorder %s97, %s98
    %p112 = scmp.eq.s32.totalorder %s17, 1
    %p113 = por %p111, %p112
    %p115 = scmp.ne.s32.totalorder %s98, %s114
    %p116 = scmp.eq.s32.totalorder %s17, 0
    %p117 = por %p115, %p116
    %s118 = ssub.s32 %s11, %s18
    %p119 = scmp.eq.s32.totalorder %s118, 0
    %s121 = sadd.s32 %s120, 1
    %s122 = scalar_select %p119, %s120, %s121
    %p125 = pneg %p119
    %p126 = scmp.eq.s32.totalorder %s11, 1
    %p127 = por %p125, %p126
    %p128 = scmp.ne.s32.totalorder %s120, %s123
    %p129 = scmp.eq.s32.totalorder %s11, 0
    %p130 = por %p128, %p129
    %p131 = scmp.ne.s32.totalorder %s120, %s123
    %p132 = scmp.eq.s32.totalorder %s16, 1
    %p133 = por %p131, %p132
    %p134 = scmp.ne.s32.totalorder %s123, %s124
    %p135 = scmp.eq.s32.totalorder %s16, 0
    %p136 = por %p134, %p135
    %p137 = scmp.ne.s32.totalorder %s123, %s124
    %p138 = scmp.eq.s32.totalorder %s17, 1
    %p139 = por %p137, %p138
    %p141 = scmp.ne.s32.totalorder %s124, %s140
    %p142 = scmp.eq.s32.totalorder %s17, 0
    %p143 = por %p141, %p142
    %p144 = scmp.le.s32.totalorder 1, %s11
    %p145 = scmp.lt.s32.totalorder %s11, 3
    %p146 = pnand %p144, %p145
    %p147 = pneg %p146
    // Predicated region
    $region9: #{residual_block_forward.8} parent=5 // pred_check
      _
    $region10: #{residual_block_forward.8} parent=5 // pred_check_branch
      %149 = sbr.rel (%p146) target = $region12
    $region11: #{residual_block_forward.8} parent=5 // pred_region
      %s150 = ssub.s32 %s11, 1
      // Predicated region
      $region13: #{residual_block_forward.8} parent=11 // pred_check
        %p151 = pneg %p58
      $region14: #{residual_block_forward.8} parent=11 // pred_check_branch
        %153 = sbr.rel (%p151) target = $region16
      $region15: #{residual_block_forward.8} parent=11 // pred_region
        _
      $region16: #{residual_block_forward.8} parent=11 // pred_fallthru
        _
    $region12: #{residual_block_forward.8} parent=5 // pred_fallthru
      _
    %p154 = scmp.lt.s32.totalorder %s11, 2
    // Predicated region
    $region17: #{residual_block_forward.8} parent=5 // pred_check
      %p155 = pneg %p154
    $region18: #{residual_block_forward.8} parent=5 // pred_check_branch
      %157 = sbr.rel (%p155) target = $region20
    $region19: #{residual_block_forward.8} parent=5 // pred_region
      // Predicated region
      $region21: #{residual_block_forward.8} parent=19 // pred_check
        %p158 = pneg %p31
      $region22: #{residual_block_forward.8} parent=19 // pred_check_branch
        %160 = sbr.rel (%p158) target = $region24
      $region23: #{residual_block_forward.8} parent=19 // pred_region
        %p161 = scmp.lt.s32.totalorder %s11, 1
        %s162 = scalar_select %p161, %s11, 1
        %s163 = smul.addr %s162, 72
        %s164 = smul.addr %s163, 4
        %s165 = scalar_lea.vmem %s0, %s164
      $region24: #{residual_block_forward.8} parent=19 // pred_fallthru
        _
    $region20: #{residual_block_forward.8} parent=5 // pred_fallthru
      _
    %p166 = scmp.le.s32.totalorder 1, %s11
    %p167 = scmp.lt.s32.totalorder %s11, 3
    %p168 = pnand %p166, %p167
    %p169 = pneg %p168
    // Predicated region
    $region25: #{residual_block_forward.8} parent=5 // pred_check
      _
    $region26: #{residual_block_forward.8} parent=5 // pred_check_branch
      %171 = sbr.rel (%p168) target = $region28
    $region27: #{residual_block_forward.8} parent=5 // pred_region
      %s172 = ssub.s32 %s11, 1
      %p173 = scmp.lt.s32.totalorder %s16, 1
      %s174 = scalar_select %p173, %s16, 1
      %s175 = smul.addr %s174, 72
      %s176 = smul.addr %s175, 4
      %s177 = scalar_lea.vmem %s0, %s176
      %p178 = pneg %p37
      %p179 = pneg %p34
      %p180 = pneg %p58
      %p181 = pneg %p55
      %p182 = pneg %p84
      %p183 = pneg %p81
      %p184 = scmp.lt.s32.totalorder %s16, 1
      %s185 = scalar_select %p184, %s16, 1
      %s186 = smul.addr %s185, 8
      %s187 = smul.addr %s186, 4
      %s188 = scalar_lea.vmem %s2, %s187
      %p189 = pneg %p110
      %p190 = pneg %p107
      %p191 = scmp.lt.s32.totalorder %s16, 1
      %s192 = scalar_select %p191, %s16, 1
      %s193 = scalar_lea.vmem %s3, %s192
      %p194 = pneg %p136
      %p195 = pneg %p133
      %p196 = scmp.lt.s32.totalorder %s16, 1
      %s197 = scalar_select %p196, %s16, 1
      %s198 = scalar_lea.vmem %s4, %s197
      %p199 = scmp.lt.s32.totalorder %s16, 1
      %s200 = scalar_select %p199, %s16, 1
      %s201 = smul.addr %s200, 72
      %s202 = smul.addr %s201, 4
      %s203 = scalar_lea.vmem %s0, %s202
      %p204 = scmp.lt.s32.totalorder %s16, 1
      %s205 = scalar_select %p204, %s16, 1
      %s206 = smul.addr %s205, 8
      %s207 = smul.addr %s206, 4
      %s208 = scalar_lea.vmem %s2, %s207
      %p209 = scmp.lt.s32.totalorder %s16, 1
      %s210 = scalar_select %p209, %s16, 1
      %s211 = scalar_lea.vmem %s3, %s210
      %p212 = scmp.lt.s32.totalorder %s16, 1
      %s213 = scalar_select %p212, %s16, 1
      %s214 = scalar_lea.vmem %s4, %s213
      %v216 = vld [vmem:[%s203 + $0xd8] sm:$0xf]
      %v217 = vld [vmem:[%s203 + $0xe0] sm:$0xf]
      %v218 = vld [vmem:[%s203 + $0xe8] sm:$0xf]
      %v219 = vld [vmem:[%s203 + $0xf0] sm:$0xf]
      %v220 = vld [vmem:[%s203 + $0xf8] sm:$0xf]
      %v221 = vld [vmem:[%s203 + $0x100] sm:$0xf]
      %v222 = vld [vmem:[%s203 + $0x108] sm:$0xf]
      %v223 = vld [vmem:[%s203 + $0x110] sm:$0xf]
      %v224 = vunpack.c.l.bf16 %v216
      %v225 = vunpack.c.l.bf16 %v217
      %v226 = vunpack.c.l.bf16 %v218
      %v227 = vunpack.c.l.bf16 %v219
      %v228 = vunpack.c.l.bf16 %v220
      %v229 = vunpack.c.l.bf16 %v221
      %v230 = vunpack.c.l.bf16 %v222
      %v231 = vunpack.c.l.bf16 %v223
      %v232 = vpack.c.bf16 %v225, %v224
      %v233 = vpack.c.bf16 %v227, %v226
      %v234 = vpack.c.bf16 %v229, %v228
      %v235 = vpack.c.bf16 %v231, %v230
      %v236 = vld [vmem:[%s1] sm:$0xf]
      %v237 = vld [vmem:[%s1 + $0x4] sm:$0xf]
      %v238 = vld [vmem:[%s1 + $0x8] sm:$0xf]
      %v239 = vld [vmem:[%s1 + $0xc] sm:$0xf]
      %v240 = vld [vmem:[%s1 + $0x10] sm:$0xf]
      %v241 = vld [vmem:[%s1 + $0x14] sm:$0xf]
      %v242 = vld [vmem:[%s1 + $0x18] sm:$0xf]
      %v243 = vld [vmem:[%s1 + $0x1c] sm:$0xf]
      %v244 = vld [vmem:[%s1 + $0x20] sm:$0xf]
      %v245 = vld [vmem:[%s1 + $0x24] sm:$0xf]
      %v246 = vld [vmem:[%s1 + $0x28] sm:$0xf]
      %v247 = vld [vmem:[%s1 + $0x2c] sm:$0xf]
      %v248 = vld [vmem:[%s1 + $0x30] sm:$0xf]
      %v249 = vld [vmem:[%s1 + $0x34] sm:$0xf]
      %v250 = vld [vmem:[%s1 + $0x38] sm:$0xf]
      %v251 = vld [vmem:[%s1 + $0x3c] sm:$0xf]
      %v268 = vunpack.c.l.b16 %v236
      %v269 = vunpack.c.l.b16 %v237
      %v270 = vunpack.c.l.b16 %v238
      %v271 = vunpack.c.l.b16 %v239
      %v272 = vunpack.c.l.b16 %v240
      %v273 = vunpack.c.l.b16 %v241
      %v274 = vunpack.c.l.b16 %v242
      %v275 = vunpack.c.l.b16 %v243
      %v276 = vunpack.c.l.b16 %v244
      %v277 = vunpack.c.l.b16 %v245
      %v278 = vunpack.c.l.b16 %v246
      %v279 = vunpack.c.l.b16 %v247
      %v280 = vunpack.c.l.b16 %v248
      %v281 = vunpack.c.l.b16 %v249
      %v282 = vunpack.c.l.b16 %v250
      %v283 = vunpack.c.l.b16 %v251
      %v284 = vpack.c.b16 %v269, %v268
      %v285 = vpack.c.b16 %v271, %v270
      %v286 = vpack.c.b16 %v273, %v272
      %v287 = vpack.c.b16 %v275, %v274
      %v288 = vpack.c.b16 %v277, %v276
      %v289 = vpack.c.b16 %v279, %v278
      %v290 = vpack.c.b16 %v281, %v280
      %v291 = vpack.c.b16 %v283, %v282
      %300 = vmatprep.subr.bf16.mxu0 0
      %301 = vmatpush1.bf16.msra.mxu0 %v284
      %302 = vmatprep.subr.bf16.mxu0 0
      %303 = vmatpush1.bf16.msra.mxu0 %v285
      %304 = vmatprep.subr.bf16.mxu0 0
      %305 = vmatpush1.bf16.msra.mxu0 %v286
      %306 = vmatprep.subr.bf16.mxu0 0
      %307 = vmatpush1.bf16.msra.mxu0 %v287
      %308 = vmatprep.subr.bf16.mxu0 0
      %309 = vmatpush1.bf16.msra.mxu0 %v288
      %310 = vmatprep.subr.bf16.mxu0 0
      %311 = vmatpush1.bf16.msra.mxu0 %v289
      %312 = vmatprep.subr.bf16.mxu0 0
      %313 = vmatpush1.bf16.msra.mxu0 %v290
      %314 = vmatprep.subr.bf16.mxu0 0
      %315 = vmatpush1.bf16.msra.mxu0 %v291
      %316 = vmatprep.subr.bf16.mxu0 0
      %317 = vmatpush1.bf16.msra.mxu0 0
      %318 = vmatprep.subr.bf16.mxu0 0
      %319 = vmatpush1.bf16.msra.mxu0 0
      %320 = vmatprep.subr.bf16.mxu0 0
      %321 = vmatpush1.bf16.msra.mxu0 0
      %322 = vmatprep.subr.bf16.mxu0 0
      %323 = vmatpush1.bf16.msra.mxu0 0
      %324 = vmatprep.subr.bf16.mxu0 0
      %325 = vmatpush1.bf16.msra.mxu0 0
      %326 = vmatprep.subr.bf16.mxu0 0
      %327 = vmatpush1.bf16.msra.mxu0 0
      %328 = vmatprep.subr.bf16.mxu0 0
      %329 = vmatpush1.bf16.msra.mxu0 0
      %330 = vmatprep.subr.bf16.mxu0 0
      %331 = vmatpush1.bf16.msra.mxu0 0
      %332 = vmatprep.mubr.bf16.mxu0 0
      %333 = vmatmul.mubr.bf16.gmra.mrb[0].mxu0 %v232
      %v334 = vpop.f32.mrb[0].mxu0
      %v335 = vadd.f32 0.0, %v334
      %v336 = vpop.f32.mrb[0].mxu0
      %v337 = vpop.f32.mrb[0].mxu0
      %v338 = vadd.f32 0.0, %v337
      %v339 = vpop.f32.mrb[0].mxu0
      %340 = vmatprep.mubr.bf16.mxu0 0
      %341 = vmatmul.mubr.bf16.gmra.mrb[0].mxu0 %v233
      %v342 = vpop.f32.mrb[0].mxu0
      %v343 = vadd.f32 0.0, %v342
      %v344 = vpop.f32.mrb[0].mxu0
      %v345 = vpop.f32.mrb[0].mxu0
      %v346 = vadd.f32 0.0, %v345
      %v347 = vpop.f32.mrb[0].mxu0
      %348 = vmatprep.mubr.bf16.mxu0 0
      %349 = vmatmul.mubr.bf16.gmra.mrb[0].mxu0 %v234
      %v350 = vpop.f32.mrb[0].mxu0
      %v351 = vadd.f32 0.0, %v350
      %v352 = vpop.f32.mrb[0].mxu0
      %v353 = vpop.f32.mrb[0].mxu0
      %v354 = vadd.f32 0.0, %v353
      %v355 = vpop.f32.mrb[0].mxu0
      %356 = vmatprep.mubr.bf16.mxu0 0
      %357 = vmatmul.mubr.bf16.gmra.mrb[0].mxu0 %v235
      %v358 = vpop.f32.mrb[0].mxu0
      %v359 = vadd.f32 0.0, %v358
      %v360 = vpop.f32.mrb[0].mxu0
      %v361 = vpop.f32.mrb[0].mxu0
      %v362 = vadd.f32 0.0, %v361
      %v363 = vpop.f32.mrb[0].mxu0
      %364 = vdwg.mxu0
      %v365 = vpack.c.bf16 %v338, %v335
      %v366 = vpack.c.bf16 %v346, %v343
      %v367 = vpack.c.bf16 %v354, %v351
      %v368 = vpack.c.bf16 %v362, %v359
      %v373 = vunpack.c.l.b16 %v365
      %v374 = vunpack.c.h.b16 %v365
      %v375 = vunpack.c.l.b16 %v366
      %v376 = vunpack.c.h.b16 %v366
      %v377 = vunpack.c.l.b16 %v367
      %v378 = vunpack.c.h.b16 %v367
      %v379 = vunpack.c.l.b16 %v368
      %v380 = vunpack.c.h.b16 %v368
      %v381 = vpack.c.b16 %v373, %v373
      %v382 = vpack.c.b16 %v374, %v374
      %v383 = vpack.c.b16 %v375, %v375
      %v384 = vpack.c.b16 %v376, %v376
      %v385 = vpack.c.b16 %v377, %v377
      %v386 = vpack.c.b16 %v378, %v378
      %v387 = vpack.c.b16 %v379, %v379
      %v388 = vpack.c.b16 %v380, %v380
      %397 = vst [vmem:[%s208] sm:$0xf] %v381
      %398 = vst [vmem:[%s208 + $0x4] sm:$0xf] %v382
      %399 = vst [vmem:[%s208 + $0x8] sm:$0xf] %v383
      %400 = vst [vmem:[%s208 + $0xc] sm:$0xf] %v384
      %401 = vst [vmem:[%s208 + $0x10] sm:$0xf] %v385
      %402 = vst [vmem:[%s208 + $0x14] sm:$0xf] %v386
      %403 = vst [vmem:[%s208 + $0x18] sm:$0xf] %v387
      %404 = vst [vmem:[%s208 + $0x1c] sm:$0xf] %v388
      %v405 = vadd.f32 %v335, %v338
      %v406 = vadd.f32 %v405, %v343
      %v407 = vadd.f32 %v406, %v346
      %v408 = vadd.f32 %v407, %v351
      %v409 = vadd.f32 %v408, %v354
      %v410 = vadd.f32 %v409, %v359
      %v411 = vadd.f32 %v410, %v362
      %v412 = vrot.slane %v411, 4
      %v413 = vadd.f32 %v411, %v412
      %v414 = vrot.slane %v413, 2
      %v415 = vadd.f32 %v413, %v414
      %v416 = vrot.slane %v415, 1
      %v417 = vadd.f32 %v415, %v416
      %418 = vst [vmem:[%s211] sm:$0x1] %v417
      %v419 = vmul.f32 %v335, %v335
      %v420 = vmul.f32 %v338, %v338
      %v421 = vmul.f32 %v343, %v343
      %v422 = vmul.f32 %v346, %v346
      %v423 = vmul.f32 %v351, %v351
      %v424 = vmul.f32 %v354, %v354
      %v425 = vmul.f32 %v359, %v359
      %v426 = vmul.f32 %v362, %v362
      %v427 = vadd.f32 %v419, %v420
      %v428 = vadd.f32 %v427, %v421
      %v429 = vadd.f32 %v428, %v422
      %v430 = vadd.f32 %v429, %v423
      %v431 = vadd.f32 %v430, %v424
      %v432 = vadd.f32 %v431, %v425
      %v433 = vadd.f32 %v432, %v426
      %v434 = vrot.slane %v433, 4
      %v435 = vadd.f32 %v433, %v434
      %v436 = vrot.slane %v435, 2
      %v437 = vadd.f32 %v435, %v436
      %v438 = vrot.slane %v437, 1
      %v439 = vadd.f32 %v437, %v438
      %440 = vst [vmem:[%s214] sm:$0x1] %v439
      %p441 = scmp.lt.s32.totalorder %s16, 1
      %s442 = scalar_select %p441, %s16, 1
      %s443 = smul.addr %s442, 8
      %s444 = smul.addr %s443, 4
      %s445 = scalar_lea.vmem %s2, %s444
      %p446 = scmp.lt.s32.totalorder %s16, 1
      %s447 = scalar_select %p446, %s16, 1
      %s448 = scalar_lea.vmem %s3, %s447
      %p449 = scmp.lt.s32.totalorder %s16, 1
      %s450 = scalar_select %p449, %s16, 1
      %s451 = scalar_lea.vmem %s4, %s450
      // Predicated region
      $region29: #{residual_block_forward.8} parent=27 // pred_check
        %p452 = pneg %p81
      $region30: #{residual_block_forward.8} parent=27 // pred_check_branch
        %454 = sbr.rel (%p452) target = $region32
      $region31: #{residual_block_forward.8} parent=27 // pred_region
        _
      $region32: #{residual_block_forward.8} parent=27 // pred_fallthru
        _
      // Predicated region
      $region33: #{residual_block_forward.8} parent=27 // pred_check
        %p455 = pneg %p107
      $region34: #{residual_block_forward.8} parent=27 // pred_check_branch
        %457 = sbr.rel (%p455) target = $region36
      $region35: #{residual_block_forward.8} parent=27 // pred_region
        _
      $region36: #{residual_block_forward.8} parent=27 // pred_fallthru
        _
      // Predicated region
      $region37: #{residual_block_forward.8} parent=27 // pred_check
        %p458 = pneg %p133
      $region38: #{residual_block_forward.8} parent=27 // pred_check_branch
        %460 = sbr.rel (%p458) target = $region40
      $region39: #{residual_block_forward.8} parent=27 // pred_region
        _
      $region40: #{residual_block_forward.8} parent=27 // pred_fallthru
        _
    $region28: #{residual_block_forward.8} parent=5 // pred_fallthru
      _
    %p461 = scmp.le.s32.totalorder 2, %s11
    // Predicated region
    $region41: #{residual_block_forward.8} parent=5 // pred_check
      %p462 = pneg %p461
    $region42: #{residual_block_forward.8} parent=5 // pred_check_branch
      %464 = sbr.rel (%p462) target = $region44
    $region43: #{residual_block_forward.8} parent=5 // pred_region
      %s465 = ssub.s32 %s11, 2
      // Predicated region
      $region45: #{residual_block_forward.8} parent=43 // pred_check
        %p466 = pneg %p87
      $region46: #{residual_block_forward.8} parent=43 // pred_check_branch
        %468 = sbr.rel (%p466) target = $region48
      $region47: #{residual_block_forward.8} parent=43 // pred_region
        %p469 = scmp.lt.s32.totalorder %s17, 1
        %s470 = scalar_select %p469, %s17, 1
        %s471 = smul.addr %s470, 8
        %s472 = smul.addr %s471, 4
        %s473 = scalar_lea.vmem %s2, %s472
      $region48: #{residual_block_forward.8} parent=43 // pred_fallthru
        _
      // Predicated region
      $region49: #{residual_block_forward.8} parent=43 // pred_check
        %p474 = pneg %p113
      $region50: #{residual_block_forward.8} parent=43 // pred_check_branch
        %476 = sbr.rel (%p474) target = $region52
      $region51: #{residual_block_forward.8} parent=43 // pred_region
        %p477 = scmp.lt.s32.totalorder %s17, 1
        %s478 = scalar_select %p477, %s17, 1
        %s479 = scalar_lea.vmem %s3, %s478
      $region52: #{residual_block_forward.8} parent=43 // pred_fallthru
        _
      // Predicated region
      $region53: #{residual_block_forward.8} parent=43 // pred_check
        %p480 = pneg %p139
      $region54: #{residual_block_forward.8} parent=43 // pred_check_branch
        %482 = sbr.rel (%p480) target = $region56
      $region55: #{residual_block_forward.8} parent=43 // pred_region
        %p483 = scmp.lt.s32.totalorder %s17, 1
        %s484 = scalar_select %p483, %s17, 1
        %s485 = scalar_lea.vmem %s4, %s484
      $region56: #{residual_block_forward.8} parent=43 // pred_fallthru
        _
    $region44: #{residual_block_forward.8} parent=5 // pred_fallthru
      _
  $region6: #{residual_block_forward.8} parent=0 // loop_footer
    %s15 = sadd.s32 1, %s11
  $region7: #{residual_block_forward.8} parent=0 // loop_footer_branch
    %10 = sbr.rel target = $region3
  $region8: #{residual_block_forward.8} parent=0 // loop_exit
    _

// kernel: residual_block_forward.7
$region0: #{residual_block_forward.7}
  #allocation0 [shape = 'u32[]', space=smem, size = 0x4, offset = 0x4, fixed_abs, tag = 'smem constant byte address 0x4 - core index']
  #allocation1 [shape = 'u32[144,128]{1,0:T(1,128)}', space=vmem, size = 0x12000, scoped, tag = 'internal scratch']
  %s0 = inlined_call_operand.vmem [shape: bf16[2,10,10,128], index: 0, kind: input, shape index: {}]
  %s1 = inlined_call_operand.vmem [shape: bf16[1152,128], index: 1, kind: input, shape index: {}]
  %s2 = inlined_call_operand.vmem [shape: bf16[2,64,128], index: 2, kind: output, shape index: {0}]
  %s3 = inlined_call_operand.vmem [shape: f32[2,1,128], index: 3, kind: output, shape index: {1}]
  %s4 = inlined_call_operand.vmem [shape: f32[2,1,128], index: 4, kind: output, shape index: {2}]
  %5 = xla_tuple %s2, %s3, %s4
  %s6 = sld [smem:[#allocation0]]
  $region57: #{residual_block_forward.7} parent=0
    _
  %s8 = ssub.s32 1, %s6
  %s9 = scalar_select 0, %s8, %s6
  loop: start=0, step=1, limit=4
  $region2: #{residual_block_forward.7} parent=0 // loop_pre_header
    _
  $region3: #{residual_block_forward.7} parent=0 // loop_header
    %s11 = sphi 0, %s15
    %p12 = scmp.ge.s32.totalorder %s11, 4
    %s21 = sphi 0, %s23
    %s24 = sphi 0, %s21
    %s25 = sphi 0, %s24
    %s41 = sphi 0, %s25
    %s45 = sphi 0, %s45
    %s47 = sphi 0, %s45
    %s48 = sphi 0, %s47
    %s62 = sphi 0, %s48
    %s68 = sphi 0, %s70
    %s71 = sphi 0, %s68
    %s72 = sphi 0, %s71
    %s88 = sphi 0, %s72
    %s94 = sphi 0, %s96
    %s97 = sphi 0, %s94
    %s98 = sphi 0, %s97
    %s114 = sphi 0, %s98
    %s120 = sphi 0, %s122
    %s123 = sphi 0, %s120
    %s124 = sphi 0, %s123
    %s140 = sphi 0, %s124
  $region4: #{residual_block_forward.7} parent=0 // loop_header_branch
    %14 = sbr.rel (%p12) target = $region8
  $region5: #{residual_block_forward.7} parent=0 // loop_body
    %s16 = ssub.s32 %s11, 1
    %s17 = ssub.s32 %s11, 2
    %s18 = sadd.s32 %s11, 1
    %s19 = ssub.s32 %s11, %s18
    %p20 = scmp.eq.s32.totalorder %s19, 0
    %s22 = sadd.s32 %s21, 1
    %s23 = scalar_select %p20, %s21, %s22
    %p26 = pneg %p20
    %p27 = scmp.eq.s32.totalorder %s11, 1
    %p28 = por %p26, %p27
    %p29 = scmp.ne.s32.totalorder %s21, %s24
    %p30 = scmp.eq.s32.totalorder %s11, 0
    %p31 = por %p29, %p30
    %p32 = scmp.ne.s32.totalorder %s21, %s24
    %p33 = scmp.eq.s32.totalorder %s16, 1
    %p34 = por %p32, %p33
    %p35 = scmp.ne.s32.totalorder %s24, %s25
    %p36 = scmp.eq.s32.totalorder %s16, 0
    %p37 = por %p35, %p36
    %p38 = scmp.ne.s32.totalorder %s24, %s25
    %p39 = scmp.eq.s32.totalorder %s17, 1
    %p40 = por %p38, %p39
    %p42 = scmp.ne.s32.totalorder %s25, %s41
    %p43 = scmp.eq.s32.totalorder %s17, 0
    %p44 = por %p42, %p43
    %s46 = sadd.s32 %s45, 1
    %p49 = scmp.eq.s32.totalorder %s11, 1
    %p50 = scmp.ne.s32.totalorder %s45, %s47
    %p51 = scmp.eq.s32.totalorder %s11, 0
    %p52 = por %p50, %p51
    %p53 = scmp.ne.s32.totalorder %s45, %s47
    %p54 = scmp.eq.s32.totalorder %s16, 1
    %p55 = por %p53, %p54
    %p56 = scmp.ne.s32.totalorder %s47, %s48
    %p57 = scmp.eq.s32.totalorder %s16, 0
    %p58 = por %p56, %p57
    %p59 = scmp.ne.s32.totalorder %s47, %s48
    %p60 = scmp.eq.s32.totalorder %s17, 1
    %p61 = por %p59, %p60
    %p63 = scmp.ne.s32.totalorder %s48, %s62
    %p64 = scmp.eq.s32.totalorder %s17, 0
    %p65 = por %p63, %p64
    %s66 = ssub.s32 %s11, %s18
    %p67 = scmp.eq.s32.totalorder %s66, 0
    %s69 = sadd.s32 %s68, 1
    %s70 = scalar_select %p67, %s68, %s69
    %p73 = pneg %p67
    %p74 = scmp.eq.s32.totalorder %s11, 1
    %p75 = por %p73, %p74
    %p76 = scmp.ne.s32.totalorder %s68, %s71
    %p77 = scmp.eq.s32.totalorder %s11, 0
    %p78 = por %p76, %p77
    %p79 = scmp.ne.s32.totalorder %s68, %s71
    %p80 = scmp.eq.s32.totalorder %s16, 1
    %p81 = por %p79, %p80
    %p82 = scmp.ne.s32.totalorder %s71, %s72
    %p83 = scmp.eq.s32.totalorder %s16, 0
    %p84 = por %p82, %p83
    %p85 = scmp.ne.s32.totalorder %s71, %s72
    %p86 = scmp.eq.s32.totalorder %s17, 1
    %p87 = por %p85, %p86
    %p89 = scmp.ne.s32.totalorder %s72, %s88
    %p90 = scmp.eq.s32.totalorder %s17, 0
    %p91 = por %p89, %p90
    %s92 = ssub.s32 %s11, %s18
    %p93 = scmp.eq.s32.totalorder %s92, 0
    %s95 = sadd.s32 %s94, 1
    %s96 = scalar_select %p93, %s94, %s95
    %p99 = pneg %p93
    %p100 = scmp.eq.s32.totalorder %s11, 1
    %p101 = por %p99, %p100
    %p102 = scmp.ne.s32.totalorder %s94, %s97
    %p103 = scmp.eq.s32.totalorder %s11, 0
    %p104 = por %p102, %p103
    %p105 = scmp.ne.s32.totalorder %s94, %s97
    %p106 = scmp.eq.s32.totalorder %s16, 1
    %p107 = por %p105, %p106
    %p108 = scmp.ne.s32.totalorder %s97, %s98
    %p109 = scmp.eq.s32.totalorder %s16, 0
    %p110 = por %p108, %p109
    %p111 = scmp.ne.s32.totalorder %s97, %s98
    %p112 = scmp.eq.s32.totalorder %s17, 1
    %p113 = por %p111, %p112
    %p115 = scmp.ne.s32.totalorder %s98, %s114
    %p116 = scmp.eq.s32.totalorder %s17, 0
    %p117 = por %p115, %p116
    %s118 = ssub.s32 %s11, %s18
    %p119 = scmp.eq.s32.totalorder %s118, 0
    %s121 = sadd.s32 %s120, 1
    %s122 = scalar_select %p119, %s120, %s121
    %p125 = pneg %p119
    %p126 = scmp.eq.s32.totalorder %s11, 1
    %p127 = por %p125, %p126
    %p128 = scmp.ne.s32.totalorder %s120, %s123
    %p129 = scmp.eq.s32.totalorder %s11, 0
    %p130 = por %p128, %p129
    %p131 = scmp.ne.s32.totalorder %s120, %s123
    %p132 = scmp.eq.s32.totalorder %s16, 1
    %p133 = por %p131, %p132
    %p134 = scmp.ne.s32.totalorder %s123, %s124
    %p135 = scmp.eq.s32.totalorder %s16, 0
    %p136 = por %p134, %p135
    %p137 = scmp.ne.s32.totalorder %s123, %s124
    %p138 = scmp.eq.s32.totalorder %s17, 1
    %p139 = por %p137, %p138
    %p141 = scmp.ne.s32.totalorder %s124, %s140
    %p142 = scmp.eq.s32.totalorder %s17, 0
    %p143 = por %p141, %p142
    %p144 = scmp.le.s32.totalorder 1, %s11
    %p145 = scmp.lt.s32.totalorder %s11, 3
    %p146 = pnand %p144, %p145
    %p147 = pneg %p146
    // Predicated region
    $region9: #{residual_block_forward.7} parent=5 // pred_check
      _
    $region10: #{residual_block_forward.7} parent=5 // pred_check_branch
      %149 = sbr.rel (%p146) target = $region12
    $region11: #{residual_block_forward.7} parent=5 // pred_region
      %s150 = ssub.s32 %s11, 1
      // Predicated region
      $region13: #{residual_block_forward.7} parent=11 // pred_check
        %p151 = pneg %p58
      $region14: #{residual_block_forward.7} parent=11 // pred_check_branch
        %153 = sbr.rel (%p151) target = $region16
      $region15: #{residual_block_forward.7} parent=11 // pred_region
        _
      $region16: #{residual_block_forward.7} parent=11 // pred_fallthru
        _
    $region12: #{residual_block_forward.7} parent=5 // pred_fallthru
      _
    %p154 = scmp.lt.s32.totalorder %s11, 2
    // Predicated region
    $region17: #{residual_block_forward.7} parent=5 // pred_check
      %p155 = pneg %p154
    $region18: #{residual_block_forward.7} parent=5 // pred_check_branch
      %157 = sbr.rel (%p155) target = $region20
    $region19: #{residual_block_forward.7} parent=5 // pred_region
      // Predicated region
      $region21: #{residual_block_forward.7} parent=19 // pred_check
        %p158 = pneg %p31
      $region22: #{residual_block_forward.7} parent=19 // pred_check_branch
        %160 = sbr.rel (%p158) target = $region24
      $region23: #{residual_block_forward.7} parent=19 // pred_region
        %p161 = scmp.lt.s32.totalorder %s11, 1
        %s162 = scalar_select %p161, %s11, 1
        %s163 = smul.addr %s162, 20
        %s164 = smul.addr %s163, 4
        %s165 = scalar_lea.vmem %s0, %s164
      $region24: #{residual_block_forward.7} parent=19 // pred_fallthru
        _
    $region20: #{residual_block_forward.7} parent=5 // pred_fallthru
      _
    %p166 = scmp.le.s32.totalorder 1, %s11
    %p167 = scmp.lt.s32.totalorder %s11, 3
    %p168 = pnand %p166, %p167
    %p169 = pneg %p168
    // Predicated region
    $region25: #{residual_block_forward.7} parent=5 // pred_check
      _
    $region26: #{residual_block_forward.7} parent=5 // pred_check_branch
      %171 = sbr.rel (%p168) target = $region28
    $region27: #{residual_block_forward.7} parent=5 // pred_region
      %s172 = ssub.s32 %s11, 1
      %p173 = scmp.lt.s32.totalorder %s16, 1
      %s174 = scalar_select %p173, %s16, 1
      %s175 = smul.addr %s174, 20
      %s176 = smul.addr %s175, 4
      %s177 = scalar_lea.vmem %s0, %s176
      %p178 = pneg %p37
      %p179 = pneg %p34
      %p180 = pneg %p58
      %p181 = pneg %p55
      %p182 = pneg %p84
      %p183 = pneg %p81
      %p184 = scmp.lt.s32.totalorder %s16, 1
      %s185 = scalar_select %p184, %s16, 1
      %s186 = smul.addr %s185, 8
      %s187 = smul.addr %s186, 4
      %s188 = scalar_lea.vmem %s2, %s187
      %p189 = pneg %p110
      %p190 = pneg %p107
      %p191 = scmp.lt.s32.totalorder %s16, 1
      %s192 = scalar_select %p191, %s16, 1
      %s193 = scalar_lea.vmem %s3, %s192
      %p194 = pneg %p136
      %p195 = pneg %p133
      %p196 = scmp.lt.s32.totalorder %s16, 1
      %s197 = scalar_select %p196, %s16, 1
      %s198 = scalar_lea.vmem %s4, %s197
      %p199 = scmp.lt.s32.totalorder %s16, 1
      %s200 = scalar_select %p199, %s16, 1
      %s201 = smul.addr %s200, 20
      %s202 = smul.addr %s201, 4
      %s203 = scalar_lea.vmem %s0, %s202
      %p204 = scmp.lt.s32.totalorder %s16, 1
      %s205 = scalar_select %p204, %s16, 1
      %s206 = smul.addr %s205, 8
      %s207 = smul.addr %s206, 4
      %s208 = scalar_lea.vmem %s2, %s207
      %p209 = scmp.lt.s32.totalorder %s16, 1
      %s210 = scalar_select %p209, %s16, 1
      %s211 = scalar_lea.vmem %s3, %s210
      %p212 = scmp.lt.s32.totalorder %s16, 1
      %s213 = scalar_select %p212, %s16, 1
      %s214 = scalar_lea.vmem %s4, %s213
      %v216 = vld [vmem:[%s203] sm:$0xf]
      %v217 = vld [vmem:[%s203 + $0x4] sm:$0x1]
      %v218 = vld [vmem:[%s203 + $0x8] sm:$0xf]
      %v219 = vld [vmem:[%s203 + $0xc] sm:$0x1]
      %v220 = vld [vmem:[%s203 + $0x10] sm:$0xf]
      %v221 = vld [vmem:[%s203 + $0x14] sm:$0x1]
      %v222 = vld [vmem:[%s203 + $0x18] sm:$0xf]
      %v223 = vld [vmem:[%s203 + $0x1c] sm:$0x1]
      %v224 = vld [vmem:[%s203 + $0x20] sm:$0xf]
      %v225 = vld [vmem:[%s203 + $0x24] sm:$0x1]
      %v226 = vld [vmem:[%s203 + $0x28] sm:$0xf]
      %v227 = vld [vmem:[%s203 + $0x2c] sm:$0x1]
      %v228 = vld [vmem:[%s203 + $0x30] sm:$0xf]
      %v229 = vld [vmem:[%s203 + $0x34] sm:$0x1]
      %v230 = vld [vmem:[%s203 + $0x38] sm:$0xf]
      %v231 = vld [vmem:[%s203 + $0x3c] sm:$0x1]
      %v232 = vld [vmem:[%s203 + $0x40] sm:$0xf]
      %v233 = vld [vmem:[%s203 + $0x44] sm:$0x1]
      %v234 = vld [vmem:[%s203 + $0x48] sm:$0xf]
      %v235 = vld [vmem:[%s203 + $0x4c] sm:$0x1]
      %v236 = vunpack.c.l.bf16 %v216
      %v237 = vunpack.c.l.bf16 %v217
      %v238 = vunpack.c.l.bf16 %v218
      %v239 = vunpack.c.l.bf16 %v219
      %v240 = vunpack.c.l.bf16 %v220
      %v241 = vunpack.c.l.bf16 %v221
      %v242 = vunpack.c.l.bf16 %v222
      %v243 = vunpack.c.l.bf16 %v223
      %v244 = vunpack.c.l.bf16 %v224
      %v245 = vunpack.c.l.bf16 %v225
      %v246 = vunpack.c.l.bf16 %v226
      %v247 = vunpack.c.l.bf16 %v227
      %v248 = vunpack.c.l.bf16 %v228
      %v249 = vunpack.c.l.bf16 %v229
      %v250 = vunpack.c.l.bf16 %v230
      %v251 = vunpack.c.l.bf16 %v231
      %v252 = vunpack.c.l.bf16 %v232
      %v253 = vunpack.c.l.bf16 %v233
      %v254 = vunpack.c.l.bf16 %v234
      %v255 = vunpack.c.l.bf16 %v235
      %v256 = vpack.c.bf16 %v238, %v236
      %v257 = vpack.c.bf16 %v242, %v240
      %v258 = vpack.c.bf16 %v246, %v244
      %v259 = vpack.c.bf16 %v250, %v248
      %vm276 = vcmask 1046528
      %v277 = vrot.slane %v236, 1
      %v278 = vrot.slane %v237, 1
      %v279 = vsel %vm276, %v277, %v278
      %v280 = vrot.slane %v238, 1
      %v281 = vrot.slane %v239, 1
      %v282 = vsel %vm276, %v280, %v281
      %v283 = vrot.slane %v240, 1
      %v284 = vrot.slane %v241, 1
      %v285 = vsel %vm276, %v283, %v284
      %v286 = vrot.slane %v242, 1
      %v287 = vrot.slane %v243, 1
      %v288 = vsel %vm276, %v286, %v287
      %v289 = vrot.slane %v244, 1
      %v290 = vrot.slane %v245, 1
      %v291 = vsel %vm276, %v289, %v290
      %v292 = vrot.slane %v246, 1
      %v293 = vrot.slane %v247, 1
      %v294 = vsel %vm276, %v292, %v293
      %v295 = vrot.slane %v248, 1
      %v296 = vrot.slane %v249, 1
      %v297 = vsel %vm276, %v295, %v296
      %v298 = vrot.slane %v250, 1
      %v299 = vrot.slane %v251, 1
      %v300 = vsel %vm276, %v298, %v299
      %v309 = vpack.c.bf16 %v282, %v279
      %v310 = vpack.c.bf16 %v288, %v285
      %v311 = vpack.c.bf16 %v294, %v291
      %v312 = vpack.c.bf16 %v300, %v297
      %vm313 = vcmask 1045504
      %v314 = vrot.slane %v236, 2
      %v315 = vrot.slane %v237, 2
      %v316 = vsel %vm313, %v314, %v315
      %v317 = vrot.slane %v238, 2
      %v318 = vrot.slane %v239, 2
      %v319 = vsel %vm313, %v317, %v318
      %v320 = vrot.slane %v240, 2
      %v321 = vrot.slane %v241, 2
      %v322 = vsel %vm313, %v320, %v321
      %v323 = vrot.slane %v242, 2
      %v324 = vrot.slane %v243, 2
      %v325 = vsel %vm313, %v323, %v324
      %v326 = vrot.slane %v244, 2
      %v327 = vrot.slane %v245, 2
      %v328 = vsel %vm313, %v326, %v327
      %v329 = vrot.slane %v246, 2
      %v330 = vrot.slane %v247, 2
      %v331 = vsel %vm313, %v329, %v330
      %v332 = vrot.slane %v248, 2
      %v333 = vrot.slane %v249, 2
      %v334 = vsel %vm313, %v332, %v333
      %v335 = vrot.slane %v250, 2
      %v336 = vrot.slane %v251, 2
      %v337 = vsel %vm313, %v335, %v336
      %v346 = vpack.c.bf16 %v319, %v316
      %v347 = vpack.c.bf16 %v325, %v322
      %v348 = vpack.c.bf16 %v331, %v328
      %v349 = vpack.c.bf16 %v337, %v334
      %v350 = vpack.c.bf16 %v240, %v238
      %v351 = vpack.c.bf16 %v244, %v242
      %v352 = vpack.c.bf16 %v248, %v246
      %v353 = vpack.c.bf16 %v252, %v250
      %v356 = vrot.slane %v252, 1
      %v357 = vrot.slane %v253, 1
      %v358 = vsel %vm276, %v356, %v357
      %v360 = vpack.c.bf16 %v285, %v282
      %v361 = vpack.c.bf16 %v291, %v288
      %v362 = vpack.c.bf16 %v297, %v294
      %v363 = vpack.c.bf16 %v358, %v300
      %v364 = vrot.slane %v252, 2
      %v365 = vrot.slane %v253, 2
      %v366 = vsel %vm313, %v364, %v365
      %v368 = vpack.c.bf16 %v322, %v319
      %v369 = vpack.c.bf16 %v328, %v325
      %v370 = vpack.c.bf16 %v334, %v331
      %v371 = vpack.c.bf16 %v366, %v337
      %v372 = vpack.c.bf16 %v254, %v252
      %v375 = vrot.slane %v254, 1
      %v376 = vrot.slane %v255, 1
      %v377 = vsel %vm276, %v375, %v376
      %v379 = vpack.c.bf16 %v377, %v358
      %v380 = vrot.slane %v254, 2
      %v381 = vrot.slane %v255, 2
      %v382 = vsel %vm313, %v380, %v381
      %v384 = vpack.c.bf16 %v382, %v366
      %v385 = vld [vmem:[%s1] sm:$0xf]
      %v386 = vld [vmem:[%s1 + $0x4] sm:$0xf]
      %v387 = vld [vmem:[%s1 + $0x8] sm:$0xf]
      %v388 = vld [vmem:[%s1 + $0xc] sm:$0xf]
      %v389 = vld [vmem:[%s1 + $0x10] sm:$0xf]
      %v390 = vld [vmem:[%s1 + $0x14] sm:$0xf]
      %v391 = vld [vmem:[%s1 + $0x18] sm:$0xf]
      %v392 = vld [vmem:[%s1 + $0x1c] sm:$0xf]
      %v393 = vld [vmem:[%s1 + $0x20] sm:$0xf]
      %v394 = vld [vmem:[%s1 + $0x24] sm:$0xf]
      %v395 = vld [vmem:[%s1 + $0x28] sm:$0xf]
      %v396 = vld [vmem:[%s1 + $0x2c] sm:$0xf]
      %v397 = vld [vmem:[%s1 + $0x30] sm:$0xf]
      %v398 = vld [vmem:[%s1 + $0x34] sm:$0xf]
      %v399 = vld [vmem:[%s1 + $0x38] sm:$0xf]
      %v400 = vld [vmem:[%s1 + $0x3c] sm:$0xf]
      %v401 = vld [vmem:[%s1 + $0x40] sm:$0xf]
      %v402 = vld [vmem:[%s1 + $0x44] sm:$0xf]
      %v403 = vld [vmem:[%s1 + $0x48] sm:$0xf]
      %v404 = vld [vmem:[%s1 + $0x4c] sm:$0xf]
      %v405 = vld [vmem:[%s1 + $0x50] sm:$0xf]
      %v406 = vld [vmem:[%s1 + $0x54] sm:$0xf]
      %v407 = vld [vmem:[%s1 + $0x58] sm:$0xf]
      %v408 = vld [vmem:[%s1 + $0x5c] sm:$0xf]
      %v409 = vld [vmem:[%s1 + $0x60] sm:$0xf]
      %v410 = vld [vmem:[%s1 + $0x64] sm:$0xf]
      %v411 = vld [vmem:[%s1 + $0x68] sm:$0xf]
      %v412 = vld [vmem:[%s1 + $0x6c] sm:$0xf]
      %v413 = vld [vmem:[%s1 + $0x70] sm:$0xf]
      %v414 = vld [vmem:[%s1 + $0x74] sm:$0xf]
      %v415 = vld [vmem:[%s1 + $0x78] sm:$0xf]
      %v416 = vld [vmem:[%s1 + $0x7c] sm:$0xf]
      %v417 = vld [vmem:[%s1 + $0x80] sm:$0xf]
      %v418 = vld [vmem:[%s1 + $0x84] sm:$0xf]
      %v419 = vld [vmem:[%s1 + $0x88] sm:$0xf]
      %v420 = vld [vmem:[%s1 + $0x8c] sm:$0xf]
      %v421 = vld [vmem:[%s1 + $0x90] sm:$0xf]
      %v422 = vld [vmem:[%s1 + $0x94] sm:$0xf]
      %v423 = vld [vmem:[%s1 + $0x98] sm:$0xf]
      %v424 = vld [vmem:[%s1 + $0x9c] sm:$0xf]
      %v425 = vld [vmem:[%s1 + $0xa0] sm:$0xf]
      %v426 = vld [vmem:[%s1 + $0xa4] sm:$0xf]
      %v427 = vld [vmem:[%s1 + $0xa8] sm:$0xf]
      %v428 = vld [vmem:[%s1 + $0xac] sm:$0xf]
      %v429 = vld [vmem:[%s1 + $0xb0] sm:$0xf]
      %v430 = vld [vmem:[%s1 + $0xb4] sm:$0xf]
      %v431 = vld [vmem:[%s1 + $0xb8] sm:$0xf]
      %v432 = vld [vmem:[%s1 + $0xbc] sm:$0xf]
      %v433 = vld [vmem:[%s1 + $0xc0] sm:$0xf]
      %v434 = vld [vmem:[%s1 + $0xc4] sm:$0xf]
      %v435 = vld [vmem:[%s1 + $0xc8] sm:$0xf]
      %v436 = vld [vmem:[%s1 + $0xcc] sm:$0xf]
      %v437 = vld [vmem:[%s1 + $0xd0] sm:$0xf]
      %v438 = vld [vmem:[%s1 + $0xd4] sm:$0xf]
      %v439 = vld [vmem:[%s1 + $0xd8] sm:$0xf]
      %v440 = vld [vmem:[%s1 + $0xdc] sm:$0xf]
      %v441 = vld [vmem:[%s1 + $0xe0] sm:$0xf]
      %v442 = vld [vmem:[%s1 + $0xe4] sm:$0xf]
      %v443 = vld [vmem:[%s1 + $0xe8] sm:$0xf]
      %v444 = vld [vmem:[%s1 + $0xec] sm:$0xf]
      %v445 = vld [vmem:[%s1 + $0xf0] sm:$0xf]
      %v446 = vld [vmem:[%s1 + $0xf4] sm:$0xf]
      %v447 = vld [vmem:[%s1 + $0xf8] sm:$0xf]
      %v448 = vld [vmem:[%s1 + $0xfc] sm:$0xf]
      %v449 = vld [vmem:[%s1 + $0x100] sm:$0xf]
      %v450 = vld [vmem:[%s1 + $0x104] sm:$0xf]
      %v451 = vld [vmem:[%s1 + $0x108] sm:$0xf]
      %v452 = vld [vmem:[%s1 + $0x10c] sm:$0xf]
      %v453 = vld [vmem:[%s1 + $0x110] sm:$0xf]
      %v454 = vld [vmem:[%s1 + $0x114] sm:$0xf]
      %v455 = vld [vmem:[%s1 + $0x118] sm:$0xf]
      %v456 = vld [vmem:[%s1 + $0x11c] sm:$0xf]
      %v457 = vld [vmem:[%s1 + $0x120] sm:$0xf]
      %v458 = vld [vmem:[%s1 + $0x124] sm:$0xf]
      %v459 = vld [vmem:[%s1 + $0x128] sm:$0xf]
      %v460 = vld [vmem:[%s1 + $0x12c] sm:$0xf]
      %v461 = vld [vmem:[%s1 + $0x130] sm:$0xf]
      %v462 = vld [vmem:[%s1 + $0x134] sm:$0xf]
      %v463 = vld [vmem:[%s1 + $0x138] sm:$0xf]
      %v464 = vld [vmem:[%s1 + $0x13c] sm:$0xf]
      %v465 = vld [vmem:[%s1 + $0x140] sm:$0xf]
      %v466 = vld [vmem:[%s1 + $0x144] sm:$0xf]
      %v467 = vld [vmem:[%s1 + $0x148] sm:$0xf]
      %v468 = vld [vmem:[%s1 + $0x14c] sm:$0xf]
      %v469 = vld [vmem:[%s1 + $0x150] sm:$0xf]
      %v470 = vld [vmem:[%s1 + $0x154] sm:$0xf]
      %v471 = vld [vmem:[%s1 + $0x158] sm:$0xf]
      %v472 = vld [vmem:[%s1 + $0x15c] sm:$0xf]
      %v473 = vld [vmem:[%s1 + $0x160] sm:$0xf]
      %v474 = vld [vmem:[%s1 + $0x164] sm:$0xf]
      %v475 = vld [vmem:[%s1 + $0x168] sm:$0xf]
      %v476 = vld [vmem:[%s1 + $0x16c] sm:$0xf]
      %v477 = vld [vmem:[%s1 + $0x170] sm:$0xf]
      %v478 = vld [vmem:[%s1 + $0x174] sm:$0xf]
      %v479 = vld [vmem:[%s1 + $0x178] sm:$0xf]
      %v480 = vld [vmem:[%s1 + $0x17c] sm:$0xf]
      %v481 = vld [vmem:[%s1 + $0x180] sm:$0xf]
      %v482 = vld [vmem:[%s1 + $0x184] sm:$0xf]
      %v483 = vld [vmem:[%s1 + $0x188] sm:$0xf]
      %v484 = vld [vmem:[%s1 + $0x18c] sm:$0xf]
      %v485 = vld [vmem:[%s1 + $0x190] sm:$0xf]
      %v486 = vld [vmem:[%s1 + $0x194] sm:$0xf]
      %v487 = vld [vmem:[%s1 + $0x198] sm:$0xf]
      %v488 = vld [vmem:[%s1 + $0x19c] sm:$0xf]
      %v489 = vld [vmem:[%s1 + $0x1a0] sm:$0xf]
      %v490 = vld [vmem:[%s1 + $0x1a4] sm:$0xf]
      %v491 = vld [vmem:[%s1 + $0x1a8] sm:$0xf]
      %v492 = vld [vmem:[%s1 + $0x1ac] sm:$0xf]
      %v493 = vld [vmem:[%s1 + $0x1b0] sm:$0xf]
      %v494 = vld [vmem:[%s1 + $0x1b4] sm:$0xf]
      %v495 = vld [vmem:[%s1 + $0x1b8] sm:$0xf]
      %v496 = vld [vmem:[%s1 + $0x1bc] sm:$0xf]
      %v497 = vld [vmem:[%s1 + $0x1c0] sm:$0xf]
      %v498 = vld [vmem:[%s1 + $0x1c4] sm:$0xf]
      %v499 = vld [vmem:[%s1 + $0x1c8] sm:$0xf]
      %v500 = vld [vmem:[%s1 + $0x1cc] sm:$0xf]
      %v501 = vld [vmem:[%s1 + $0x1d0] sm:$0xf]
      %v502 = vld [vmem:[%s1 + $0x1d4] sm:$0xf]
      %v503 = vld [vmem:[%s1 + $0x1d8] sm:$0xf]
      %v504 = vld [vmem:[%s1 + $0x1dc] sm:$0xf]
      %v505 = vld [vmem:[%s1 + $0x1e0] sm:$0xf]
      %v506 = vld [vmem:[%s1 + $0x1e4] sm:$0xf]
      %v507 = vld [vmem:[%s1 + $0x1e8] sm:$0xf]
      %v508 = vld [vmem:[%s1 + $0x1ec] sm:$0xf]
      %v509 = vld [vmem:[%s1 + $0x1f0] sm:$0xf]
      %v510 = vld [vmem:[%s1 + $0x1f4] sm:$0xf]
      %v511 = vld [vmem:[%s1 + $0x1f8] sm:$0xf]
      %v512 = vld [vmem:[%s1 + $0x1fc] sm:$0xf]
      %v513 = vld [vmem:[%s1 + $0x200] sm:$0xf]
      %v514 = vld [vmem:[%s1 + $0x204] sm:$0xf]
      %v515 = vld [vmem:[%s1 + $0x208] sm:$0xf]
      %v516 = vld [vmem:[%s1 + $0x20c] sm:$0xf]
      %v517 = vld [vmem:[%s1 + $0x210] sm:$0xf]
      %v518 = vld [vmem:[%s1 + $0x214] sm:$0xf]
      %v519 = vld [vmem:[%s1 + $0x218] sm:$0xf]
      %v520 = vld [vmem:[%s1 + $0x21c] sm:$0xf]
      %v521 = vld [vmem:[%s1 + $0x220] sm:$0xf]
      %v522 = vld [vmem:[%s1 + $0x224] sm:$0xf]
      %v523 = vld [vmem:[%s1 + $0x228] sm:$0xf]
      %v524 = vld [vmem:[%s1 + $0x22c] sm:$0xf]
      %v525 = vld [vmem:[%s1 + $0x230] sm:$0xf]
      %v526 = vld [vmem:[%s1 + $0x234] sm:$0xf]
      %v527 = vld [vmem:[%s1 + $0x238] sm:$0xf]
      %v528 = vld [vmem:[%s1 + $0x23c] sm:$0xf]
      %v673 = vunpack.c.l.b16 %v385
      %v674 = vunpack.c.l.b16 %v386
      %v675 = vunpack.c.l.b16 %v387
      %v676 = vunpack.c.l.b16 %v388
      %v677 = vunpack.c.l.b16 %v389
      %v678 = vunpack.c.l.b16 %v390
      %v679 = vunpack.c.l.b16 %v391
      %v680 = vunpack.c.l.b16 %v392
      %v681 = vunpack.c.l.b16 %v393
      %v682 = vunpack.c.l.b16 %v394
      %v683 = vunpack.c.l.b16 %v395
      %v684 = vunpack.c.l.b16 %v396
      %v685 = vunpack.c.l.b16 %v397
      %v686 = vunpack.c.l.b16 %v398
      %v687 = vunpack.c.l.b16 %v399
      %v688 = vunpack.c.l.b16 %v400
      %v689 = vunpack.c.l.b16 %v401
      %v690 = vunpack.c.l.b16 %v402
      %v691 = vunpack.c.l.b16 %v403
      %v692 = vunpack.c.l.b16 %v404
      %v693 = vunpack.c.l.b16 %v405
      %v694 = vunpack.c.l.b16 %v406
      %v695 = vunpack.c.l.b16 %v407
      %v696 = vunpack.c.l.b16 %v408
      %v697 = vunpack.c.l.b16 %v409
      %v698 = vunpack.c.l.b16 %v410
      %v699 = vunpack.c.l.b16 %v411
      %v700 = vunpack.c.l.b16 %v412
      %v701 = vunpack.c.l.b16 %v413
      %v702 = vunpack.c.l.b16 %v414
      %v703 = vunpack.c.l.b16 %v415
      %v704 = vunpack.c.l.b16 %v416
      %v705 = vunpack.c.l.b16 %v417
      %v706 = vunpack.c.l.b16 %v418
      %v707 = vunpack.c.l.b16 %v419
      %v708 = vunpack.c.l.b16 %v420
      %v709 = vunpack.c.l.b16 %v421
      %v710 = vunpack.c.l.b16 %v422
      %v711 = vunpack.c.l.b16 %v423
      %v712 = vunpack.c.l.b16 %v424
      %v713 = vunpack.c.l.b16 %v425
      %v714 = vunpack.c.l.b16 %v426
      %v715 = vunpack.c.l.b16 %v427
      %v716 = vunpack.c.l.b16 %v428
      %v717 = vunpack.c.l.b16 %v429
      %v718 = vunpack.c.l.b16 %v430
      %v719 = vunpack.c.l.b16 %v431
      %v720 = vunpack.c.l.b16 %v432
      %v721 = vunpack.c.l.b16 %v433
      %v722 = vunpack.c.l.b16 %v434
      %v723 = vunpack.c.l.b16 %v435
      %v724 = vunpack.c.l.b16 %v436
      %v725 = vunpack.c.l.b16 %v437
      %v726 = vunpack.c.l.b16 %v438
      %v727 = vunpack.c.l.b16 %v439
      %v728 = vunpack.c.l.b16 %v440
      %v729 = vunpack.c.l.b16 %v441
      %v730 = vunpack.c.l.b16 %v442
      %v731 = vunpack.c.l.b16 %v443
      %v732 = vunpack.c.l.b16 %v444
      %v733 = vunpack.c.l.b16 %v445
      %v734 = vunpack.c.l.b16 %v446
      %v735 = vunpack.c.l.b16 %v447
      %v736 = vunpack.c.l.b16 %v448
      %v737 = vunpack.c.l.b16 %v449
      %v738 = vunpack.c.l.b16 %v450
      %v739 = vunpack.c.l.b16 %v451
      %v740 = vunpack.c.l.b16 %v452
      %v741 = vunpack.c.l.b16 %v453
      %v742 = vunpack.c.l.b16 %v454
      %v743 = vunpack.c.l.b16 %v455
      %v744 = vunpack.c.l.b16 %v456
      %v745 = vunpack.c.l.b16 %v457
      %v746 = vunpack.c.l.b16 %v458
      %v747 = vunpack.c.l.b16 %v459
      %v748 = vunpack.c.l.b16 %v460
      %v749 = vunpack.c.l.b16 %v461
      %v750 = vunpack.c.l.b16 %v462
      %v751 = vunpack.c.l.b16 %v463
      %v752 = vunpack.c.l.b16 %v464
      %v753 = vunpack.c.l.b16 %v465
      %v754 = vunpack.c.l.b16 %v466
      %v755 = vunpack.c.l.b16 %v467
      %v756 = vunpack.c.l.b16 %v468
      %v757 = vunpack.c.l.b16 %v469
      %v758 = vunpack.c.l.b16 %v470
      %v759 = vunpack.c.l.b16 %v471
      %v760 = vunpack.c.l.b16 %v472
      %v761 = vunpack.c.l.b16 %v473
      %v762 = vunpack.c.l.b16 %v474
      %v763 = vunpack.c.l.b16 %v475
      %v764 = vunpack.c.l.b16 %v476
      %v765 = vunpack.c.l.b16 %v477
      %v766 = vunpack.c.l.b16 %v478
      %v767 = vunpack.c.l.b16 %v479
      %v768 = vunpack.c.l.b16 %v480
      %v769 = vunpack.c.l.b16 %v481
      %v770 = vunpack.c.l.b16 %v482
      %v771 = vunpack.c.l.b16 %v483
      %v772 = vunpack.c.l.b16 %v484
      %v773 = vunpack.c.l.b16 %v485
      %v774 = vunpack.c.l.b16 %v486
      %v775 = vunpack.c.l.b16 %v487
      %v776 = vunpack.c.l.b16 %v488
      %v777 = vunpack.c.l.b16 %v489
      %v778 = vunpack.c.l.b16 %v490
      %v779 = vunpack.c.l.b16 %v491
      %v780 = vunpack.c.l.b16 %v492
      %v781 = vunpack.c.l.b16 %v493
      %v782 = vunpack.c.l.b16 %v494
      %v783 = vunpack.c.l.b16 %v495
      %v784 = vunpack.c.l.b16 %v496
      %v785 = vunpack.c.l.b16 %v497
      %v786 = vunpack.c.l.b16 %v498
      %v787 = vunpack.c.l.b16 %v499
      %v788 = vunpack.c.l.b16 %v500
      %v789 = vunpack.c.l.b16 %v501
      %v790 = vunpack.c.l.b16 %v502
      %v791 = vunpack.c.l.b16 %v503
      %v792 = vunpack.c.l.b16 %v504
      %v793 = vunpack.c.l.b16 %v505
      %v794 = vunpack.c.l.b16 %v506
      %v795 = vunpack.c.l.b16 %v507
      %v796 = vunpack.c.l.b16 %v508
      %v797 = vunpack.c.l.b16 %v509
      %v798 = vunpack.c.l.b16 %v510
      %v799 = vunpack.c.l.b16 %v511
      %v800 = vunpack.c.l.b16 %v512
      %v801 = vunpack.c.l.b16 %v513
      %v802 = vunpack.c.l.b16 %v514
      %v803 = vunpack.c.l.b16 %v515
      %v804 = vunpack.c.l.b16 %v516
      %v805 = vunpack.c.l.b16 %v517
      %v806 = vunpack.c.l.b16 %v518
      %v807 = vunpack.c.l.b16 %v519
      %v808 = vunpack.c.l.b16 %v520
      %v809 = vunpack.c.l.b16 %v521
      %v810 = vunpack.c.l.b16 %v522
      %v811 = vunpack.c.l.b16 %v523
      %v812 = vunpack.c.l.b16 %v524
      %v813 = vunpack.c.l.b16 %v525
      %v814 = vunpack.c.l.b16 %v526
      %v815 = vunpack.c.l.b16 %v527
      %v816 = vunpack.c.l.b16 %v528
      %v817 = vpack.c.b16 %v674, %v673
      %v818 = vpack.c.b16 %v676, %v675
      %v819 = vpack.c.b16 %v678, %v677
      %v820 = vpack.c.b16 %v680, %v679
      %v821 = vpack.c.b16 %v682, %v681
      %v822 = vpack.c.b16 %v684, %v683
      %v823 = vpack.c.b16 %v686, %v685
      %v824 = vpack.c.b16 %v688, %v687
      %v825 = vpack.c.b16 %v690, %v689
      %v826 = vpack.c.b16 %v692, %v691
      %v827 = vpack.c.b16 %v694, %v693
      %v828 = vpack.c.b16 %v696, %v695
      %v829 = vpack.c.b16 %v698, %v697
      %v830 = vpack.c.b16 %v700, %v699
      %v831 = vpack.c.b16 %v702, %v701
      %v832 = vpack.c.b16 %v704, %v703
      %v833 = vpack.c.b16 %v706, %v705
      %v834 = vpack.c.b16 %v708, %v707
      %v835 = vpack.c.b16 %v710, %v709
      %v836 = vpack.c.b16 %v712, %v711
      %v837 = vpack.c.b16 %v714, %v713
      %v838 = vpack.c.b16 %v716, %v715
      %v839 = vpack.c.b16 %v718, %v717
      %v840 = vpack.c.b16 %v720, %v719
      %v841 = vpack.c.b16 %v722, %v721
      %v842 = vpack.c.b16 %v724, %v723
      %v843 = vpack.c.b16 %v726, %v725
      %v844 = vpack.c.b16 %v728, %v727
      %v845 = vpack.c.b16 %v730, %v729
      %v846 = vpack.c.b16 %v732, %v731
      %v847 = vpack.c.b16 %v734, %v733
      %v848 = vpack.c.b16 %v736, %v735
      %v849 = vpack.c.b16 %v738, %v737
      %v850 = vpack.c.b16 %v740, %v739
      %v851 = vpack.c.b16 %v742, %v741
      %v852 = vpack.c.b16 %v744, %v743
      %v853 = vpack.c.b16 %v746, %v745
      %v854 = vpack.c.b16 %v748, %v747
      %v855 = vpack.c.b16 %v750, %v749
      %v856 = vpack.c.b16 %v752, %v751
      %v857 = vpack.c.b16 %v754, %v753
      %v858 = vpack.c.b16 %v756, %v755
      %v859 = vpack.c.b16 %v758, %v757
      %v860 = vpack.c.b16 %v760, %v759
      %v861 = vpack.c.b16 %v762, %v761
      %v862 = vpack.c.b16 %v764, %v763
      %v863 = vpack.c.b16 %v766, %v765
      %v864 = vpack.c.b16 %v768, %v767
      %v865 = vpack.c.b16 %v770, %v769
      %v866 = vpack.c.b16 %v772, %v771
      %v867 = vpack.c.b16 %v774, %v773
      %v868 = vpack.c.b16 %v776, %v775
      %v869 = vpack.c.b16 %v778, %v777
      %v870 = vpack.c.b16 %v780, %v779
      %v871 = vpack.c.b16 %v782, %v781
      %v872 = vpack.c.b16 %v784, %v783
      %v873 = vpack.c.b16 %v786, %v785
      %v874 = vpack.c.b16 %v788, %v787
      %v875 = vpack.c.b16 %v790, %v789
      %v876 = vpack.c.b16 %v792, %v791
      %v877 = vpack.c.b16 %v794, %v793
      %v878 = vpack.c.b16 %v796, %v795
      %v879 = vpack.c.b16 %v798, %v797
      %v880 = vpack.c.b16 %v800, %v799
      %v881 = vpack.c.b16 %v802, %v801
      %v882 = vpack.c.b16 %v804, %v803
      %v883 = vpack.c.b16 %v806, %v805
      %v884 = vpack.c.b16 %v808, %v807
      %v885 = vpack.c.b16 %v810, %v809
      %v886 = vpack.c.b16 %v812, %v811
      %v887 = vpack.c.b16 %v814, %v813
      %v888 = vpack.c.b16 %v816, %v815
      %961 = vmatprep.subr.bf16.mxu0 0
      %962 = vmatpush1.bf16.msra.mxu0 %v817
      %963 = vmatprep.subr.bf16.mxu0 0
      %964 = vmatpush1.bf16.msra.mxu0 %v818
      %965 = vmatprep.subr.bf16.mxu0 0
      %966 = vmatpush1.bf16.msra.mxu0 %v819
      %967 = vmatprep.subr.bf16.mxu0 0
      %968 = vmatpush1.bf16.msra.mxu0 %v820
      %969 = vmatprep.subr.bf16.mxu0 0
      %970 = vmatpush1.bf16.msra.mxu0 %v821
      %971 = vmatprep.subr.bf16.mxu0 0
      %972 = vmatpush1.bf16.msra.mxu0 %v822
      %973 = vmatprep.subr.bf16.mxu0 0
      %974 = vmatpush1.bf16.msra.mxu0 %v823
      %975 = vmatprep.subr.bf16.mxu0 0
      %976 = vmatpush1.bf16.msra.mxu0 %v824
      %977 = vmatprep.subr.bf16.mxu0 0
      %978 = vmatpush1.bf16.msra.mxu0 %v825
      %979 = vmatprep.subr.bf16.mxu0 0
      %980 = vmatpush1.bf16.msra.mxu0 %v826
      %981 = vmatprep.subr.bf16.mxu0 0
      %982 = vmatpush1.bf16.msra.mxu0 %v827
      %983 = vmatprep.subr.bf16.mxu0 0
      %984 = vmatpush1.bf16.msra.mxu0 %v828
      %985 = vmatprep.subr.bf16.mxu0 0
      %986 = vmatpush1.bf16.msra.mxu0 %v829
      %987 = vmatprep.subr.bf16.mxu0 0
      %988 = vmatpush1.bf16.msra.mxu0 %v830
      %989 = vmatprep.subr.bf16.mxu0 0
      %990 = vmatpush1.bf16.msra.mxu0 %v831
      %991 = vmatprep.subr.bf16.mxu0 0
      %992 = vmatpush1.bf16.msra.mxu0 %v832
      %993 = vmatprep.mubr.bf16.mxu0 %v309
      %994 = vmatmul.mubr.bf16.gmra.mrb[0].mxu0 %v256
      %v995 = vpop.f32.mrb[0].mxu0
      %v996 = vadd.f32 0.0, %v995
      %v997 = vpop.f32.mrb[0].mxu0
      %v998 = vpop.f32.mrb[0].mxu0
      %v999 = vadd.f32 0.0, %v998
      %v1000 = vpop.f32.mrb[0].mxu0
      %1001 = vmatprep.mubr.bf16.mxu0 %v310
      %1002 = vmatmul.mubr.bf16.gmra.mrb[0].mxu0 %v257
      %v1003 = vpop.f32.mrb[0].mxu0
      %v1004 = vadd.f32 0.0, %v1003
      %v1005 = vpop.f32.mrb[0].mxu0
      %v1006 = vpop.f32.mrb[0].mxu0
      %v1007 = vadd.f32 0.0, %v1006
      %v1008 = vpop.f32.mrb[0].mxu0
      %1009 = vmatprep.mubr.bf16.mxu0 %v311
      %1010 = vmatmul.mubr.bf16.gmra.mrb[0].mxu0 %v258
      %v1011 = vpop.f32.mrb[0].mxu0
      %v1012 = vadd.f32 0.0, %v1011
      %v1013 = vpop.f32.mrb[0].mxu0
      %v1014 = vpop.f32.mrb[0].mxu0
      %v1015 = vadd.f32 0.0, %v1014
      %v1016 = vpop.f32.mrb[0].mxu0
      %1017 = vmatprep.mubr.bf16.mxu0 %v312
      %1018 = vmatmul.mubr.bf16.gmra.mrb[0].mxu0 %v259
      %v1019 = vpop.f32.mrb[0].mxu0
      %v1020 = vadd.f32 0.0, %v1019
      %v1021 = vpop.f32.mrb[0].mxu0
      %v1022 = vpop.f32.mrb[0].mxu0
      %v1023 = vadd.f32 0.0, %v1022
      %v1024 = vpop.f32.mrb[0].mxu0
      %1025 = vdwg.mxu0
      %1026 = vmatprep.subr.bf16.mxu0 0
      %1027 = vmatpush1.bf16.msra.mxu0 %v833
      %1028 = vmatprep.subr.bf16.mxu0 0
      %1029 = vmatpush1.bf16.msra.mxu0 %v834
      %1030 = vmatprep.subr.bf16.mxu0 0
      %1031 = vmatpush1.bf16.msra.mxu0 %v835
      %1032 = vmatprep.subr.bf16.mxu0 0
      %1033 = vmatpush1.bf16.msra.mxu0 %v836
      %1034 = vmatprep.subr.bf16.mxu0 0
      %1035 = vmatpush1.bf16.msra.mxu0 %v837
      %1036 = vmatprep.subr.bf16.mxu0 0
      %1037 = vmatpush1.bf16.msra.mxu0 %v838
      %1038 = vmatprep.subr.bf16.mxu0 0
      %1039 = vmatpush1.bf16.msra.mxu0 %v839
      %1040 = vmatprep.subr.bf16.mxu0 0
      %1041 = vmatpush1.bf16.msra.mxu0 %v840
      %1042 = vmatprep.subr.bf16.mxu0 0
      %1043 = vmatpush1.bf16.msra.mxu0 %v841
      %1044 = vmatprep.subr.bf16.mxu0 0
      %1045 = vmatpush1.bf16.msra.mxu0 %v842
      %1046 = vmatprep.subr.bf16.mxu0 0
      %1047 = vmatpush1.bf16.msra.mxu0 %v843
      %1048 = vmatprep.subr.bf16.mxu0 0
      %1049 = vmatpush1.bf16.msra.mxu0 %v844
      %1050 = vmatprep.subr.bf16.mxu0 0
      %1051 = vmatpush1.bf16.msra.mxu0 %v845
      %1052 = vmatprep.subr.bf16.mxu0 0
      %1053 = vmatpush1.bf16.msra.mxu0 %v846
      %1054 = vmatprep.subr.bf16.mxu0 0
      %1055 = vmatpush1.bf16.msra.mxu0 %v847
      %1056 = vmatprep.subr.bf16.mxu0 0
      %1057 = vmatpush1.bf16.msra.mxu0 %v848
      %1058 = vmatprep.mubr.bf16.mxu0 %v350
      %1059 = vmatmul.mubr.bf16.gmra.mrb[0].mxu0 %v346
      %v1060 = vpop.f32.mrb[0].mxu0
      %v1061 = vadd.f32 %v996, %v1060
      %v1062 = vpop.f32.mrb[0].mxu0
      %v1063 = vpop.f32.mrb[0].mxu0
      %v1064 = vadd.f32 %v999, %v1063
      %v1065 = vpop.f32.mrb[0].mxu0
      %1066 = vmatprep.mubr.bf16.mxu0 %v351
      %1067 = vmatmul.mubr.bf16.gmra.mrb[0].mxu0 %v347
      %v1068 = vpop.f32.mrb[0].mxu0
      %v1069 = vadd.f32 %v1004, %v1068
      %v1070 = vpop.f32.mrb[0].mxu0
      %v1071 = vpop.f32.mrb[0].mxu0
      %v1072 = vadd.f32 %v1007, %v1071
      %v1073 = vpop.f32.mrb[0].mxu0
      %1074 = vmatprep.mubr.bf16.mxu0 %v352
      %1075 = vmatmul.mubr.bf16.gmra.mrb[0].mxu0 %v348
      %v1076 = vpop.f32.mrb[0].mxu0
      %v1077 = vadd.f32 %v1012, %v1076
      %v1078 = vpop.f32.mrb[0].mxu0
      %v1079 = vpop.f32.mrb[0].mxu0
      %v1080 = vadd.f32 %v1015, %v1079
      %v1081 = vpop.f32.mrb[0].mxu0
      %1082 = vmatprep.mubr.bf16.mxu0 %v353
      %1083 = vmatmul.mubr.bf16.gmra.mrb[0].mxu0 %v349
      %v1084 = vpop.f32.mrb[0].mxu0
      %v1085 = vadd.f32 %v1020, %v1084
      %v1086 = vpop.f32.mrb[0].mxu0
      %v1087 = vpop.f32.mrb[0].mxu0
      %v1088 = vadd.f32 %v1023, %v1087
      %v1089 = vpop.f32.mrb[0].mxu0
      %1090 = vdwg.mxu0
      %1091 = vmatprep.subr.bf16.mxu0 0
      %1092 = vmatpush1.bf16.msra.mxu0 %v849
      %1093 = vmatprep.subr.bf16.mxu0 0
      %1094 = vmatpush1.bf16.msra.mxu0 %v850
      %1095 = vmatprep.subr.bf16.mxu0 0
      %1096 = vmatpush1.bf16.msra.mxu0 %v851
      %1097 = vmatprep.subr.bf16.mxu0 0
      %1098 = vmatpush1.bf16.msra.mxu0 %v852
      %1099 = vmatprep.subr.bf16.mxu0 0
      %1100 = vmatpush1.bf16.msra.mxu0 %v853
      %1101 = vmatprep.subr.bf16.mxu0 0
      %1102 = vmatpush1.bf16.msra.mxu0 %v854
      %1103 = vmatprep.subr.bf16.mxu0 0
      %1104 = vmatpush1.bf16.msra.mxu0 %v855
      %1105 = vmatprep.subr.bf16.mxu0 0
      %1106 = vmatpush1.bf16.msra.mxu0 %v856
      %1107 = vmatprep.subr.bf16.mxu0 0
      %1108 = vmatpush1.bf16.msra.mxu0 %v857
      %1109 = vmatprep.subr.bf16.mxu0 0
      %1110 = vmatpush1.bf16.msra.mxu0 %v858
      %1111 = vmatprep.subr.bf16.mxu0 0
      %1112 = vmatpush1.bf16.msra.mxu0 %v859
      %1113 = vmatprep.subr.bf16.mxu0 0
      %1114 = vmatpush1.bf16.msra.mxu0 %v860
      %1115 = vmatprep.subr.bf16.mxu0 0
      %1116 = vmatpush1.bf16.msra.mxu0 %v861
      %1117 = vmatprep.subr.bf16.mxu0 0
      %1118 = vmatpush1.bf16.msra.mxu0 %v862
      %1119 = vmatprep.subr.bf16.mxu0 0
      %1120 = vmatpush1.bf16.msra.mxu0 %v863
      %1121 = vmatprep.subr.bf16.mxu0 0
      %1122 = vmatpush1.bf16.msra.mxu0 %v864
      %1123 = vmatprep.mubr.bf16.mxu0 %v368
      %1124 = vmatmul.mubr.bf16.gmra.mrb[0].mxu0 %v360
      %v1125 = vpop.f32.mrb[0].mxu0
      %v1126 = vadd.f32 %v1061, %v1125
      %v1127 = vpop.f32.mrb[0].mxu0
      %v1128 = vpop.f32.mrb[0].mxu0
      %v1129 = vadd.f32 %v1064, %v1128
      %v1130 = vpop.f32.mrb[0].mxu0
      %1131 = vmatprep.mubr.bf16.mxu0 %v369
      %1132 = vmatmul.mubr.bf16.gmra.mrb[0].mxu0 %v361
      %v1133 = vpop.f32.mrb[0].mxu0
      %v1134 = vadd.f32 %v1069, %v1133
      %v1135 = vpop.f32.mrb[0].mxu0
      %v1136 = vpop.f32.mrb[0].mxu0
      %v1137 = vadd.f32 %v1072, %v1136
      %v1138 = vpop.f32.mrb[0].mxu0
      %1139 = vmatprep.mubr.bf16.mxu0 %v370
      %1140 = vmatmul.mubr.bf16.gmra.mrb[0].mxu0 %v362
      %v1141 = vpop.f32.mrb[0].mxu0
      %v1142 = vadd.f32 %v1077, %v1141
      %v1143 = vpop.f32.mrb[0].mxu0
      %v1144 = vpop.f32.mrb[0].mxu0
      %v1145 = vadd.f32 %v1080, %v1144
      %v1146 = vpop.f32.mrb[0].mxu0
      %1147 = vmatprep.mubr.bf16.mxu0 %v371
      %1148 = vmatmul.mubr.bf16.gmra.mrb[0].mxu0 %v363
      %v1149 = vpop.f32.mrb[0].mxu0
      %v1150 = vadd.f32 %v1085, %v1149
      %v1151 = vpop.f32.mrb[0].mxu0
      %v1152 = vpop.f32.mrb[0].mxu0
      %v1153 = vadd.f32 %v1088, %v1152
      %v1154 = vpop.f32.mrb[0].mxu0
      %1155 = vdwg.mxu0
      %1156 = vmatprep.subr.bf16.mxu0 0
      %1157 = vmatpush1.bf16.msra.mxu0 %v865
      %1158 = vmatprep.subr.bf16.mxu0 0
      %1159 = vmatpush1.bf16.msra.mxu0 %v866
      %1160 = vmatprep.subr.bf16.mxu0 0
      %1161 = vmatpush1.bf16.msra.mxu0 %v867
      %1162 = vmatprep.subr.bf16.mxu0 0
      %1163 = vmatpush1.bf16.msra.mxu0 %v868
      %1164 = vmatprep.subr.bf16.mxu0 0
      %1165 = vmatpush1.bf16.msra.mxu0 %v869
      %1166 = vmatprep.subr.bf16.mxu0 0
      %1167 = vmatpush1.bf16.msra.mxu0 %v870
      %1168 = vmatprep.subr.bf16.mxu0 0
      %1169 = vmatpush1.bf16.msra.mxu0 %v871
      %1170 = vmatprep.subr.bf16.mxu0 0
      %1171 = vmatpush1.bf16.msra.mxu0 %v872
      %1172 = vmatprep.subr.bf16.mxu0 0
      %1173 = vmatpush1.bf16.msra.mxu0 %v873
      %1174 = vmatprep.subr.bf16.mxu0 0
      %1175 = vmatpush1.bf16.msra.mxu0 %v874
      %1176 = vmatprep.subr.bf16.mxu0 0
      %1177 = vmatpush1.bf16.msra.mxu0 %v875
      %1178 = vmatprep.subr.bf16.mxu0 0
      %1179 = vmatpush1.bf16.msra.mxu0 %v876
      %1180 = vmatprep.subr.bf16.mxu0 0
      %1181 = vmatpush1.bf16.msra.mxu0 %v877
      %1182 = vmatprep.subr.bf16.mxu0 0
      %1183 = vmatpush1.bf16.msra.mxu0 %v878
      %1184 = vmatprep.subr.bf16.mxu0 0
      %1185 = vmatpush1.bf16.msra.mxu0 %v879
      %1186 = vmatprep.subr.bf16.mxu0 0
      %1187 = vmatpush1.bf16.msra.mxu0 %v880
      %1188 = vmatprep.mubr.bf16.mxu0 %v310
      %1189 = vmatmul.mubr.bf16.gmra.mrb[0].mxu0 %v257
      %v1190 = vpop.f32.mrb[0].mxu0
      %v1191 = vadd.f32 %v1126, %v1190
      %v1192 = vpop.f32.mrb[0].mxu0
      %v1193 = vpop.f32.mrb[0].mxu0
      %v1194 = vadd.f32 %v1129, %v1193
      %v1195 = vpop.f32.mrb[0].mxu0
      %1196 = vmatprep.mubr.bf16.mxu0 %v311
      %1197 = vmatmul.mubr.bf16.gmra.mrb[0].mxu0 %v258
      %v1198 = vpop.f32.mrb[0].mxu0
      %v1199 = vadd.f32 %v1134, %v1198
      %v1200 = vpop.f32.mrb[0].mxu0
      %v1201 = vpop.f32.mrb[0].mxu0
      %v1202 = vadd.f32 %v1137, %v1201
      %v1203 = vpop.f32.mrb[0].mxu0
      %1204 = vmatprep.mubr.bf16.mxu0 %v312
      %1205 = vmatmul.mubr.bf16.gmra.mrb[0].mxu0 %v259
      %v1206 = vpop.f32.mrb[0].mxu0
      %v1207 = vadd.f32 %v1142, %v1206
      %v1208 = vpop.f32.mrb[0].mxu0
      %v1209 = vpop.f32.mrb[0].mxu0
      %v1210 = vadd.f32 %v1145, %v1209
      %v1211 = vpop.f32.mrb[0].mxu0
      %1212 = vmatprep.mubr.bf16.mxu0 %v379
      %1213 = vmatmul.mubr.bf16.gmra.mrb[0].mxu0 %v372
      %v1214 = vpop.f32.mrb[0].mxu0
      %v1215 = vadd.f32 %v1150, %v1214
      %v1216 = vpop.f32.mrb[0].mxu0
      %v1217 = vpop.f32.mrb[0].mxu0
      %v1218 = vadd.f32 %v1153, %v1217
      %v1219 = vpop.f32.mrb[0].mxu0
      %1220 = vdwg.mxu0
      %1221 = vmatprep.subr.bf16.mxu0 0
      %1222 = vmatpush1.bf16.msra.mxu0 %v881
      %1223 = vmatprep.subr.bf16.mxu0 0
      %1224 = vmatpush1.bf16.msra.mxu0 %v882
      %1225 = vmatprep.subr.bf16.mxu0 0
      %1226 = vmatpush1.bf16.msra.mxu0 %v883
      %1227 = vmatprep.subr.bf16.mxu0 0
      %1228 = vmatpush1.bf16.msra.mxu0 %v884
      %1229 = vmatprep.subr.bf16.mxu0 0
      %1230 = vmatpush1.bf16.msra.mxu0 %v885
      %1231 = vmatprep.subr.bf16.mxu0 0
      %1232 = vmatpush1.bf16.msra.mxu0 %v886
      %1233 = vmatprep.subr.bf16.mxu0 0
      %1234 = vmatpush1.bf16.msra.mxu0 %v887
      %1235 = vmatprep.subr.bf16.mxu0 0
      %1236 = vmatpush1.bf16.msra.mxu0 %v888
      %1237 = vmatprep.subr.bf16.mxu0 0
      %1238 = vmatpush1.bf16.msra.mxu0 0
      %1239 = vmatprep.subr.bf16.mxu0 0
      %1240 = vmatpush1.bf16.msra.mxu0 0
      %1241 = vmatprep.subr.bf16.mxu0 0
      %1242 = vmatpush1.bf16.msra.mxu0 0
      %1243 = vmatprep.subr.bf16.mxu0 0
      %1244 = vmatpush1.bf16.msra.mxu0 0
      %1245 = vmatprep.subr.bf16.mxu0 0
      %1246 = vmatpush1.bf16.msra.mxu0 0
      %1247 = vmatprep.subr.bf16.mxu0 0
      %1248 = vmatpush1.bf16.msra.mxu0 0
      %1249 = vmatprep.subr.bf16.mxu0 0
      %1250 = vmatpush1.bf16.msra.mxu0 0
      %1251 = vmatprep.subr.bf16.mxu0 0
      %1252 = vmatpush1.bf16.msra.mxu0 0
      %1253 = vmatprep.mubr.bf16.mxu0 0
      %1254 = vmatmul.mubr.bf16.gmra.mrb[0].mxu0 %v347
      %v1255 = vpop.f32.mrb[0].mxu0
      %v1256 = vadd.f32 %v1191, %v1255
      %v1257 = vpop.f32.mrb[0].mxu0
      %v1258 = vpop.f32.mrb[0].mxu0
      %v1259 = vadd.f32 %v1194, %v1258
      %v1260 = vpop.f32.mrb[0].mxu0
      %1261 = vmatprep.mubr.bf16.mxu0 0
      %1262 = vmatmul.mubr.bf16.gmra.mrb[0].mxu0 %v348
      %v1263 = vpop.f32.mrb[0].mxu0
      %v1264 = vadd.f32 %v1199, %v1263
      %v1265 = vpop.f32.mrb[0].mxu0
      %v1266 = vpop.f32.mrb[0].mxu0
      %v1267 = vadd.f32 %v1202, %v1266
      %v1268 = vpop.f32.mrb[0].mxu0
      %1269 = vmatprep.mubr.bf16.mxu0 0
      %1270 = vmatmul.mubr.bf16.gmra.mrb[0].mxu0 %v349
      %v1271 = vpop.f32.mrb[0].mxu0
      %v1272 = vadd.f32 %v1207, %v1271
      %v1273 = vpop.f32.mrb[0].mxu0
      %v1274 = vpop.f32.mrb[0].mxu0
      %v1275 = vadd.f32 %v1210, %v1274
      %v1276 = vpop.f32.mrb[0].mxu0
      %1277 = vmatprep.mubr.bf16.mxu0 0
      %1278 = vmatmul.mubr.bf16.gmra.mrb[0].mxu0 %v384
      %v1279 = vpop.f32.mrb[0].mxu0
      %v1280 = vadd.f32 %v1215, %v1279
      %v1281 = vpop.f32.mrb[0].mxu0
      %v1282 = vpop.f32.mrb[0].mxu0
      %v1283 = vadd.f32 %v1218, %v1282
      %v1284 = vpop.f32.mrb[0].mxu0
      %1285 = vdwg.mxu0
      %v1286 = vpack.c.bf16 %v1259, %v1256
      %v1287 = vpack.c.bf16 %v1267, %v1264
      %v1288 = vpack.c.bf16 %v1275, %v1272
      %v1289 = vpack.c.bf16 %v1283, %v1280
      %v1294 = vunpack.c.l.b16 %v1286
      %v1295 = vunpack.c.h.b16 %v1286
      %v1296 = vunpack.c.l.b16 %v1287
      %v1297 = vunpack.c.h.b16 %v1287
      %v1298 = vunpack.c.l.b16 %v1288
      %v1299 = vunpack.c.h.b16 %v1288
      %v1300 = vunpack.c.l.b16 %v1289
      %v1301 = vunpack.c.h.b16 %v1289
      %v1302 = vpack.c.b16 %v1294, %v1294
      %v1303 = vpack.c.b16 %v1295, %v1295
      %v1304 = vpack.c.b16 %v1296, %v1296
      %v1305 = vpack.c.b16 %v1297, %v1297
      %v1306 = vpack.c.b16 %v1298, %v1298
      %v1307 = vpack.c.b16 %v1299, %v1299
      %v1308 = vpack.c.b16 %v1300, %v1300
      %v1309 = vpack.c.b16 %v1301, %v1301
      %1318 = vst [vmem:[%s208] sm:$0xf] %v1302
      %1319 = vst [vmem:[%s208 + $0x4] sm:$0xf] %v1303
      %1320 = vst [vmem:[%s208 + $0x8] sm:$0xf] %v1304
      %1321 = vst [vmem:[%s208 + $0xc] sm:$0xf] %v1305
      %1322 = vst [vmem:[%s208 + $0x10] sm:$0xf] %v1306
      %1323 = vst [vmem:[%s208 + $0x14] sm:$0xf] %v1307
      %1324 = vst [vmem:[%s208 + $0x18] sm:$0xf] %v1308
      %1325 = vst [vmem:[%s208 + $0x1c] sm:$0xf] %v1309
      %v1326 = vadd.f32 %v1256, %v1259
      %v1327 = vadd.f32 %v1326, %v1264
      %v1328 = vadd.f32 %v1327, %v1267
      %v1329 = vadd.f32 %v1328, %v1272
      %v1330 = vadd.f32 %v1329, %v1275
      %v1331 = vadd.f32 %v1330, %v1280
      %v1332 = vadd.f32 %v1331, %v1283
      %v1333 = vrot.slane %v1332, 4
      %v1334 = vadd.f32 %v1332, %v1333
      %v1335 = vrot.slane %v1334, 2
      %v1336 = vadd.f32 %v1334, %v1335
      %v1337 = vrot.slane %v1336, 1
      %v1338 = vadd.f32 %v1336, %v1337
      %1339 = vst [vmem:[%s211] sm:$0x1] %v1338
      %v1340 = vmul.f32 %v1256, %v1256
      %v1341 = vmul.f32 %v1259, %v1259
      %v1342 = vmul.f32 %v1264, %v1264
      %v1343 = vmul.f32 %v1267, %v1267
      %v1344 = vmul.f32 %v1272, %v1272
      %v1345 = vmul.f32 %v1275, %v1275
      %v1346 = vmul.f32 %v1280, %v1280
      %v1347 = vmul.f32 %v1283, %v1283
      %v1348 = vadd.f32 %v1340, %v1341
      %v1349 = vadd.f32 %v1348, %v1342
      %v1350 = vadd.f32 %v1349, %v1343
      %v1351 = vadd.f32 %v1350, %v1344
      %v1352 = vadd.f32 %v1351, %v1345
      %v1353 = vadd.f32 %v1352, %v1346
      %v1354 = vadd.f32 %v1353, %v1347
      %v1355 = vrot.slane %v1354, 4
      %v1356 = vadd.f32 %v1354, %v1355
      %v1357 = vrot.slane %v1356, 2
      %v1358 = vadd.f32 %v1356, %v1357
      %v1359 = vrot.slane %v1358, 1
      %v1360 = vadd.f32 %v1358, %v1359
      %1361 = vst [vmem:[%s214] sm:$0x1] %v1360
      %p1362 = scmp.lt.s32.totalorder %s16, 1
      %s1363 = scalar_select %p1362, %s16, 1
      %s1364 = smul.addr %s1363, 8
      %s1365 = smul.addr %s1364, 4
      %s1366 = scalar_lea.vmem %s2, %s1365
      %p1367 = scmp.lt.s32.totalorder %s16, 1
      %s1368 = scalar_select %p1367, %s16, 1
      %s1369 = scalar_lea.vmem %s3, %s1368
      %p1370 = scmp.lt.s32.totalorder %s16, 1
      %s1371 = scalar_select %p1370, %s16, 1
      %s1372 = scalar_lea.vmem %s4, %s1371
      // Predicated region
      $region29: #{residual_block_forward.7} parent=27 // pred_check
        %p1373 = pneg %p81
      $region30: #{residual_block_forward.7} parent=27 // pred_check_branch
        %1375 = sbr.rel (%p1373) target = $region32
      $region31: #{residual_block_forward.7} parent=27 // pred_region
        _
      $region32: #{residual_block_forward.7} parent=27 // pred_fallthru
        _
      // Predicated region
      $region33: #{residual_block_forward.7} parent=27 // pred_check
        %p1376 = pneg %p107
      $region34: #{residual_block_forward.7} parent=27 // pred_check_branch
        %1378 = sbr.rel (%p1376) target = $region36
      $region35: #{residual_block_forward.7} parent=27 // pred_region
        _
      $region36: #{residual_block_forward.7} parent=27 // pred_fallthru
        _
      // Predicated region
      $region37: #{residual_block_forward.7} parent=27 // pred_check
        %p1379 = pneg %p133
      $region38: #{residual_block_forward.7} parent=27 // pred_check_branch
        %1381 = sbr.rel (%p1379) target = $region40
      $region39: #{residual_block_forward.7} parent=27 // pred_region
        _
      $region40: #{residual_block_forward.7} parent=27 // pred_fallthru
        _
    $region28: #{residual_block_forward.7} parent=5 // pred_fallthru
      _
    %p1382 = scmp.le.s32.totalorder 2, %s11
    // Predicated region
    $region41: #{residual_block_forward.7} parent=5 // pred_check
      %p1383 = pneg %p1382
    $region42: #{residual_block_forward.7} parent=5 // pred_check_branch
      %1385 = sbr.rel (%p1383) target = $region44
    $region43: #{residual_block_forward.7} parent=5 // pred_region
      %s1386 = ssub.s32 %s11, 2
      // Predicated region
      $region45: #{residual_block_forward.7} parent=43 // pred_check
        %p1387 = pneg %p87
      $region46: #{residual_block_forward.7} parent=43 // pred_check_branch
        %1389 = sbr.rel (%p1387) target = $region48
      $region47: #{residual_block_forward.7} parent=43 // pred_region
        %p1390 = scmp.lt.s32.totalorder %s17, 1
        %s1391 = scalar_select %p1390, %s17, 1
        %s1392 = smul.addr %s1391, 8
        %s1393 = smul.addr %s1392, 4
        %s1394 = scalar_lea.vmem %s2, %s1393
      $region48: #{residual_block_forward.7} parent=43 // pred_fallthru
        _
      // Predicated region
      $region49: #{residual_block_forward.7} parent=43 // pred_check
        %p1395 = pneg %p113
      $region50: #{residual_block_forward.7} parent=43 // pred_check_branch
        %1397 = sbr.rel (%p1395) target = $region52
      $region51: #{residual_block_forward.7} parent=43 // pred_region
        %p1398 = scmp.lt.s32.totalorder %s17, 1
        %s1399 = scalar_select %p1398, %s17, 1
        %s1400 = scalar_lea.vmem %s3, %s1399
      $region52: #{residual_block_forward.7} parent=43 // pred_fallthru
        _
      // Predicated region
      $region53: #{residual_block_forward.7} parent=43 // pred_check
        %p1401 = pneg %p139
      $region54: #{residual_block_forward.7} parent=43 // pred_check_branch
        %1403 = sbr.rel (%p1401) target = $region56
      $region55: #{residual_block_forward.7} parent=43 // pred_region
        %p1404 = scmp.lt.s32.totalorder %s17, 1
        %s1405 = scalar_select %p1404, %s17, 1
        %s1406 = scalar_lea.vmem %s4, %s1405
      $region56: #{residual_block_forward.7} parent=43 // pred_fallthru
        _
    $region44: #{residual_block_forward.7} parent=5 // pred_fallthru
      _
  $region6: #{residual_block_forward.7} parent=0 // loop_footer
    %s15 = sadd.s32 1, %s11
  $region7: #{residual_block_forward.7} parent=0 // loop_footer_branch
    %10 = sbr.rel target = $region3
  $region8: #{residual_block_forward.7} parent=0 // loop_exit
    _

</llo_original>
